<compile_context>
chip_gen: v7x
topology: tpu7x:2x2x1
jax: 0.10.0
libtpu: 0.0.40
codegen_flags: <defaults>
</compile_context>

<pallas_src>
import functools

import jax
import jax.numpy as jnp
from jax.experimental import pallas as pl
from jax.experimental.pallas import tpu as pltpu

GN_EPS = 1e-5


def _sigmoid(x):
    return 1.0 / (1.0 + jnp.exp(-x))


def _shift_lanes(x, s):
    """y[..., p] = x[..., p + s], zero-filled outside [0, N)."""
    if s == 0:
        return x
    n = x.shape[-1]
    z = jnp.zeros(x.shape[:-1] + (abs(s),), x.dtype)
    if s > 0:
        return jnp.concatenate([x[..., s:], z], axis=-1)
    return jnp.concatenate([z, x[..., : n + s]], axis=-1)


def ema_kernel(x_ref, pq_ref, eh_ref, ew_ref, g_ref, w1_ref, b1_ref,
               w3_ref, b3_ref, gnw_ref, gnb_ref, cmask_ref, o_ref,
               *, h, w, cg):
    hw = h * w
    x = x_ref[...].astype(jnp.float32)                          # (R, HW)

    # ---- directional average pools: one matmul vs pooling matrix --------
    cat = jnp.dot(x, pq_ref[...],
                  preferred_element_type=jnp.float32)           # (R, H+W)

    # ---- 1x1 conv over channels (block-diagonal matmul) + bias ----------
    hwf = jnp.dot(w1_ref[...], cat,
                  preferred_element_type=jnp.float32) + b1_ref[...]
    sig = _sigmoid(hwf)                                         # (R, H+W)

    # expand h-gate / w-gate back to the flat H*W lane axis via exact
    # 0/1 indicator matmuls (one 1.0 per column).
    gate_h = jnp.dot(sig[:, :h], eh_ref[...],
                     preferred_element_type=jnp.float32)        # (R, HW)
    gate_w = jnp.dot(sig[:, h:], ew_ref[...],
                     preferred_element_type=jnp.float32)        # (R, HW)

    gated = x * gate_h * gate_w                                 # (R, HW)

    # ---- per-(slab, channel) GroupNorm over the spatial axis ------------
    mean = jnp.mean(gated, axis=1, keepdims=True)
    cen = gated - mean
    var = jnp.mean(cen * cen, axis=1, keepdims=True)
    x1 = cen * jax.lax.rsqrt(var + GN_EPS) * gnw_ref[...] + gnb_ref[...]

    # ---- 3x3 conv: 9 lane-shifted, column-masked, block-diag matmuls ----
    mask_l = cmask_ref[0:1, :]          # valid columns when dj = -1
    mask_r = cmask_ref[1:2, :]          # valid columns when dj = +1
    acc = jnp.zeros_like(x)
    for di in (-1, 0, 1):
        for dj in (-1, 0, 1):
            k = (di + 1) * 3 + (dj + 1)
            shifted = _shift_lanes(x, di * w + dj)
            if dj == 1:
                shifted = shifted * mask_r
            elif dj == -1:
                shifted = shifted * mask_l
            acc = acc + jnp.dot(w3_ref[k], shifted,
                                preferred_element_type=jnp.float32)
    x2 = acc + b3_ref[...]                                      # (R, HW)

    # ---- cross-branch per-group channel softmax attention ---------------
    inv_hw = 1.0 / hw
    v = jnp.concatenate(
        [jnp.sum(x1, axis=1, keepdims=True) * inv_hw,
         jnp.sum(x2, axis=1, keepdims=True) * inv_hw], axis=1)  # (R, 2)
    g = g_ref[...]                                              # (R, R) group-sum
    # shift-invariant softmax within each group of cg rows (subtract the
    # per-group mean instead of max; mathematically identical).
    shift = jnp.dot(g, v, preferred_element_type=jnp.float32) * (1.0 / cg)
    e = jnp.exp(v - shift)
    s = e / jnp.dot(g, e, preferred_element_type=jnp.float32)   # (R, 2)
    s1 = s[:, 0:1]                                              # softmax of x1 means
    s2 = s[:, 1:2]                                              # softmax of x2 means

    t = s1 * x2 + s2 * x1                                       # (R, HW)
    weights = jnp.dot(g, t, preferred_element_type=jnp.float32)  # group-sum + bcast

    o_ref[...] = (x * _sigmoid(weights)).astype(o_ref.dtype)


def _pick_bg_tile(bg, cg, cap=8):
    t = min(bg, cap)
    while bg % t:
        t -= 1
    # sublane dim of the block must be a multiple of 8 unless it spans the
    # whole array.
    if (t * cg) % 8 != 0 and t != bg:
        t = bg
    return t


def ema_forward(x, params, groups=8):
    b, c, h, w = x.shape
    cg = c // groups
    bg = b * groups
    hw = h * w
    w1, b1, w3, b3, gnw, gnb = params

    bg_tile = _pick_bg_tile(bg, cg)
    r = bg_tile * cg
    n_steps = bg // bg_tile

    # flat, lane-dense layout: row = (batch*group)*cg + channel
    x2d = x.reshape(bg * cg, hw)

    # ---- constant matrices, built once in the wrapper -------------------
    f32 = jnp.float32
    rows = jnp.arange(hw) // w
    cols = jnp.arange(hw) % w
    eh = (rows[None, :] == jnp.arange(h)[:, None]).astype(f32)       # (h, hw)
    ew = (cols[None, :] == jnp.arange(w)[:, None]).astype(f32)       # (w, hw)
    pq = jnp.concatenate([eh.T / w, ew.T / h], axis=1)               # (hw, h+w)
    cmask = jnp.stack([(cols >= 1).astype(f32),
                       (cols <= w - 2).astype(f32)], axis=0)         # (2, hw)

    eye_t = jnp.eye(bg_tile, dtype=f32)
    w1_bd = jnp.kron(eye_t, w1.astype(f32))                          # (r, r)
    g_mat = jnp.kron(eye_t, jnp.ones((cg, cg), f32))                 # (r, r)
    w3_taps = jnp.transpose(w3, (2, 3, 0, 1)).reshape(9, cg, cg).astype(f32)
    w3_bd = jnp.einsum('ij,kuv->kiujv', eye_t, w3_taps).reshape(9, r, r)

    b1_col = jnp.tile(b1.astype(f32), bg_tile).reshape(r, 1)
    b3_col = jnp.tile(b3.astype(f32), bg_tile).reshape(r, 1)
    gnw_col = jnp.tile(gnw.astype(f32), bg_tile).reshape(r, 1)
    gnb_col = jnp.tile(gnb.astype(f32), bg_tile).reshape(r, 1)

    kernel = functools.partial(ema_kernel, h=h, w=w, cg=cg)
    const2 = lambda i: (0, 0)

    out2d = pl.pallas_call(
        kernel,
        out_shape=jax.ShapeDtypeStruct((bg * cg, hw), x.dtype),
        grid_spec=pltpu.PrefetchScalarGridSpec(
            num_scalar_prefetch=0,
            grid=(n_steps,),
            in_specs=[
                pl.BlockSpec((r, hw), lambda i: (i, 0)),         # x
                pl.BlockSpec((hw, h + w), const2),               # pooling matrix
                pl.BlockSpec((h, hw), const2),                   # h-gate expander
                pl.BlockSpec((w, hw), const2),                   # w-gate expander
                pl.BlockSpec((r, r), const2),                    # group-sum matrix
                pl.BlockSpec((r, r), const2),                    # conv1x1 (block diag)
                pl.BlockSpec((r, 1), const2),                    # conv1x1 bias
                pl.BlockSpec((9, r, r), lambda i: (0, 0, 0)),    # conv3x3 taps
                pl.BlockSpec((r, 1), const2),                    # conv3x3 bias
                pl.BlockSpec((r, 1), const2),                    # GN weight
                pl.BlockSpec((r, 1), const2),                    # GN bias
                pl.BlockSpec((2, hw), const2),                   # column masks
            ],
            out_specs=pl.BlockSpec((r, hw), lambda i: (i, 0)),
        ),
        compiler_params=pltpu.CompilerParams(
            dimension_semantics=("parallel",)),
    )(x2d, pq, eh, ew, g_mat, w1_bd, b1_col, w3_bd, b3_col,
      gnw_col, gnb_col, cmask)

    return out2d.reshape(b, c, h, w)


def ema_reference(x, params, groups=8):
    """Pure-JAX reference mirroring the PyTorch EMA forward."""
    b, c, h, w = x.shape
    cg = c // groups
    bg = b * groups
    w1, b1, w3, b3, gnw, gnb = params
    gx = x.reshape(bg, cg, h, w)

    x_h = jnp.mean(gx, axis=3, keepdims=True)                     # (bg,cg,h,1)
    x_w = jnp.mean(gx, axis=2, keepdims=True)                     # (bg,cg,1,w)
    x_w_p = jnp.transpose(x_w, (0, 1, 3, 2))                      # (bg,cg,w,1)
    cat = jnp.concatenate([x_h, x_w_p], axis=2)                   # (bg,cg,h+w,1)
    hw_feat = jnp.einsum('oc,bckl->bokl', w1, cat) + b1[None, :, None, None]
    xh2, xw2 = hw_feat[:, :, :h], hw_feat[:, :, h:]
    gated = (gx * jax.nn.sigmoid(xh2)
             * jax.nn.sigmoid(jnp.transpose(xw2, (0, 1, 3, 2))))
    mean = jnp.mean(gated, axis=(2, 3), keepdims=True)
    var = jnp.mean((gated - mean) ** 2, axis=(2, 3), keepdims=True)
    x1 = ((gated - mean) / jnp.sqrt(var + GN_EPS)
          * gnw[None, :, None, None] + gnb[None, :, None, None])
    x2 = jax.lax.conv_general_dilated(
        gx, w3, window_strides=(1, 1), padding='SAME',
        dimension_numbers=('NCHW', 'OIHW', 'NCHW')) + b3[None, :, None, None]

    x11 = jax.nn.softmax(jnp.mean(x1, axis=(2, 3)), axis=-1)[:, None, :]
    x21 = jax.nn.softmax(jnp.mean(x2, axis=(2, 3)), axis=-1)[:, None, :]
    x12 = x2.reshape(bg, cg, h * w)
    x22 = x1.reshape(bg, cg, h * w)
    weights = (jnp.matmul(x11, x12) + jnp.matmul(x21, x22)).reshape(bg, 1, h, w)
    return (gx * jax.nn.sigmoid(weights)).reshape(b, c, h, w)


def init_params(key, channels, groups=8):
    """Deterministic synthetic params (shapes match the PyTorch module)."""
    cg = channels // groups
    k1, k2, k3, k4 = jax.random.split(key, 4)
    w1 = jax.random.normal(k1, (cg, cg), jnp.float32) * 0.2        # conv1x1 (O,I)
    b1 = jax.random.normal(k2, (cg,), jnp.float32) * 0.1
    w3 = jax.random.normal(k3, (cg, cg, 3, 3), jnp.float32) * 0.1  # conv3x3 (O,I,kh,kw)
    b3 = jax.random.normal(k4, (cg,), jnp.float32) * 0.1
    gnw = jnp.ones((cg,), jnp.float32)                             # GroupNorm defaults
    gnb = jnp.zeros((cg,), jnp.float32)
    return (w1, b1, w3, b3, gnw, gnb)


if __name__ == "__main__":
    groups = 8
    b, c, h, w = 2, 32, 16, 16          # channels must be divisible by groups
    key = jax.random.PRNGKey(0)
    kx, kp = jax.random.split(key)
    x = jax.random.normal(kx, (b, c, h, w), jnp.float32)
    params = init_params(kp, c, groups)

    run = jax.jit(functools.partial(ema_forward, groups=groups))
    out = jax.block_until_ready(run(x, params))

    ref = ema_reference(x, params, groups=groups)
    assert out.shape == (b, c, h, w)
    assert jnp.allclose(out, ref, atol=1e-4, rtol=1e-4), (
        float(jnp.max(jnp.abs(out - ref))))
    print("KERNEL_OK")
</pallas_src>

<mosaic_0001>
module attributes {stable_mosaic.version = 11 : i64} {
  func.func @ema_kernel(%arg0: i32, %arg1: memref<32x256xf32, #tpu.memory_space<vmem>>, %arg2: memref<256x32xf32, #tpu.memory_space<vmem>>, %arg3: memref<16x256xf32, #tpu.memory_space<vmem>>, %arg4: memref<16x256xf32, #tpu.memory_space<vmem>>, %arg5: memref<32x32xf32, #tpu.memory_space<vmem>>, %arg6: memref<32x32xf32, #tpu.memory_space<vmem>>, %arg7: memref<32x1xf32, #tpu.memory_space<vmem>>, %arg8: memref<9x32x32xf32, #tpu.memory_space<vmem>>, %arg9: memref<32x1xf32, #tpu.memory_space<vmem>>, %arg10: memref<32x1xf32, #tpu.memory_space<vmem>>, %arg11: memref<32x1xf32, #tpu.memory_space<vmem>>, %arg12: memref<2x256xf32, #tpu.memory_space<vmem>>, %arg13: memref<32x256xf32, #tpu.memory_space<vmem>>) attributes {dimension_semantics = [#tpu.dimension_semantics<parallel>], iteration_bounds = array<i64: 2>, scalar_prefetch = 0 : i64, scratch_operands = 0 : i64, tpu.core_type = #tpu.core_type<tc>, window_params = [{transform_indices = @transform_0, window_bounds = array<i64: 32, 256>}, {pipeline_mode = #tpu.pipeline_mode<synchronous>, transform_indices = @transform_1, window_bounds = array<i64: 256, 32>}, {pipeline_mode = #tpu.pipeline_mode<synchronous>, transform_indices = @transform_2, window_bounds = array<i64: 16, 256>}, {pipeline_mode = #tpu.pipeline_mode<synchronous>, transform_indices = @transform_3, window_bounds = array<i64: 16, 256>}, {pipeline_mode = #tpu.pipeline_mode<synchronous>, transform_indices = @transform_4, window_bounds = array<i64: 32, 32>}, {pipeline_mode = #tpu.pipeline_mode<synchronous>, transform_indices = @transform_5, window_bounds = array<i64: 32, 32>}, {pipeline_mode = #tpu.pipeline_mode<synchronous>, transform_indices = @transform_6, window_bounds = array<i64: 32, 1>}, {pipeline_mode = #tpu.pipeline_mode<synchronous>, transform_indices = @transform_7, window_bounds = array<i64: 9, 32, 32>}, {pipeline_mode = #tpu.pipeline_mode<synchronous>, transform_indices = @transform_8, window_bounds = array<i64: 32, 1>}, {pipeline_mode = #tpu.pipeline_mode<synchronous>, transform_indices = @transform_9, window_bounds = array<i64: 32, 1>}, {pipeline_mode = #tpu.pipeline_mode<synchronous>, transform_indices = @transform_10, window_bounds = array<i64: 32, 1>}, {pipeline_mode = #tpu.pipeline_mode<synchronous>, transform_indices = @transform_11, window_bounds = array<i64: 2, 256>}, {transform_indices = @transform_12, window_bounds = array<i64: 32, 256>}]} {
    %c0 = arith.constant 0 : index
    %c0_0 = arith.constant 0 : index
    %0 = vector.load %arg1[%c0, %c0_0] : memref<32x256xf32, #tpu.memory_space<vmem>>, vector<32x256xf32>
    %c0_1 = arith.constant 0 : index
    %c0_2 = arith.constant 0 : index
    %1 = vector.load %arg2[%c0_1, %c0_2] : memref<256x32xf32, #tpu.memory_space<vmem>>, vector<256x32xf32>
    %cst = arith.constant dense<0.000000e+00> : vector<32x32xf32>
    %2 = tpu.matmul %0, %1, %cst {dimension_numbers = #tpu.dot_dimension_numbers<[1], [0], [0], [1], [0, 0, 1, 1], [], []>} : vector<32x256xf32>, vector<256x32xf32>, vector<32x32xf32> -> vector<32x32xf32>
    %c0_3 = arith.constant 0 : index
    %c0_4 = arith.constant 0 : index
    %3 = vector.load %arg6[%c0_3, %c0_4] : memref<32x32xf32, #tpu.memory_space<vmem>>, vector<32x32xf32>
    %cst_5 = arith.constant dense<0.000000e+00> : vector<32x32xf32>
    %4 = tpu.matmul %3, %2, %cst_5 {dimension_numbers = #tpu.dot_dimension_numbers<[1], [0], [0], [1], [0, 0, 1, 1], [], []>} : vector<32x32xf32>, vector<32x32xf32>, vector<32x32xf32> -> vector<32x32xf32>
    %c0_6 = arith.constant 0 : index
    %c0_7 = arith.constant 0 : index
    %5 = vector.load %arg7[%c0_6, %c0_7] : memref<32x1xf32, #tpu.memory_space<vmem>>, vector<32x1xf32>
    %6 = vector.broadcast %5 : vector<32x1xf32> to vector<32x32xf32>
    %7 = arith.addf %4, %6 : vector<32x32xf32>
    %cst_8 = arith.constant 0.000000e+00 : f32
    %8 = vector.broadcast %cst_8 : f32 to vector<32x32xf32>
    %9 = arith.subf %8, %7 : vector<32x32xf32>
    %10 = math.exp %9 : vector<32x32xf32>
    %cst_9 = arith.constant 1.000000e+00 : f32
    %11 = vector.broadcast %cst_9 : f32 to vector<32x32xf32>
    %12 = arith.addf %11, %10 : vector<32x32xf32>
    %cst_10 = arith.constant 1.000000e+00 : f32
    %13 = vector.broadcast %cst_10 : f32 to vector<32x32xf32>
    %14 = arith.divf %13, %12 : vector<32x32xf32>
    %15 = vector.extract_strided_slice %14 {offsets = [0, 0], sizes = [32, 16], strides = [1, 1]} : vector<32x32xf32> to vector<32x16xf32>
    %c0_11 = arith.constant 0 : index
    %c0_12 = arith.constant 0 : index
    %16 = vector.load %arg3[%c0_11, %c0_12] : memref<16x256xf32, #tpu.memory_space<vmem>>, vector<16x256xf32>
    %cst_13 = arith.constant dense<0.000000e+00> : vector<32x256xf32>
    %17 = tpu.matmul %15, %16, %cst_13 {dimension_numbers = #tpu.dot_dimension_numbers<[1], [0], [0], [1], [0, 0, 1, 1], [], []>} : vector<32x16xf32>, vector<16x256xf32>, vector<32x256xf32> -> vector<32x256xf32>
    %18 = vector.extract_strided_slice %14 {offsets = [0, 16], sizes = [32, 16], strides = [1, 1]} : vector<32x32xf32> to vector<32x16xf32>
    %c0_14 = arith.constant 0 : index
    %c0_15 = arith.constant 0 : index
    %19 = vector.load %arg4[%c0_14, %c0_15] : memref<16x256xf32, #tpu.memory_space<vmem>>, vector<16x256xf32>
    %cst_16 = arith.constant dense<0.000000e+00> : vector<32x256xf32>
    %20 = tpu.matmul %18, %19, %cst_16 {dimension_numbers = #tpu.dot_dimension_numbers<[1], [0], [0], [1], [0, 0, 1, 1], [], []>} : vector<32x16xf32>, vector<16x256xf32>, vector<32x256xf32> -> vector<32x256xf32>
    %21 = arith.mulf %0, %17 : vector<32x256xf32>
    %22 = arith.mulf %21, %20 : vector<32x256xf32>
    %cst_17 = arith.constant dense<0.000000e+00> : vector<32xf32>
    %23 = vector.multi_reduction <add>, %22, %cst_17 [1] : vector<32x256xf32> to vector<32xf32>
    %24 = vector.shape_cast %23 : vector<32xf32> to vector<32x1xf32>
    %cst_18 = arith.constant 2.560000e+02 : f32
    %25 = vector.broadcast %cst_18 : f32 to vector<32x1xf32>
    %26 = arith.divf %24, %25 : vector<32x1xf32>
    %27 = vector.broadcast %26 : vector<32x1xf32> to vector<32x256xf32>
    %28 = arith.subf %22, %27 : vector<32x256xf32>
    %29 = arith.mulf %28, %28 : vector<32x256xf32>
    %cst_19 = arith.constant dense<0.000000e+00> : vector<32xf32>
    %30 = vector.multi_reduction <add>, %29, %cst_19 [1] : vector<32x256xf32> to vector<32xf32>
    %31 = vector.shape_cast %30 : vector<32xf32> to vector<32x1xf32>
    %cst_20 = arith.constant 2.560000e+02 : f32
    %32 = vector.broadcast %cst_20 : f32 to vector<32x1xf32>
    %33 = arith.divf %31, %32 : vector<32x1xf32>
    %cst_21 = arith.constant 9.99999974E-6 : f32
    %34 = vector.broadcast %cst_21 : f32 to vector<32x1xf32>
    %35 = arith.addf %33, %34 : vector<32x1xf32>
    %36 = math.rsqrt %35 : vector<32x1xf32>
    %37 = vector.broadcast %36 : vector<32x1xf32> to vector<32x256xf32>
    %38 = arith.mulf %28, %37 : vector<32x256xf32>
    %c0_22 = arith.constant 0 : index
    %c0_23 = arith.constant 0 : index
    %39 = vector.load %arg10[%c0_22, %c0_23] : memref<32x1xf32, #tpu.memory_space<vmem>>, vector<32x1xf32>
    %40 = vector.broadcast %39 : vector<32x1xf32> to vector<32x256xf32>
    %41 = arith.mulf %38, %40 : vector<32x256xf32>
    %c0_24 = arith.constant 0 : index
    %c0_25 = arith.constant 0 : index
    %42 = vector.load %arg11[%c0_24, %c0_25] : memref<32x1xf32, #tpu.memory_space<vmem>>, vector<32x1xf32>
    %43 = vector.broadcast %42 : vector<32x1xf32> to vector<32x256xf32>
    %44 = arith.addf %41, %43 : vector<32x256xf32>
    %c0_26 = arith.constant 0 : index
    %c0_27 = arith.constant 0 : index
    %45 = vector.load %arg12[%c0_26, %c0_27] : memref<2x256xf32, #tpu.memory_space<vmem>>, vector<1x256xf32>
    %c1 = arith.constant 1 : index
    %c0_28 = arith.constant 0 : index
    %46 = vector.load %arg12[%c1, %c0_28] : memref<2x256xf32, #tpu.memory_space<vmem>>, vector<1x256xf32>
    %cst_29 = arith.constant 0.000000e+00 : f32
    %47 = vector.broadcast %cst_29 : f32 to vector<32x256xf32>
    %cst_30 = arith.constant 0.000000e+00 : f32
    %48 = vector.broadcast %cst_30 : f32 to vector<32x17xf32>
    %49 = vector.extract_strided_slice %0 {offsets = [0, 0], sizes = [32, 239], strides = [1, 1]} : vector<32x256xf32> to vector<32x239xf32>
    %50 = tpu.concatenate %48, %49 in 1 : vector<32x17xf32>, vector<32x239xf32> -> vector<32x256xf32>
    %51 = vector.broadcast %45 : vector<1x256xf32> to vector<32x256xf32>
    %52 = arith.mulf %50, %51 : vector<32x256xf32>
    %c0_31 = arith.constant 0 : index
    %c0_32 = arith.constant 0 : index
    %c0_33 = arith.constant 0 : index
    %53 = vector.load %arg8[%c0_31, %c0_32, %c0_33] : memref<9x32x32xf32, #tpu.memory_space<vmem>>, vector<1x32x32xf32>
    %54 = vector.shape_cast %53 : vector<1x32x32xf32> to vector<32x32xf32>
    %cst_34 = arith.constant dense<0.000000e+00> : vector<32x256xf32>
    %55 = tpu.matmul %54, %52, %cst_34 {dimension_numbers = #tpu.dot_dimension_numbers<[1], [0], [0], [1], [0, 0, 1, 1], [], []>} : vector<32x32xf32>, vector<32x256xf32>, vector<32x256xf32> -> vector<32x256xf32>
    %56 = arith.addf %47, %55 : vector<32x256xf32>
    %cst_35 = arith.constant 0.000000e+00 : f32
    %57 = vector.broadcast %cst_35 : f32 to vector<32x16xf32>
    %58 = vector.extract_strided_slice %0 {offsets = [0, 0], sizes = [32, 240], strides = [1, 1]} : vector<32x256xf32> to vector<32x240xf32>
    %59 = tpu.concatenate %57, %58 in 1 : vector<32x16xf32>, vector<32x240xf32> -> vector<32x256xf32>
    %c1_36 = arith.constant 1 : index
    %c0_37 = arith.constant 0 : index
    %c0_38 = arith.constant 0 : index
    %60 = vector.load %arg8[%c1_36, %c0_37, %c0_38] : memref<9x32x32xf32, #tpu.memory_space<vmem>>, vector<1x32x32xf32>
    %61 = vector.shape_cast %60 : vector<1x32x32xf32> to vector<32x32xf32>
    %cst_39 = arith.constant dense<0.000000e+00> : vector<32x256xf32>
    %62 = tpu.matmul %61, %59, %cst_39 {dimension_numbers = #tpu.dot_dimension_numbers<[1], [0], [0], [1], [0, 0, 1, 1], [], []>} : vector<32x32xf32>, vector<32x256xf32>, vector<32x256xf32> -> vector<32x256xf32>
    %63 = arith.addf %56, %62 : vector<32x256xf32>
    %cst_40 = arith.constant 0.000000e+00 : f32
    %64 = vector.broadcast %cst_40 : f32 to vector<32x15xf32>
    %65 = vector.extract_strided_slice %0 {offsets = [0, 0], sizes = [32, 241], strides = [1, 1]} : vector<32x256xf32> to vector<32x241xf32>
    %66 = tpu.concatenate %64, %65 in 1 : vector<32x15xf32>, vector<32x241xf32> -> vector<32x256xf32>
    %67 = vector.broadcast %46 : vector<1x256xf32> to vector<32x256xf32>
    %68 = arith.mulf %66, %67 : vector<32x256xf32>
    %c2 = arith.constant 2 : index
    %c0_41 = arith.constant 0 : index
    %c0_42 = arith.constant 0 : index
    %69 = vector.load %arg8[%c2, %c0_41, %c0_42] : memref<9x32x32xf32, #tpu.memory_space<vmem>>, vector<1x32x32xf32>
    %70 = vector.shape_cast %69 : vector<1x32x32xf32> to vector<32x32xf32>
    %cst_43 = arith.constant dense<0.000000e+00> : vector<32x256xf32>
    %71 = tpu.matmul %70, %68, %cst_43 {dimension_numbers = #tpu.dot_dimension_numbers<[1], [0], [0], [1], [0, 0, 1, 1], [], []>} : vector<32x32xf32>, vector<32x256xf32>, vector<32x256xf32> -> vector<32x256xf32>
    %72 = arith.addf %63, %71 : vector<32x256xf32>
    %cst_44 = arith.constant 0.000000e+00 : f32
    %73 = vector.broadcast %cst_44 : f32 to vector<32x1xf32>
    %74 = vector.extract_strided_slice %0 {offsets = [0, 0], sizes = [32, 255], strides = [1, 1]} : vector<32x256xf32> to vector<32x255xf32>
    %75 = tpu.concatenate %73, %74 in 1 : vector<32x1xf32>, vector<32x255xf32> -> vector<32x256xf32>
    %76 = vector.broadcast %45 : vector<1x256xf32> to vector<32x256xf32>
    %77 = arith.mulf %75, %76 : vector<32x256xf32>
    %c3 = arith.constant 3 : index
    %c0_45 = arith.constant 0 : index
    %c0_46 = arith.constant 0 : index
    %78 = vector.load %arg8[%c3, %c0_45, %c0_46] : memref<9x32x32xf32, #tpu.memory_space<vmem>>, vector<1x32x32xf32>
    %79 = vector.shape_cast %78 : vector<1x32x32xf32> to vector<32x32xf32>
    %cst_47 = arith.constant dense<0.000000e+00> : vector<32x256xf32>
    %80 = tpu.matmul %79, %77, %cst_47 {dimension_numbers = #tpu.dot_dimension_numbers<[1], [0], [0], [1], [0, 0, 1, 1], [], []>} : vector<32x32xf32>, vector<32x256xf32>, vector<32x256xf32> -> vector<32x256xf32>
    %81 = arith.addf %72, %80 : vector<32x256xf32>
    %c4 = arith.constant 4 : index
    %c0_48 = arith.constant 0 : index
    %c0_49 = arith.constant 0 : index
    %82 = vector.load %arg8[%c4, %c0_48, %c0_49] : memref<9x32x32xf32, #tpu.memory_space<vmem>>, vector<1x32x32xf32>
    %83 = vector.shape_cast %82 : vector<1x32x32xf32> to vector<32x32xf32>
    %cst_50 = arith.constant dense<0.000000e+00> : vector<32x256xf32>
    %84 = tpu.matmul %83, %0, %cst_50 {dimension_numbers = #tpu.dot_dimension_numbers<[1], [0], [0], [1], [0, 0, 1, 1], [], []>} : vector<32x32xf32>, vector<32x256xf32>, vector<32x256xf32> -> vector<32x256xf32>
    %85 = arith.addf %81, %84 : vector<32x256xf32>
    %cst_51 = arith.constant 0.000000e+00 : f32
    %86 = vector.broadcast %cst_51 : f32 to vector<32x1xf32>
    %87 = vector.extract_strided_slice %0 {offsets = [0, 1], sizes = [32, 255], strides = [1, 1]} : vector<32x256xf32> to vector<32x255xf32>
    %88 = tpu.concatenate %87, %86 in 1 : vector<32x255xf32>, vector<32x1xf32> -> vector<32x256xf32>
    %89 = vector.broadcast %46 : vector<1x256xf32> to vector<32x256xf32>
    %90 = arith.mulf %88, %89 : vector<32x256xf32>
    %c5 = arith.constant 5 : index
    %c0_52 = arith.constant 0 : index
    %c0_53 = arith.constant 0 : index
    %91 = vector.load %arg8[%c5, %c0_52, %c0_53] : memref<9x32x32xf32, #tpu.memory_space<vmem>>, vector<1x32x32xf32>
    %92 = vector.shape_cast %91 : vector<1x32x32xf32> to vector<32x32xf32>
    %cst_54 = arith.constant dense<0.000000e+00> : vector<32x256xf32>
    %93 = tpu.matmul %92, %90, %cst_54 {dimension_numbers = #tpu.dot_dimension_numbers<[1], [0], [0], [1], [0, 0, 1, 1], [], []>} : vector<32x32xf32>, vector<32x256xf32>, vector<32x256xf32> -> vector<32x256xf32>
    %94 = arith.addf %85, %93 : vector<32x256xf32>
    %cst_55 = arith.constant 0.000000e+00 : f32
    %95 = vector.broadcast %cst_55 : f32 to vector<32x15xf32>
    %96 = vector.extract_strided_slice %0 {offsets = [0, 15], sizes = [32, 241], strides = [1, 1]} : vector<32x256xf32> to vector<32x241xf32>
    %97 = tpu.concatenate %96, %95 in 1 : vector<32x241xf32>, vector<32x15xf32> -> vector<32x256xf32>
    %98 = vector.broadcast %45 : vector<1x256xf32> to vector<32x256xf32>
    %99 = arith.mulf %97, %98 : vector<32x256xf32>
    %c6 = arith.constant 6 : index
    %c0_56 = arith.constant 0 : index
    %c0_57 = arith.constant 0 : index
    %100 = vector.load %arg8[%c6, %c0_56, %c0_57] : memref<9x32x32xf32, #tpu.memory_space<vmem>>, vector<1x32x32xf32>
    %101 = vector.shape_cast %100 : vector<1x32x32xf32> to vector<32x32xf32>
    %cst_58 = arith.constant dense<0.000000e+00> : vector<32x256xf32>
    %102 = tpu.matmul %101, %99, %cst_58 {dimension_numbers = #tpu.dot_dimension_numbers<[1], [0], [0], [1], [0, 0, 1, 1], [], []>} : vector<32x32xf32>, vector<32x256xf32>, vector<32x256xf32> -> vector<32x256xf32>
    %103 = arith.addf %94, %102 : vector<32x256xf32>
    %cst_59 = arith.constant 0.000000e+00 : f32
    %104 = vector.broadcast %cst_59 : f32 to vector<32x16xf32>
    %105 = vector.extract_strided_slice %0 {offsets = [0, 16], sizes = [32, 240], strides = [1, 1]} : vector<32x256xf32> to vector<32x240xf32>
    %106 = tpu.concatenate %105, %104 in 1 : vector<32x240xf32>, vector<32x16xf32> -> vector<32x256xf32>
    %c7 = arith.constant 7 : index
    %c0_60 = arith.constant 0 : index
    %c0_61 = arith.constant 0 : index
    %107 = vector.load %arg8[%c7, %c0_60, %c0_61] : memref<9x32x32xf32, #tpu.memory_space<vmem>>, vector<1x32x32xf32>
    %108 = vector.shape_cast %107 : vector<1x32x32xf32> to vector<32x32xf32>
    %cst_62 = arith.constant dense<0.000000e+00> : vector<32x256xf32>
    %109 = tpu.matmul %108, %106, %cst_62 {dimension_numbers = #tpu.dot_dimension_numbers<[1], [0], [0], [1], [0, 0, 1, 1], [], []>} : vector<32x32xf32>, vector<32x256xf32>, vector<32x256xf32> -> vector<32x256xf32>
    %110 = arith.addf %103, %109 : vector<32x256xf32>
    %cst_63 = arith.constant 0.000000e+00 : f32
    %111 = vector.broadcast %cst_63 : f32 to vector<32x17xf32>
    %112 = vector.extract_strided_slice %0 {offsets = [0, 17], sizes = [32, 239], strides = [1, 1]} : vector<32x256xf32> to vector<32x239xf32>
    %113 = tpu.concatenate %112, %111 in 1 : vector<32x239xf32>, vector<32x17xf32> -> vector<32x256xf32>
    %114 = vector.broadcast %46 : vector<1x256xf32> to vector<32x256xf32>
    %115 = arith.mulf %113, %114 : vector<32x256xf32>
    %c8 = arith.constant 8 : index
    %c0_64 = arith.constant 0 : index
    %c0_65 = arith.constant 0 : index
    %116 = vector.load %arg8[%c8, %c0_64, %c0_65] : memref<9x32x32xf32, #tpu.memory_space<vmem>>, vector<1x32x32xf32>
    %117 = vector.shape_cast %116 : vector<1x32x32xf32> to vector<32x32xf32>
    %cst_66 = arith.constant dense<0.000000e+00> : vector<32x256xf32>
    %118 = tpu.matmul %117, %115, %cst_66 {dimension_numbers = #tpu.dot_dimension_numbers<[1], [0], [0], [1], [0, 0, 1, 1], [], []>} : vector<32x32xf32>, vector<32x256xf32>, vector<32x256xf32> -> vector<32x256xf32>
    %119 = arith.addf %110, %118 : vector<32x256xf32>
    %c0_67 = arith.constant 0 : index
    %c0_68 = arith.constant 0 : index
    %120 = vector.load %arg9[%c0_67, %c0_68] : memref<32x1xf32, #tpu.memory_space<vmem>>, vector<32x1xf32>
    %121 = vector.broadcast %120 : vector<32x1xf32> to vector<32x256xf32>
    %122 = arith.addf %119, %121 : vector<32x256xf32>
    %cst_69 = arith.constant dense<0.000000e+00> : vector<32xf32>
    %123 = vector.multi_reduction <add>, %44, %cst_69 [1] : vector<32x256xf32> to vector<32xf32>
    %124 = vector.shape_cast %123 : vector<32xf32> to vector<32x1xf32>
    %cst_70 = arith.constant 3.906250e-03 : f32
    %125 = vector.broadcast %cst_70 : f32 to vector<32x1xf32>
    %126 = arith.mulf %124, %125 : vector<32x1xf32>
    %cst_71 = arith.constant dense<0.000000e+00> : vector<32xf32>
    %127 = vector.multi_reduction <add>, %122, %cst_71 [1] : vector<32x256xf32> to vector<32xf32>
    %128 = vector.shape_cast %127 : vector<32xf32> to vector<32x1xf32>
    %cst_72 = arith.constant 3.906250e-03 : f32
    %129 = vector.broadcast %cst_72 : f32 to vector<32x1xf32>
    %130 = arith.mulf %128, %129 : vector<32x1xf32>
    %131 = tpu.concatenate %126, %130 in 1 : vector<32x1xf32>, vector<32x1xf32> -> vector<32x2xf32>
    %c0_73 = arith.constant 0 : index
    %c0_74 = arith.constant 0 : index
    %132 = vector.load %arg5[%c0_73, %c0_74] : memref<32x32xf32, #tpu.memory_space<vmem>>, vector<32x32xf32>
    %cst_75 = arith.constant dense<0.000000e+00> : vector<32x2xf32>
    %133 = tpu.matmul %132, %131, %cst_75 {dimension_numbers = #tpu.dot_dimension_numbers<[1], [0], [0], [1], [0, 0, 1, 1], [], []>} : vector<32x32xf32>, vector<32x2xf32>, vector<32x2xf32> -> vector<32x2xf32>
    %cst_76 = arith.constant 2.500000e-01 : f32
    %134 = vector.broadcast %cst_76 : f32 to vector<32x2xf32>
    %135 = arith.mulf %133, %134 : vector<32x2xf32>
    %136 = arith.subf %131, %135 : vector<32x2xf32>
    %137 = math.exp %136 : vector<32x2xf32>
    %cst_77 = arith.constant dense<0.000000e+00> : vector<32x2xf32>
    %138 = tpu.matmul %132, %137, %cst_77 {dimension_numbers = #tpu.dot_dimension_numbers<[1], [0], [0], [1], [0, 0, 1, 1], [], []>} : vector<32x32xf32>, vector<32x2xf32>, vector<32x2xf32> -> vector<32x2xf32>
    %139 = arith.divf %137, %138 : vector<32x2xf32>
    %140 = vector.extract_strided_slice %139 {offsets = [0, 0], sizes = [32, 1], strides = [1, 1]} : vector<32x2xf32> to vector<32x1xf32>
    %141 = vector.extract_strided_slice %139 {offsets = [0, 1], sizes = [32, 1], strides = [1, 1]} : vector<32x2xf32> to vector<32x1xf32>
    %142 = vector.broadcast %140 : vector<32x1xf32> to vector<32x256xf32>
    %143 = arith.mulf %142, %122 : vector<32x256xf32>
    %144 = vector.broadcast %141 : vector<32x1xf32> to vector<32x256xf32>
    %145 = arith.mulf %144, %44 : vector<32x256xf32>
    %146 = arith.addf %143, %145 : vector<32x256xf32>
    %cst_78 = arith.constant dense<0.000000e+00> : vector<32x256xf32>
    %147 = tpu.matmul %132, %146, %cst_78 {dimension_numbers = #tpu.dot_dimension_numbers<[1], [0], [0], [1], [0, 0, 1, 1], [], []>} : vector<32x32xf32>, vector<32x256xf32>, vector<32x256xf32> -> vector<32x256xf32>
    %cst_79 = arith.constant 0.000000e+00 : f32
    %148 = vector.broadcast %cst_79 : f32 to vector<32x256xf32>
    %149 = arith.subf %148, %147 : vector<32x256xf32>
    %150 = math.exp %149 : vector<32x256xf32>
    %cst_80 = arith.constant 1.000000e+00 : f32
    %151 = vector.broadcast %cst_80 : f32 to vector<32x256xf32>
    %152 = arith.addf %151, %150 : vector<32x256xf32>
    %cst_81 = arith.constant 1.000000e+00 : f32
    %153 = vector.broadcast %cst_81 : f32 to vector<32x256xf32>
    %154 = arith.divf %153, %152 : vector<32x256xf32>
    %155 = arith.mulf %0, %154 : vector<32x256xf32>
    %c0_82 = arith.constant 0 : index
    %c0_83 = arith.constant 0 : index
    %156 = vector.load %arg13[%c0_82, %c0_83] : memref<32x256xf32, #tpu.memory_space<vmem>>, vector<32x256xf32>
    tpu.vector_store %arg13[%c0_82, %c0_83], %155 {strides = array<i32>} : memref<32x256xf32, #tpu.memory_space<vmem>>, vector<32x256xf32>,
    return
  }
  func.func @transform_0(%arg0: i32) -> (i32, i32) {
    %c0_i32 = arith.constant 0 : i32
    %c0_i32_0 = arith.constant 0 : i32
    return %arg0, %c0_i32 : i32, i32
  }
  func.func @transform_1(%arg0: i32) -> (i32, i32) {
    %c0_i32 = arith.constant 0 : i32
    %c0_i32_0 = arith.constant 0 : i32
    %c0_i32_1 = arith.constant 0 : i32
    return %c0_i32, %c0_i32_0 : i32, i32
  }
  func.func @transform_2(%arg0: i32) -> (i32, i32) {
    %c0_i32 = arith.constant 0 : i32
    %c0_i32_0 = arith.constant 0 : i32
    %c0_i32_1 = arith.constant 0 : i32
    return %c0_i32, %c0_i32_0 : i32, i32
  }
  func.func @transform_3(%arg0: i32) -> (i32, i32) {
    %c0_i32 = arith.constant 0 : i32
    %c0_i32_0 = arith.constant 0 : i32
    %c0_i32_1 = arith.constant 0 : i32
    return %c0_i32, %c0_i32_0 : i32, i32
  }
  func.func @transform_4(%arg0: i32) -> (i32, i32) {
    %c0_i32 = arith.constant 0 : i32
    %c0_i32_0 = arith.constant 0 : i32
    %c0_i32_1 = arith.constant 0 : i32
    return %c0_i32, %c0_i32_0 : i32, i32
  }
  func.func @transform_5(%arg0: i32) -> (i32, i32) {
    %c0_i32 = arith.constant 0 : i32
    %c0_i32_0 = arith.constant 0 : i32
    %c0_i32_1 = arith.constant 0 : i32
    return %c0_i32, %c0_i32_0 : i32, i32
  }
  func.func @transform_6(%arg0: i32) -> (i32, i32) {
    %c0_i32 = arith.constant 0 : i32
    %c0_i32_0 = arith.constant 0 : i32
    %c0_i32_1 = arith.constant 0 : i32
    return %c0_i32, %c0_i32_0 : i32, i32
  }
  func.func @transform_7(%arg0: i32) -> (i32, i32, i32) {
    %c0_i32 = arith.constant 0 : i32
    %c0_i32_0 = arith.constant 0 : i32
    %c0_i32_1 = arith.constant 0 : i32
    %c0_i32_2 = arith.constant 0 : i32
    return %c0_i32, %c0_i32_0, %c0_i32_1 : i32, i32, i32
  }
  func.func @transform_8(%arg0: i32) -> (i32, i32) {
    %c0_i32 = arith.constant 0 : i32
    %c0_i32_0 = arith.constant 0 : i32
    %c0_i32_1 = arith.constant 0 : i32
    return %c0_i32, %c0_i32_0 : i32, i32
  }
  func.func @transform_9(%arg0: i32) -> (i32, i32) {
    %c0_i32 = arith.constant 0 : i32
    %c0_i32_0 = arith.constant 0 : i32
    %c0_i32_1 = arith.constant 0 : i32
    return %c0_i32, %c0_i32_0 : i32, i32
  }
  func.func @transform_10(%arg0: i32) -> (i32, i32) {
    %c0_i32 = arith.constant 0 : i32
    %c0_i32_0 = arith.constant 0 : i32
    %c0_i32_1 = arith.constant 0 : i32
    return %c0_i32, %c0_i32_0 : i32, i32
  }
  func.func @transform_11(%arg0: i32) -> (i32, i32) {
    %c0_i32 = arith.constant 0 : i32
    %c0_i32_0 = arith.constant 0 : i32
    %c0_i32_1 = arith.constant 0 : i32
    return %c0_i32, %c0_i32_0 : i32, i32
  }
  func.func @transform_12(%arg0: i32) -> (i32, i32) {
    %c0_i32 = arith.constant 0 : i32
    %c0_i32_0 = arith.constant 0 : i32
    return %arg0, %c0_i32 : i32, i32
  }
}

</mosaic_0001>

<llo_original>
// kernel: mul.22
$region0: #{mul.22}
  #allocation0 [shape = 's32[1]{0}', space=sflag, size = 0x4, scoped, tag = 'scoped memory for mul.22']
  %s0 = inlined_call_operand.vmem [shape: f32[32,32], index: 0, kind: input, shape index: {}]
  %s1 = inlined_call_operand.vmem [shape: f32[32,32], index: 1, kind: input, shape index: {}]
  %s2 = inlined_call_operand.vmem [shape: f32[32,32], index: 2, kind: output, shape index: {}]
  %v3 = vld [vmem:[%s0] sm:$0xff]
  %v4 = vld [vmem:[%s1] sm:$0xff]
  %5 = xla_tuple %v3, %v4
  %6 = xla_tuple %5
  %v7 = vmul.f32 %v3, %v4
  %8 = xla_tuple %v7
  %9 = vst [vmem:[%s2] sm:$0xff] %v7
  %s10 = scalar_lea.vmem %s0, 8
  %v11 = vld [vmem:[%s10] sm:$0xff]
  %s12 = scalar_lea.vmem %s1, 8
  %v13 = vld [vmem:[%s12] sm:$0xff]
  %14 = xla_tuple %v11, %v13
  %15 = xla_tuple %14
  %v16 = vmul.f32 %v11, %v13
  %17 = xla_tuple %v16
  %s18 = scalar_lea.vmem %s2, 8
  %19 = vst [vmem:[%s18] sm:$0xff] %v16
  %s20 = scalar_lea.vmem %s0, 16
  %v21 = vld [vmem:[%s20] sm:$0xff]
  %s22 = scalar_lea.vmem %s1, 16
  %v23 = vld [vmem:[%s22] sm:$0xff]
  %24 = xla_tuple %v21, %v23
  %25 = xla_tuple %24
  %v26 = vmul.f32 %v21, %v23
  %27 = xla_tuple %v26
  %s28 = scalar_lea.vmem %s2, 16
  %29 = vst [vmem:[%s28] sm:$0xff] %v26
  %s30 = scalar_lea.vmem %s0, 24
  %v31 = vld [vmem:[%s30] sm:$0xff]
  %s32 = scalar_lea.vmem %s1, 24
  %v33 = vld [vmem:[%s32] sm:$0xff]
  %34 = xla_tuple %v31, %v33
  %35 = xla_tuple %34
  %v36 = vmul.f32 %v31, %v33
  %37 = xla_tuple %v36
  %s38 = scalar_lea.vmem %s2, 24
  %39 = vst [vmem:[%s38] sm:$0xff] %v36

// kernel: tile.23
$region0: #{tile.23}
  #allocation0 [shape = 's32[1]{0}', space=sflag, size = 0x4, scoped, tag = 'scoped memory for tile.23']
  %s0 = inlined_call_operand.vmem [shape: f32[4], index: 0, kind: input, shape index: {}]
  %s1 = inlined_call_operand.vmem [shape: f32[8,4], index: 1, kind: output, shape index: {}]
  // Predicated region
  $region2: #{tile.23} parent=0 // pred_check
    _
  $region3: #{tile.23} parent=0 // pred_check_branch
    %3 = sbr.rel (0) target = $region5
  $region4: #{tile.23} parent=0 // pred_region
    _
  $region5: #{tile.23} parent=0 // pred_fallthru
    _
  %v4 = vld [vmem:[%s0] ss:$0 sm:$0xff]
  %5 = vst [vmem:[%s1] sm:$0xff] %v4

// kernel: tile.0
$region0: #{tile.0}
  %s0 = inlined_call_operand.vmem [shape: f32[8,4], index: 0, kind: input, shape index: {}]
  %s1 = inlined_call_operand.vmem [shape: f32[32,1], index: 1, kind: output, shape index: {}]
  %v2 = vld [vmem:[%s0] sm:$0xff]
  %vm3 = vcmask 7168
  %4 = vst.msk [vmem:[%s1] ss:$4 sm:$0xff] %vm3, %v2
  %v5 = vld [vmem:[%s0] sm:$0xff]
  %6 = vrot.lane.b32.xlu0 %v5, 127
  %v7 = vpop.permute.xlu0 %6
  %vm8 = vcmask 7168
  %s9 = scalar_lea.vmem %s1, 1
  %10 = vst.msk [vmem:[%s9] ss:$4 sm:$0xff] %vm8, %v7
  %v11 = vld [vmem:[%s0] sm:$0xff]
  %12 = vrot.lane.b32.xlu0 %v11, 126
  %v13 = vpop.permute.xlu0 %12
  %vm14 = vcmask 7168
  %s15 = scalar_lea.vmem %s1, 2
  %16 = vst.msk [vmem:[%s15] ss:$4 sm:$0xff] %vm14, %v13
  %v17 = vld [vmem:[%s0] sm:$0xff]
  %18 = vrot.lane.b32.xlu0 %v17, 125
  %v19 = vpop.permute.xlu0 %18
  %vm20 = vcmask 7168
  %s21 = scalar_lea.vmem %s1, 3
  %22 = vst.msk [vmem:[%s21] ss:$4 sm:$0xff] %vm20, %v19

// kernel: ema_forward.1
$region0: #{ema_forward.1}
  #allocation0 [shape = 'u32[]', space=smem, size = 0x4, offset = 0x4, fixed_abs, tag = 'smem constant byte address 0x4 - core index']
  #allocation1 [shape = 'u32[144,128]{1,0:T(1,128)}', space=vmem, size = 0x12000, scoped, tag = 'internal scratch']
  %s0 = inlined_call_operand.vmem [shape: f32[64,256], index: 0, kind: input, shape index: {}]
  %s1 = inlined_call_operand.vmem [shape: f32[256,32], index: 1, kind: input, shape index: {}]
  %s2 = inlined_call_operand.vmem [shape: f32[16,256], index: 2, kind: input, shape index: {}]
  %s3 = inlined_call_operand.vmem [shape: f32[16,256], index: 3, kind: input, shape index: {}]
  %s4 = inlined_call_operand.vmem [shape: f32[32,32], index: 4, kind: input, shape index: {}]
  %s5 = inlined_call_operand.vmem [shape: f32[32,32], index: 5, kind: input, shape index: {}]
  %s6 = inlined_call_operand.vmem [shape: f32[32,1], index: 6, kind: input, shape index: {}]
  %s7 = inlined_call_operand.vmem [shape: f32[9,32,32], index: 7, kind: input, shape index: {}]
  %s8 = inlined_call_operand.vmem [shape: f32[32,1], index: 8, kind: input, shape index: {}]
  %s9 = inlined_call_operand.vmem [shape: f32[32,1], index: 9, kind: input, shape index: {}]
  %s10 = inlined_call_operand.vmem [shape: f32[32,1], index: 10, kind: input, shape index: {}]
  %s11 = inlined_call_operand.vmem [shape: f32[2,256], index: 11, kind: input, shape index: {}]
  %s12 = inlined_call_operand.vmem [shape: f32[64,256], index: 12, kind: output, shape index: {}]
  %s13 = sld [smem:[#allocation0]]
  $region81: #{ema_forward.1} parent=0
    _
  %s15 = ssub.s32 1, %s13
  %s16 = scalar_select 0, %s15, %s13
  loop: start=0, step=1, limit=4
  $region2: #{ema_forward.1} parent=0 // loop_pre_header
    _
  $region3: #{ema_forward.1} parent=0 // loop_header
    %s18 = sphi 0, %s22
    %p19 = scmp.ge.s32.totalorder %s18, 4
    %s28 = sphi 0, %s30
    %s31 = sphi 0, %s28
    %s32 = sphi 0, %s31
    %s48 = sphi 0, %s32
    %s52 = sphi 0, %s52
    %s54 = sphi 0, %s52
    %s55 = sphi 0, %s54
    %s69 = sphi 0, %s55
    %s73 = sphi 0, %s73
    %s75 = sphi 0, %s73
    %s76 = sphi 0, %s75
    %s90 = sphi 0, %s76
    %s94 = sphi 0, %s94
    %s96 = sphi 0, %s94
    %s97 = sphi 0, %s96
    %s111 = sphi 0, %s97
    %s115 = sphi 0, %s115
    %s117 = sphi 0, %s115
    %s118 = sphi 0, %s117
    %s132 = sphi 0, %s118
    %s136 = sphi 0, %s136
    %s138 = sphi 0, %s136
    %s139 = sphi 0, %s138
    %s153 = sphi 0, %s139
    %s157 = sphi 0, %s157
    %s159 = sphi 0, %s157
    %s160 = sphi 0, %s159
    %s174 = sphi 0, %s160
    %s178 = sphi 0, %s178
    %s180 = sphi 0, %s178
    %s181 = sphi 0, %s180
    %s195 = sphi 0, %s181
    %s199 = sphi 0, %s199
    %s201 = sphi 0, %s199
    %s202 = sphi 0, %s201
    %s216 = sphi 0, %s202
    %s220 = sphi 0, %s220
    %s222 = sphi 0, %s220
    %s223 = sphi 0, %s222
    %s237 = sphi 0, %s223
    %s241 = sphi 0, %s241
    %s243 = sphi 0, %s241
    %s244 = sphi 0, %s243
    %s258 = sphi 0, %s244
    %s262 = sphi 0, %s262
    %s264 = sphi 0, %s262
    %s265 = sphi 0, %s264
    %s279 = sphi 0, %s265
    %s285 = sphi 0, %s287
    %s288 = sphi 0, %s285
    %s289 = sphi 0, %s288
    %s305 = sphi 0, %s289
  $region4: #{ema_forward.1} parent=0 // loop_header_branch
    %21 = sbr.rel (%p19) target = $region8
  $region5: #{ema_forward.1} parent=0 // loop_body
    %s23 = ssub.s32 %s18, 1
    %s24 = ssub.s32 %s18, 2
    %s25 = sadd.s32 %s18, 1
    %s26 = ssub.s32 %s18, %s25
    %p27 = scmp.eq.s32.totalorder %s26, 0
    %s29 = sadd.s32 %s28, 1
    %s30 = scalar_select %p27, %s28, %s29
    %p33 = pneg %p27
    %p34 = scmp.eq.s32.totalorder %s18, 1
    %p35 = por %p33, %p34
    %p36 = scmp.ne.s32.totalorder %s28, %s31
    %p37 = scmp.eq.s32.totalorder %s18, 0
    %p38 = por %p36, %p37
    %p39 = scmp.ne.s32.totalorder %s28, %s31
    %p40 = scmp.eq.s32.totalorder %s23, 1
    %p41 = por %p39, %p40
    %p42 = scmp.ne.s32.totalorder %s31, %s32
    %p43 = scmp.eq.s32.totalorder %s23, 0
    %p44 = por %p42, %p43
    %p45 = scmp.ne.s32.totalorder %s31, %s32
    %p46 = scmp.eq.s32.totalorder %s24, 1
    %p47 = por %p45, %p46
    %p49 = scmp.ne.s32.totalorder %s32, %s48
    %p50 = scmp.eq.s32.totalorder %s24, 0
    %p51 = por %p49, %p50
    %s53 = sadd.s32 %s52, 1
    %p56 = scmp.eq.s32.totalorder %s18, 1
    %p57 = scmp.ne.s32.totalorder %s52, %s54
    %p58 = scmp.eq.s32.totalorder %s18, 0
    %p59 = por %p57, %p58
    %p60 = scmp.ne.s32.totalorder %s52, %s54
    %p61 = scmp.eq.s32.totalorder %s23, 1
    %p62 = por %p60, %p61
    %p63 = scmp.ne.s32.totalorder %s54, %s55
    %p64 = scmp.eq.s32.totalorder %s23, 0
    %p65 = por %p63, %p64
    %p66 = scmp.ne.s32.totalorder %s54, %s55
    %p67 = scmp.eq.s32.totalorder %s24, 1
    %p68 = por %p66, %p67
    %p70 = scmp.ne.s32.totalorder %s55, %s69
    %p71 = scmp.eq.s32.totalorder %s24, 0
    %p72 = por %p70, %p71
    %s74 = sadd.s32 %s73, 1
    %p77 = scmp.eq.s32.totalorder %s18, 1
    %p78 = scmp.ne.s32.totalorder %s73, %s75
    %p79 = scmp.eq.s32.totalorder %s18, 0
    %p80 = por %p78, %p79
    %p81 = scmp.ne.s32.totalorder %s73, %s75
    %p82 = scmp.eq.s32.totalorder %s23, 1
    %p83 = por %p81, %p82
    %p84 = scmp.ne.s32.totalorder %s75, %s76
    %p85 = scmp.eq.s32.totalorder %s23, 0
    %p86 = por %p84, %p85
    %p87 = scmp.ne.s32.totalorder %s75, %s76
    %p88 = scmp.eq.s32.totalorder %s24, 1
    %p89 = por %p87, %p88
    %p91 = scmp.ne.s32.totalorder %s76, %s90
    %p92 = scmp.eq.s32.totalorder %s24, 0
    %p93 = por %p91, %p92
    %s95 = sadd.s32 %s94, 1
    %p98 = scmp.eq.s32.totalorder %s18, 1
    %p99 = scmp.ne.s32.totalorder %s94, %s96
    %p100 = scmp.eq.s32.totalorder %s18, 0
    %p101 = por %p99, %p100
    %p102 = scmp.ne.s32.totalorder %s94, %s96
    %p103 = scmp.eq.s32.totalorder %s23, 1
    %p104 = por %p102, %p103
    %p105 = scmp.ne.s32.totalorder %s96, %s97
    %p106 = scmp.eq.s32.totalorder %s23, 0
    %p107 = por %p105, %p106
    %p108 = scmp.ne.s32.totalorder %s96, %s97
    %p109 = scmp.eq.s32.totalorder %s24, 1
    %p110 = por %p108, %p109
    %p112 = scmp.ne.s32.totalorder %s97, %s111
    %p113 = scmp.eq.s32.totalorder %s24, 0
    %p114 = por %p112, %p113
    %s116 = sadd.s32 %s115, 1
    %p119 = scmp.eq.s32.totalorder %s18, 1
    %p120 = scmp.ne.s32.totalorder %s115, %s117
    %p121 = scmp.eq.s32.totalorder %s18, 0
    %p122 = por %p120, %p121
    %p123 = scmp.ne.s32.totalorder %s115, %s117
    %p124 = scmp.eq.s32.totalorder %s23, 1
    %p125 = por %p123, %p124
    %p126 = scmp.ne.s32.totalorder %s117, %s118
    %p127 = scmp.eq.s32.totalorder %s23, 0
    %p128 = por %p126, %p127
    %p129 = scmp.ne.s32.totalorder %s117, %s118
    %p130 = scmp.eq.s32.totalorder %s24, 1
    %p131 = por %p129, %p130
    %p133 = scmp.ne.s32.totalorder %s118, %s132
    %p134 = scmp.eq.s32.totalorder %s24, 0
    %p135 = por %p133, %p134
    %s137 = sadd.s32 %s136, 1
    %p140 = scmp.eq.s32.totalorder %s18, 1
    %p141 = scmp.ne.s32.totalorder %s136, %s138
    %p142 = scmp.eq.s32.totalorder %s18, 0
    %p143 = por %p141, %p142
    %p144 = scmp.ne.s32.totalorder %s136, %s138
    %p145 = scmp.eq.s32.totalorder %s23, 1
    %p146 = por %p144, %p145
    %p147 = scmp.ne.s32.totalorder %s138, %s139
    %p148 = scmp.eq.s32.totalorder %s23, 0
    %p149 = por %p147, %p148
    %p150 = scmp.ne.s32.totalorder %s138, %s139
    %p151 = scmp.eq.s32.totalorder %s24, 1
    %p152 = por %p150, %p151
    %p154 = scmp.ne.s32.totalorder %s139, %s153
    %p155 = scmp.eq.s32.totalorder %s24, 0
    %p156 = por %p154, %p155
    %s158 = sadd.s32 %s157, 1
    %p161 = scmp.eq.s32.totalorder %s18, 1
    %p162 = scmp.ne.s32.totalorder %s157, %s159
    %p163 = scmp.eq.s32.totalorder %s18, 0
    %p164 = por %p162, %p163
    %p165 = scmp.ne.s32.totalorder %s157, %s159
    %p166 = scmp.eq.s32.totalorder %s23, 1
    %p167 = por %p165, %p166
    %p168 = scmp.ne.s32.totalorder %s159, %s160
    %p169 = scmp.eq.s32.totalorder %s23, 0
    %p170 = por %p168, %p169
    %p171 = scmp.ne.s32.totalorder %s159, %s160
    %p172 = scmp.eq.s32.totalorder %s24, 1
    %p173 = por %p171, %p172
    %p175 = scmp.ne.s32.totalorder %s160, %s174
    %p176 = scmp.eq.s32.totalorder %s24, 0
    %p177 = por %p175, %p176
    %s179 = sadd.s32 %s178, 1
    %p182 = scmp.eq.s32.totalorder %s18, 1
    %p183 = scmp.ne.s32.totalorder %s178, %s180
    %p184 = scmp.eq.s32.totalorder %s18, 0
    %p185 = por %p183, %p184
    %p186 = scmp.ne.s32.totalorder %s178, %s180
    %p187 = scmp.eq.s32.totalorder %s23, 1
    %p188 = por %p186, %p187
    %p189 = scmp.ne.s32.totalorder %s180, %s181
    %p190 = scmp.eq.s32.totalorder %s23, 0
    %p191 = por %p189, %p190
    %p192 = scmp.ne.s32.totalorder %s180, %s181
    %p193 = scmp.eq.s32.totalorder %s24, 1
    %p194 = por %p192, %p193
    %p196 = scmp.ne.s32.totalorder %s181, %s195
    %p197 = scmp.eq.s32.totalorder %s24, 0
    %p198 = por %p196, %p197
    %s200 = sadd.s32 %s199, 1
    %p203 = scmp.eq.s32.totalorder %s18, 1
    %p204 = scmp.ne.s32.totalorder %s199, %s201
    %p205 = scmp.eq.s32.totalorder %s18, 0
    %p206 = por %p204, %p205
    %p207 = scmp.ne.s32.totalorder %s199, %s201
    %p208 = scmp.eq.s32.totalorder %s23, 1
    %p209 = por %p207, %p208
    %p210 = scmp.ne.s32.totalorder %s201, %s202
    %p211 = scmp.eq.s32.totalorder %s23, 0
    %p212 = por %p210, %p211
    %p213 = scmp.ne.s32.totalorder %s201, %s202
    %p214 = scmp.eq.s32.totalorder %s24, 1
    %p215 = por %p213, %p214
    %p217 = scmp.ne.s32.totalorder %s202, %s216
    %p218 = scmp.eq.s32.totalorder %s24, 0
    %p219 = por %p217, %p218
    %s221 = sadd.s32 %s220, 1
    %p224 = scmp.eq.s32.totalorder %s18, 1
    %p225 = scmp.ne.s32.totalorder %s220, %s222
    %p226 = scmp.eq.s32.totalorder %s18, 0
    %p227 = por %p225, %p226
    %p228 = scmp.ne.s32.totalorder %s220, %s222
    %p229 = scmp.eq.s32.totalorder %s23, 1
    %p230 = por %p228, %p229
    %p231 = scmp.ne.s32.totalorder %s222, %s223
    %p232 = scmp.eq.s32.totalorder %s23, 0
    %p233 = por %p231, %p232
    %p234 = scmp.ne.s32.totalorder %s222, %s223
    %p235 = scmp.eq.s32.totalorder %s24, 1
    %p236 = por %p234, %p235
    %p238 = scmp.ne.s32.totalorder %s223, %s237
    %p239 = scmp.eq.s32.totalorder %s24, 0
    %p240 = por %p238, %p239
    %s242 = sadd.s32 %s241, 1
    %p245 = scmp.eq.s32.totalorder %s18, 1
    %p246 = scmp.ne.s32.totalorder %s241, %s243
    %p247 = scmp.eq.s32.totalorder %s18, 0
    %p248 = por %p246, %p247
    %p249 = scmp.ne.s32.totalorder %s241, %s243
    %p250 = scmp.eq.s32.totalorder %s23, 1
    %p251 = por %p249, %p250
    %p252 = scmp.ne.s32.totalorder %s243, %s244
    %p253 = scmp.eq.s32.totalorder %s23, 0
    %p254 = por %p252, %p253
    %p255 = scmp.ne.s32.totalorder %s243, %s244
    %p256 = scmp.eq.s32.totalorder %s24, 1
    %p257 = por %p255, %p256
    %p259 = scmp.ne.s32.totalorder %s244, %s258
    %p260 = scmp.eq.s32.totalorder %s24, 0
    %p261 = por %p259, %p260
    %s263 = sadd.s32 %s262, 1
    %p266 = scmp.eq.s32.totalorder %s18, 1
    %p267 = scmp.ne.s32.totalorder %s262, %s264
    %p268 = scmp.eq.s32.totalorder %s18, 0
    %p269 = por %p267, %p268
    %p270 = scmp.ne.s32.totalorder %s262, %s264
    %p271 = scmp.eq.s32.totalorder %s23, 1
    %p272 = por %p270, %p271
    %p273 = scmp.ne.s32.totalorder %s264, %s265
    %p274 = scmp.eq.s32.totalorder %s23, 0
    %p275 = por %p273, %p274
    %p276 = scmp.ne.s32.totalorder %s264, %s265
    %p277 = scmp.eq.s32.totalorder %s24, 1
    %p278 = por %p276, %p277
    %p280 = scmp.ne.s32.totalorder %s265, %s279
    %p281 = scmp.eq.s32.totalorder %s24, 0
    %p282 = por %p280, %p281
    %s283 = ssub.s32 %s18, %s25
    %p284 = scmp.eq.s32.totalorder %s283, 0
    %s286 = sadd.s32 %s285, 1
    %s287 = scalar_select %p284, %s285, %s286
    %p290 = pneg %p284
    %p291 = scmp.eq.s32.totalorder %s18, 1
    %p292 = por %p290, %p291
    %p293 = scmp.ne.s32.totalorder %s285, %s288
    %p294 = scmp.eq.s32.totalorder %s18, 0
    %p295 = por %p293, %p294
    %p296 = scmp.ne.s32.totalorder %s285, %s288
    %p297 = scmp.eq.s32.totalorder %s23, 1
    %p298 = por %p296, %p297
    %p299 = scmp.ne.s32.totalorder %s288, %s289
    %p300 = scmp.eq.s32.totalorder %s23, 0
    %p301 = por %p299, %p300
    %p302 = scmp.ne.s32.totalorder %s288, %s289
    %p303 = scmp.eq.s32.totalorder %s24, 1
    %p304 = por %p302, %p303
    %p306 = scmp.ne.s32.totalorder %s289, %s305
    %p307 = scmp.eq.s32.totalorder %s24, 0
    %p308 = por %p306, %p307
    %p309 = scmp.le.s32.totalorder 1, %s18
    %p310 = scmp.lt.s32.totalorder %s18, 3
    %p311 = pnand %p309, %p310
    %p312 = pneg %p311
    // Predicated region
    $region9: #{ema_forward.1} parent=5 // pred_check
      _
    $region10: #{ema_forward.1} parent=5 // pred_check_branch
      %314 = sbr.rel (%p311) target = $region12
    $region11: #{ema_forward.1} parent=5 // pred_region
      %s315 = ssub.s32 %s18, 1
      // Predicated region
      $region13: #{ema_forward.1} parent=11 // pred_check
        %p316 = pneg %p65
      $region14: #{ema_forward.1} parent=11 // pred_check_branch
        %318 = sbr.rel (%p316) target = $region16
      $region15: #{ema_forward.1} parent=11 // pred_region
        _
      $region16: #{ema_forward.1} parent=11 // pred_fallthru
        _
      // Predicated region
      $region17: #{ema_forward.1} parent=11 // pred_check
        %p319 = pneg %p86
      $region18: #{ema_forward.1} parent=11 // pred_check_branch
        %321 = sbr.rel (%p319) target = $region20
      $region19: #{ema_forward.1} parent=11 // pred_region
        _
      $region20: #{ema_forward.1} parent=11 // pred_fallthru
        _
      // Predicated region
      $region21: #{ema_forward.1} parent=11 // pred_check
        %p322 = pneg %p107
      $region22: #{ema_forward.1} parent=11 // pred_check_branch
        %324 = sbr.rel (%p322) target = $region24
      $region23: #{ema_forward.1} parent=11 // pred_region
        _
      $region24: #{ema_forward.1} parent=11 // pred_fallthru
        _
      // Predicated region
      $region25: #{ema_forward.1} parent=11 // pred_check
        %p325 = pneg %p128
      $region26: #{ema_forward.1} parent=11 // pred_check_branch
        %327 = sbr.rel (%p325) target = $region28
      $region27: #{ema_forward.1} parent=11 // pred_region
        _
      $region28: #{ema_forward.1} parent=11 // pred_fallthru
        _
      // Predicated region
      $region29: #{ema_forward.1} parent=11 // pred_check
        %p328 = pneg %p149
      $region30: #{ema_forward.1} parent=11 // pred_check_branch
        %330 = sbr.rel (%p328) target = $region32
      $region31: #{ema_forward.1} parent=11 // pred_region
        _
      $region32: #{ema_forward.1} parent=11 // pred_fallthru
        _
      // Predicated region
      $region33: #{ema_forward.1} parent=11 // pred_check
        %p331 = pneg %p170
      $region34: #{ema_forward.1} parent=11 // pred_check_branch
        %333 = sbr.rel (%p331) target = $region36
      $region35: #{ema_forward.1} parent=11 // pred_region
        _
      $region36: #{ema_forward.1} parent=11 // pred_fallthru
        _
      // Predicated region
      $region37: #{ema_forward.1} parent=11 // pred_check
        %p334 = pneg %p191
      $region38: #{ema_forward.1} parent=11 // pred_check_branch
        %336 = sbr.rel (%p334) target = $region40
      $region39: #{ema_forward.1} parent=11 // pred_region
        _
      $region40: #{ema_forward.1} parent=11 // pred_fallthru
        _
      // Predicated region
      $region41: #{ema_forward.1} parent=11 // pred_check
        %p337 = pneg %p212
      $region42: #{ema_forward.1} parent=11 // pred_check_branch
        %339 = sbr.rel (%p337) target = $region44
      $region43: #{ema_forward.1} parent=11 // pred_region
        _
      $region44: #{ema_forward.1} parent=11 // pred_fallthru
        _
      // Predicated region
      $region45: #{ema_forward.1} parent=11 // pred_check
        %p340 = pneg %p233
      $region46: #{ema_forward.1} parent=11 // pred_check_branch
        %342 = sbr.rel (%p340) target = $region48
      $region47: #{ema_forward.1} parent=11 // pred_region
        _
      $region48: #{ema_forward.1} parent=11 // pred_fallthru
        _
      // Predicated region
      $region49: #{ema_forward.1} parent=11 // pred_check
        %p343 = pneg %p254
      $region50: #{ema_forward.1} parent=11 // pred_check_branch
        %345 = sbr.rel (%p343) target = $region52
      $region51: #{ema_forward.1} parent=11 // pred_region
        _
      $region52: #{ema_forward.1} parent=11 // pred_fallthru
        _
      // Predicated region
      $region53: #{ema_forward.1} parent=11 // pred_check
        %p346 = pneg %p275
      $region54: #{ema_forward.1} parent=11 // pred_check_branch
        %348 = sbr.rel (%p346) target = $region56
      $region55: #{ema_forward.1} parent=11 // pred_region
        _
      $region56: #{ema_forward.1} parent=11 // pred_fallthru
        _
    $region12: #{ema_forward.1} parent=5 // pred_fallthru
      _
    %p349 = scmp.lt.s32.totalorder %s18, 2
    // Predicated region
    $region57: #{ema_forward.1} parent=5 // pred_check
      %p350 = pneg %p349
    $region58: #{ema_forward.1} parent=5 // pred_check_branch
      %352 = sbr.rel (%p350) target = $region60
    $region59: #{ema_forward.1} parent=5 // pred_region
      // Predicated region
      $region61: #{ema_forward.1} parent=59 // pred_check
        %p353 = pneg %p38
      $region62: #{ema_forward.1} parent=59 // pred_check_branch
        %355 = sbr.rel (%p353) target = $region64
      $region63: #{ema_forward.1} parent=59 // pred_region
        %s356 = smul.u32 4, %s18
        %p357 = scmp.lt.s32.totalorder %s356, 7
        %s358 = scalar_select %p357, %s356, 7
        %s359 = smul.addr %s358, 2
        %s360 = smul.addr %s359, 8
        %s361 = scalar_lea.vmem %s0, %s360
        %s362 = smul.u32 4, %s18
      $region64: #{ema_forward.1} parent=59 // pred_fallthru
        _
    $region60: #{ema_forward.1} parent=5 // pred_fallthru
      _
    %p363 = scmp.le.s32.totalorder 1, %s18
    %p364 = scmp.lt.s32.totalorder %s18, 3
    %p365 = pnand %p363, %p364
    %p366 = pneg %p365
    // Predicated region
    $region65: #{ema_forward.1} parent=5 // pred_check
      _
    $region66: #{ema_forward.1} parent=5 // pred_check_branch
      %368 = sbr.rel (%p365) target = $region68
    $region67: #{ema_forward.1} parent=5 // pred_region
      %s369 = ssub.s32 %s18, 1
      %s370 = smul.u32 4, %s23
      %p371 = scmp.lt.s32.totalorder %s370, 7
      %s372 = scalar_select %p371, %s370, 7
      %s373 = smul.addr %s372, 2
      %s374 = smul.addr %s373, 8
      %s375 = scalar_lea.vmem %s0, %s374
      %p376 = pneg %p44
      %p377 = pneg %p41
      %p378 = pneg %p65
      %p379 = pneg %p62
      %p380 = pneg %p86
      %p381 = pneg %p83
      %p382 = pneg %p107
      %p383 = pneg %p104
      %p384 = pneg %p128
      %p385 = pneg %p125
      %p386 = pneg %p149
      %p387 = pneg %p146
      %p388 = pneg %p170
      %p389 = pneg %p167
      %p390 = pneg %p191
      %p391 = pneg %p188
      %p392 = pneg %p212
      %p393 = pneg %p209
      %p394 = pneg %p233
      %p395 = pneg %p230
      %p396 = pneg %p254
      %p397 = pneg %p251
      %p398 = pneg %p275
      %p399 = pneg %p272
      %p400 = pneg %p301
      %p401 = pneg %p298
      %s402 = smul.u32 4, %s23
      %p403 = scmp.lt.s32.totalorder %s402, 7
      %s404 = scalar_select %p403, %s402, 7
      %s405 = smul.addr %s404, 2
      %s406 = smul.addr %s405, 8
      %s407 = scalar_lea.vmem %s12, %s406
      %s408 = smul.u32 4, %s23
      %p409 = scmp.lt.s32.totalorder %s408, 7
      %s410 = scalar_select %p409, %s408, 7
      %s411 = smul.addr %s410, 2
      %s412 = smul.addr %s411, 8
      %s413 = scalar_lea.vmem %s0, %s412
      %s414 = smul.u32 4, %s23
      %s415 = smul.u32 4, %s23
      %p416 = scmp.lt.s32.totalorder %s415, 7
      %s417 = scalar_select %p416, %s415, 7
      %s418 = smul.addr %s417, 2
      %s419 = smul.addr %s418, 8
      %s420 = scalar_lea.vmem %s12, %s419
      %s421 = smul.u32 4, %s23
      %v422 = vld [vmem:[%s413] sm:$0xff]
      %v423 = vld [vmem:[%s413 + $0x8] sm:$0xff]
      %v424 = vld [vmem:[%s413 + $0x10] sm:$0xff]
      %v425 = vld [vmem:[%s413 + $0x18] sm:$0xff]
      %v426 = vld [vmem:[%s413 + $0x20] sm:$0xff]
      %v427 = vld [vmem:[%s413 + $0x28] sm:$0xff]
      %v428 = vld [vmem:[%s413 + $0x30] sm:$0xff]
      %v429 = vld [vmem:[%s413 + $0x38] sm:$0xff]
      %v430 = vld [vmem:[%s1] sm:$0xff]
      %v431 = vld [vmem:[%s1 + $0x8] sm:$0xff]
      %v432 = vld [vmem:[%s1 + $0x10] sm:$0xff]
      %v433 = vld [vmem:[%s1 + $0x18] sm:$0xff]
      %v434 = vld [vmem:[%s1 + $0x20] sm:$0xff]
      %v435 = vld [vmem:[%s1 + $0x28] sm:$0xff]
      %v436 = vld [vmem:[%s1 + $0x30] sm:$0xff]
      %v437 = vld [vmem:[%s1 + $0x38] sm:$0xff]
      %v438 = vld [vmem:[%s1 + $0x40] sm:$0xff]
      %v439 = vld [vmem:[%s1 + $0x48] sm:$0xff]
      %v440 = vld [vmem:[%s1 + $0x50] sm:$0xff]
      %v441 = vld [vmem:[%s1 + $0x58] sm:$0xff]
      %v442 = vld [vmem:[%s1 + $0x60] sm:$0xff]
      %v443 = vld [vmem:[%s1 + $0x68] sm:$0xff]
      %v444 = vld [vmem:[%s1 + $0x70] sm:$0xff]
      %v445 = vld [vmem:[%s1 + $0x78] sm:$0xff]
      %v446 = vld [vmem:[%s1 + $0x80] sm:$0xff]
      %v447 = vld [vmem:[%s1 + $0x88] sm:$0xff]
      %v448 = vld [vmem:[%s1 + $0x90] sm:$0xff]
      %v449 = vld [vmem:[%s1 + $0x98] sm:$0xff]
      %v450 = vld [vmem:[%s1 + $0xa0] sm:$0xff]
      %v451 = vld [vmem:[%s1 + $0xa8] sm:$0xff]
      %v452 = vld [vmem:[%s1 + $0xb0] sm:$0xff]
      %v453 = vld [vmem:[%s1 + $0xb8] sm:$0xff]
      %v454 = vld [vmem:[%s1 + $0xc0] sm:$0xff]
      %v455 = vld [vmem:[%s1 + $0xc8] sm:$0xff]
      %v456 = vld [vmem:[%s1 + $0xd0] sm:$0xff]
      %v457 = vld [vmem:[%s1 + $0xd8] sm:$0xff]
      %v458 = vld [vmem:[%s1 + $0xe0] sm:$0xff]
      %v459 = vld [vmem:[%s1 + $0xe8] sm:$0xff]
      %v460 = vld [vmem:[%s1 + $0xf0] sm:$0xff]
      %v461 = vld [vmem:[%s1 + $0xf8] sm:$0xff]
      %462 = vmatprep.subr.mxu0 0.0
      %463 = vmatpush1.msra.mxu0 %v430
      %464 = vmatprep.subr.mxu0 0.0
      %465 = vmatpush1.msra.mxu0 %v431
      %466 = vmatprep.subr.mxu0 0.0
      %467 = vmatpush1.msra.mxu0 %v432
      %468 = vmatprep.subr.mxu0 0.0
      %469 = vmatpush1.msra.mxu0 %v433
      %470 = vmatprep.subr.mxu0 0.0
      %471 = vmatpush1.msra.mxu0 %v434
      %472 = vmatprep.subr.mxu0 0.0
      %473 = vmatpush1.msra.mxu0 %v435
      %474 = vmatprep.subr.mxu0 0.0
      %475 = vmatpush1.msra.mxu0 %v436
      %476 = vmatprep.subr.mxu0 0.0
      %477 = vmatpush1.msra.mxu0 %v437
      %478 = vmatprep.subr.mxu0 0.0
      %479 = vmatpush1.msra.mxu0 %v438
      %480 = vmatprep.subr.mxu0 0.0
      %481 = vmatpush1.msra.mxu0 %v439
      %482 = vmatprep.subr.mxu0 0.0
      %483 = vmatpush1.msra.mxu0 %v440
      %484 = vmatprep.subr.mxu0 0.0
      %485 = vmatpush1.msra.mxu0 %v441
      %486 = vmatprep.subr.mxu0 0.0
      %487 = vmatpush1.msra.mxu0 %v442
      %488 = vmatprep.subr.mxu0 0.0
      %489 = vmatpush1.msra.mxu0 %v443
      %490 = vmatprep.subr.mxu0 0.0
      %491 = vmatpush1.msra.mxu0 %v444
      %492 = vmatprep.subr.mxu0 0.0
      %493 = vmatpush1.msra.mxu0 %v445
      %494 = vmatprep.subr.mxu0 0.0
      %495 = vmatpush1.msra.mxu0 %v446
      %496 = vmatprep.subr.mxu0 0.0
      %497 = vmatpush1.msra.mxu0 %v447
      %498 = vmatprep.subr.mxu0 0.0
      %499 = vmatpush1.msra.mxu0 %v448
      %500 = vmatprep.subr.mxu0 0.0
      %501 = vmatpush1.msra.mxu0 %v449
      %502 = vmatprep.subr.mxu0 0.0
      %503 = vmatpush1.msra.mxu0 %v450
      %504 = vmatprep.subr.mxu0 0.0
      %505 = vmatpush1.msra.mxu0 %v451
      %506 = vmatprep.subr.mxu0 0.0
      %507 = vmatpush1.msra.mxu0 %v452
      %508 = vmatprep.subr.mxu0 0.0
      %509 = vmatpush1.msra.mxu0 %v453
      %510 = vmatprep.subr.mxu0 0.0
      %511 = vmatpush1.msra.mxu0 %v454
      %512 = vmatprep.subr.mxu0 0.0
      %513 = vmatpush1.msra.mxu0 %v455
      %514 = vmatprep.subr.mxu0 0.0
      %515 = vmatpush1.msra.mxu0 %v456
      %516 = vmatprep.subr.mxu0 0.0
      %517 = vmatpush1.msra.mxu0 %v457
      %518 = vmatprep.subr.mxu0 0.0
      %519 = vmatpush1.msra.mxu0 %v458
      %520 = vmatprep.subr.mxu0 0.0
      %521 = vmatpush1.msra.mxu0 %v459
      %522 = vmatprep.subr.mxu0 0.0
      %523 = vmatpush1.msra.mxu0 %v460
      %524 = vmatprep.subr.mxu0 0.0
      %525 = vmatpush1.msra.mxu0 %v461
      %526 = vmatprep.mubr.f32.mxu0 %v423
      %527 = vmatmul.mubr.f32.gmra.mrb[0].mxu0 %v422
      %v528 = vpop.f32.mrb[0].mxu0
      %v529 = vadd.f32 0.0, %v528
      %v530 = vpop.f32.mrb[0].mxu0
      %531 = vmatprep.mubr.f32.mxu0 %v425
      %532 = vmatmul.mubr.f32.gmra.mrb[0].mxu0 %v424
      %v533 = vpop.f32.mrb[0].mxu0
      %v534 = vadd.f32 0.0, %v533
      %v535 = vpop.f32.mrb[0].mxu0
      %536 = vmatprep.mubr.f32.mxu0 %v427
      %537 = vmatmul.mubr.f32.gmra.mrb[0].mxu0 %v426
      %v538 = vpop.f32.mrb[0].mxu0
      %v539 = vadd.f32 0.0, %v538
      %v540 = vpop.f32.mrb[0].mxu0
      %541 = vmatprep.mubr.f32.mxu0 %v429
      %542 = vmatmul.mubr.f32.gmra.mrb[0].mxu0 %v428
      %v543 = vpop.f32.mrb[0].mxu0
      %v544 = vadd.f32 0.0, %v543
      %v545 = vpop.f32.mrb[0].mxu0
      %546 = vdwg.mxu0
      %v547 = vld [vmem:[%s5] sm:$0xff]
      %v548 = vld [vmem:[%s5 + $0x8] sm:$0xff]
      %v549 = vld [vmem:[%s5 + $0x10] sm:$0xff]
      %v550 = vld [vmem:[%s5 + $0x18] sm:$0xff]
      %v551 = vld [vmem:[%s6] sm:$0xff]
      %v552 = vld [vmem:[%s6 + $0x8] sm:$0xff]
      %v553 = vld [vmem:[%s6 + $0x10] sm:$0xff]
      %v554 = vld [vmem:[%s6 + $0x18] sm:$0xff]
      %556 = vset.pattern.permute.xlu0 0
      %557 = vperm.xlu0 %556, %v551
      %v558 = vpop.permute.xlu0 %557
      %561 = vset.pattern.permute.xlu0 0
      %562 = vperm.xlu0 %561, %v552
      %v563 = vpop.permute.xlu0 %562
      %566 = vset.pattern.permute.xlu0 0
      %567 = vperm.xlu0 %566, %v553
      %v568 = vpop.permute.xlu0 %567
      %571 = vset.pattern.permute.xlu0 0
      %572 = vperm.xlu0 %571, %v554
      %v573 = vpop.permute.xlu0 %572
      %vm575 = vcmask 261120
      %v577 = vsel %vm575, %v547, 0
      %v580 = vsel %vm575, %v548, 0
      %v583 = vsel %vm575, %v549, 0
      %v586 = vsel %vm575, %v550, 0
      %588 = vmatprep.subr.mxu0 0.0
      %589 = vmatpush1.msra.mxu0 %v529
      %590 = vmatprep.subr.mxu0 0.0
      %591 = vmatpush1.msra.mxu0 %v534
      %592 = vmatprep.subr.mxu0 0.0
      %593 = vmatpush1.msra.mxu0 %v539
      %594 = vmatprep.subr.mxu0 0.0
      %595 = vmatpush1.msra.mxu0 %v544
      %596 = vmatprep.subr.mxu0 0.0
      %597 = vmatpush1.msra.mxu0 0.0
      %598 = vmatprep.subr.mxu0 0.0
      %599 = vmatpush1.msra.mxu0 0.0
      %600 = vmatprep.subr.mxu0 0.0
      %601 = vmatpush1.msra.mxu0 0.0
      %602 = vmatprep.subr.mxu0 0.0
      %603 = vmatpush1.msra.mxu0 0.0
      %604 = vmatprep.subr.mxu0 0.0
      %605 = vmatpush1.msra.mxu0 0.0
      %606 = vmatprep.subr.mxu0 0.0
      %607 = vmatpush1.msra.mxu0 0.0
      %608 = vmatprep.subr.mxu0 0.0
      %609 = vmatpush1.msra.mxu0 0.0
      %610 = vmatprep.subr.mxu0 0.0
      %611 = vmatpush1.msra.mxu0 0.0
      %612 = vmatprep.subr.mxu0 0.0
      %613 = vmatpush1.msra.mxu0 0.0
      %614 = vmatprep.subr.mxu0 0.0
      %615 = vmatpush1.msra.mxu0 0.0
      %616 = vmatprep.subr.mxu0 0.0
      %617 = vmatpush1.msra.mxu0 0.0
      %618 = vmatprep.subr.mxu0 0.0
      %619 = vmatpush1.msra.mxu0 0.0
      %620 = vmatprep.subr.mxu0 0.0
      %621 = vmatpush1.msra.mxu0 0.0
      %622 = vmatprep.subr.mxu0 0.0
      %623 = vmatpush1.msra.mxu0 0.0
      %624 = vmatprep.subr.mxu0 0.0
      %625 = vmatpush1.msra.mxu0 0.0
      %626 = vmatprep.subr.mxu0 0.0
      %627 = vmatpush1.msra.mxu0 0.0
      %628 = vmatprep.subr.mxu0 0.0
      %629 = vmatpush1.msra.mxu0 0.0
      %630 = vmatprep.subr.mxu0 0.0
      %631 = vmatpush1.msra.mxu0 0.0
      %632 = vmatprep.subr.mxu0 0.0
      %633 = vmatpush1.msra.mxu0 0.0
      %634 = vmatprep.subr.mxu0 0.0
      %635 = vmatpush1.msra.mxu0 0.0
      %636 = vmatprep.subr.mxu0 0.0
      %637 = vmatpush1.msra.mxu0 0.0
      %638 = vmatprep.subr.mxu0 0.0
      %639 = vmatpush1.msra.mxu0 0.0
      %640 = vmatprep.subr.mxu0 0.0
      %641 = vmatpush1.msra.mxu0 0.0
      %642 = vmatprep.subr.mxu0 0.0
      %643 = vmatpush1.msra.mxu0 0.0
      %644 = vmatprep.subr.mxu0 0.0
      %645 = vmatpush1.msra.mxu0 0.0
      %646 = vmatprep.subr.mxu0 0.0
      %647 = vmatpush1.msra.mxu0 0.0
      %648 = vmatprep.subr.mxu0 0.0
      %649 = vmatpush1.msra.mxu0 0.0
      %650 = vmatprep.subr.mxu0 0.0
      %651 = vmatpush1.msra.mxu0 0.0
      %652 = vmatprep.mubr.f32.mxu0 0.0
      %653 = vmatmul.mubr.f32.gmra.mrb[0].mxu0 %v577
      %v654 = vpop.f32.mrb[0].mxu0
      %v655 = vadd.f32 %v558, %v654
      %v656 = vpop.f32.mrb[0].mxu0
      %657 = vmatprep.mubr.f32.mxu0 0.0
      %658 = vmatmul.mubr.f32.gmra.mrb[0].mxu0 %v580
      %v659 = vpop.f32.mrb[0].mxu0
      %v660 = vadd.f32 %v563, %v659
      %v661 = vpop.f32.mrb[0].mxu0
      %662 = vmatprep.mubr.f32.mxu0 0.0
      %663 = vmatmul.mubr.f32.gmra.mrb[0].mxu0 %v583
      %v664 = vpop.f32.mrb[0].mxu0
      %v665 = vadd.f32 %v568, %v664
      %v666 = vpop.f32.mrb[0].mxu0
      %667 = vmatprep.mubr.f32.mxu0 0.0
      %668 = vmatmul.mubr.f32.gmra.mrb[0].mxu0 %v586
      %v669 = vpop.f32.mrb[0].mxu0
      %v670 = vadd.f32 %v573, %v669
      %v671 = vpop.f32.mrb[0].mxu0
      %672 = vdwg.mxu0
      %v673 = vsub.f32 0.0, %v655
      %v674 = vsub.f32 0.0, %v660
      %v675 = vsub.f32 0.0, %v665
      %v676 = vsub.f32 0.0, %v670
      %v677 = vmul.f32 %v673, 1.442695
      %v678 = vpow.pop %v677
      %v679 = vmul.f32 %v674, 1.442695
      %v680 = vpow.pop %v679
      %v681 = vmul.f32 %v675, 1.442695
      %v682 = vpow.pop %v681
      %v683 = vmul.f32 %v676, 1.442695
      %v684 = vpow.pop %v683
      %v685 = vadd.f32 %v678, 1.0
      %v686 = vadd.f32 %v680, 1.0
      %v687 = vadd.f32 %v682, 1.0
      %v688 = vadd.f32 %v684, 1.0
      %v689 = vrcp.pop %v685
      %v690 = vmul.f32 1.0, %v689
      %v691 = vrcp.pop %v686
      %v692 = vmul.f32 1.0, %v691
      %v693 = vrcp.pop %v687
      %v694 = vmul.f32 1.0, %v693
      %v695 = vrcp.pop %v688
      %v696 = vmul.f32 1.0, %v695
      %v697 = vld [vmem:[%s2] sm:$0xff]
      %v698 = vld [vmem:[%s2 + $0x8] sm:$0xff]
      %v699 = vld [vmem:[%s2 + $0x10] sm:$0xff]
      %v700 = vld [vmem:[%s2 + $0x18] sm:$0xff]
      %vm701 = vcmask 130048
      %v703 = vsel %vm701, %v690, 0
      %v706 = vsel %vm701, %v692, 0
      %v709 = vsel %vm701, %v694, 0
      %v712 = vsel %vm701, %v696, 0
      %714 = vmatprep.subr.mxu0 %v698
      %715 = vmatpush1.msra.mxu0 %v697
      %716 = vmatprep.subr.mxu0 %v700
      %717 = vmatpush1.msra.mxu0 %v699
      %718 = vmatprep.subr.mxu0 0.0
      %719 = vmatpush1.msra.mxu0 0.0
      %720 = vmatprep.subr.mxu0 0.0
      %721 = vmatpush1.msra.mxu0 0.0
      %722 = vmatprep.subr.mxu0 0.0
      %723 = vmatpush1.msra.mxu0 0.0
      %724 = vmatprep.subr.mxu0 0.0
      %725 = vmatpush1.msra.mxu0 0.0
      %726 = vmatprep.subr.mxu0 0.0
      %727 = vmatpush1.msra.mxu0 0.0
      %728 = vmatprep.subr.mxu0 0.0
      %729 = vmatpush1.msra.mxu0 0.0
      %730 = vmatprep.subr.mxu0 0.0
      %731 = vmatpush1.msra.mxu0 0.0
      %732 = vmatprep.subr.mxu0 0.0
      %733 = vmatpush1.msra.mxu0 0.0
      %734 = vmatprep.subr.mxu0 0.0
      %735 = vmatpush1.msra.mxu0 0.0
      %736 = vmatprep.subr.mxu0 0.0
      %737 = vmatpush1.msra.mxu0 0.0
      %738 = vmatprep.subr.mxu0 0.0
      %739 = vmatpush1.msra.mxu0 0.0
      %740 = vmatprep.subr.mxu0 0.0
      %741 = vmatpush1.msra.mxu0 0.0
      %742 = vmatprep.subr.mxu0 0.0
      %743 = vmatpush1.msra.mxu0 0.0
      %744 = vmatprep.subr.mxu0 0.0
      %745 = vmatpush1.msra.mxu0 0.0
      %746 = vmatprep.subr.mxu0 0.0
      %747 = vmatpush1.msra.mxu0 0.0
      %748 = vmatprep.subr.mxu0 0.0
      %749 = vmatpush1.msra.mxu0 0.0
      %750 = vmatprep.subr.mxu0 0.0
      %751 = vmatpush1.msra.mxu0 0.0
      %752 = vmatprep.subr.mxu0 0.0
      %753 = vmatpush1.msra.mxu0 0.0
      %754 = vmatprep.subr.mxu0 0.0
      %755 = vmatpush1.msra.mxu0 0.0
      %756 = vmatprep.subr.mxu0 0.0
      %757 = vmatpush1.msra.mxu0 0.0
      %758 = vmatprep.subr.mxu0 0.0
      %759 = vmatpush1.msra.mxu0 0.0
      %760 = vmatprep.subr.mxu0 0.0
      %761 = vmatpush1.msra.mxu0 0.0
      %762 = vmatprep.subr.mxu0 0.0
      %763 = vmatpush1.msra.mxu0 0.0
      %764 = vmatprep.subr.mxu0 0.0
      %765 = vmatpush1.msra.mxu0 0.0
      %766 = vmatprep.subr.mxu0 0.0
      %767 = vmatpush1.msra.mxu0 0.0
      %768 = vmatprep.subr.mxu0 0.0
      %769 = vmatpush1.msra.mxu0 0.0
      %770 = vmatprep.subr.mxu0 0.0
      %771 = vmatpush1.msra.mxu0 0.0
      %772 = vmatprep.subr.mxu0 0.0
      %773 = vmatpush1.msra.mxu0 0.0
      %774 = vmatprep.subr.mxu0 0.0
      %775 = vmatpush1.msra.mxu0 0.0
      %776 = vmatprep.subr.mxu0 0.0
      %777 = vmatpush1.msra.mxu0 0.0
      %778 = vmatprep.mubr.f32.mxu0 0.0
      %779 = vmatmul.mubr.f32.gmra.mrb[0].mxu0 %v703
      %v780 = vpop.f32.mrb[0].mxu0
      %v781 = vadd.f32 0.0, %v780
      %v782 = vpop.f32.mrb[0].mxu0
      %v783 = vadd.f32 0.0, %v782
      %784 = vmatprep.mubr.f32.mxu0 0.0
      %785 = vmatmul.mubr.f32.gmra.mrb[0].mxu0 %v706
      %v786 = vpop.f32.mrb[0].mxu0
      %v787 = vadd.f32 0.0, %v786
      %v788 = vpop.f32.mrb[0].mxu0
      %v789 = vadd.f32 0.0, %v788
      %790 = vmatprep.mubr.f32.mxu0 0.0
      %791 = vmatmul.mubr.f32.gmra.mrb[0].mxu0 %v709
      %v792 = vpop.f32.mrb[0].mxu0
      %v793 = vadd.f32 0.0, %v792
      %v794 = vpop.f32.mrb[0].mxu0
      %v795 = vadd.f32 0.0, %v794
      %796 = vmatprep.mubr.f32.mxu0 0.0
      %797 = vmatmul.mubr.f32.gmra.mrb[0].mxu0 %v712
      %v798 = vpop.f32.mrb[0].mxu0
      %v799 = vadd.f32 0.0, %v798
      %v800 = vpop.f32.mrb[0].mxu0
      %v801 = vadd.f32 0.0, %v800
      %802 = vdwg.mxu0
      %v803 = vld [vmem:[%s3] sm:$0xff]
      %v804 = vld [vmem:[%s3 + $0x8] sm:$0xff]
      %v805 = vld [vmem:[%s3 + $0x10] sm:$0xff]
      %v806 = vld [vmem:[%s3 + $0x18] sm:$0xff]
      %807 = vrot.lane.b32.xlu0 %v690, 112
      %v808 = vpop.permute.xlu0 %807
      %809 = vrot.lane.b32.xlu0 %v692, 112
      %v810 = vpop.permute.xlu0 %809
      %811 = vrot.lane.b32.xlu0 %v694, 112
      %v812 = vpop.permute.xlu0 %811
      %813 = vrot.lane.b32.xlu0 %v696, 112
      %v814 = vpop.permute.xlu0 %813
      %v815 = vsel %vm701, %v808, 0
      %v817 = vsel %vm701, %v810, 0
      %v819 = vsel %vm701, %v812, 0
      %v821 = vsel %vm701, %v814, 0
      %823 = vmatprep.subr.mxu0 %v804
      %824 = vmatpush1.msra.mxu0 %v803
      %825 = vmatprep.subr.mxu0 %v806
      %826 = vmatpush1.msra.mxu0 %v805
      %827 = vmatprep.subr.mxu0 0.0
      %828 = vmatpush1.msra.mxu0 0.0
      %829 = vmatprep.subr.mxu0 0.0
      %830 = vmatpush1.msra.mxu0 0.0
      %831 = vmatprep.subr.mxu0 0.0
      %832 = vmatpush1.msra.mxu0 0.0
      %833 = vmatprep.subr.mxu0 0.0
      %834 = vmatpush1.msra.mxu0 0.0
      %835 = vmatprep.subr.mxu0 0.0
      %836 = vmatpush1.msra.mxu0 0.0
      %837 = vmatprep.subr.mxu0 0.0
      %838 = vmatpush1.msra.mxu0 0.0
      %839 = vmatprep.subr.mxu0 0.0
      %840 = vmatpush1.msra.mxu0 0.0
      %841 = vmatprep.subr.mxu0 0.0
      %842 = vmatpush1.msra.mxu0 0.0
      %843 = vmatprep.subr.mxu0 0.0
      %844 = vmatpush1.msra.mxu0 0.0
      %845 = vmatprep.subr.mxu0 0.0
      %846 = vmatpush1.msra.mxu0 0.0
      %847 = vmatprep.subr.mxu0 0.0
      %848 = vmatpush1.msra.mxu0 0.0
      %849 = vmatprep.subr.mxu0 0.0
      %850 = vmatpush1.msra.mxu0 0.0
      %851 = vmatprep.subr.mxu0 0.0
      %852 = vmatpush1.msra.mxu0 0.0
      %853 = vmatprep.subr.mxu0 0.0
      %854 = vmatpush1.msra.mxu0 0.0
      %855 = vmatprep.subr.mxu0 0.0
      %856 = vmatpush1.msra.mxu0 0.0
      %857 = vmatprep.subr.mxu0 0.0
      %858 = vmatpush1.msra.mxu0 0.0
      %859 = vmatprep.subr.mxu0 0.0
      %860 = vmatpush1.msra.mxu0 0.0
      %861 = vmatprep.subr.mxu0 0.0
      %862 = vmatpush1.msra.mxu0 0.0
      %863 = vmatprep.subr.mxu0 0.0
      %864 = vmatpush1.msra.mxu0 0.0
      %865 = vmatprep.subr.mxu0 0.0
      %866 = vmatpush1.msra.mxu0 0.0
      %867 = vmatprep.subr.mxu0 0.0
      %868 = vmatpush1.msra.mxu0 0.0
      %869 = vmatprep.subr.mxu0 0.0
      %870 = vmatpush1.msra.mxu0 0.0
      %871 = vmatprep.subr.mxu0 0.0
      %872 = vmatpush1.msra.mxu0 0.0
      %873 = vmatprep.subr.mxu0 0.0
      %874 = vmatpush1.msra.mxu0 0.0
      %875 = vmatprep.subr.mxu0 0.0
      %876 = vmatpush1.msra.mxu0 0.0
      %877 = vmatprep.subr.mxu0 0.0
      %878 = vmatpush1.msra.mxu0 0.0
      %879 = vmatprep.subr.mxu0 0.0
      %880 = vmatpush1.msra.mxu0 0.0
      %881 = vmatprep.subr.mxu0 0.0
      %882 = vmatpush1.msra.mxu0 0.0
      %883 = vmatprep.subr.mxu0 0.0
      %884 = vmatpush1.msra.mxu0 0.0
      %885 = vmatprep.subr.mxu0 0.0
      %886 = vmatpush1.msra.mxu0 0.0
      %887 = vmatprep.mubr.f32.mxu0 0.0
      %888 = vmatmul.mubr.f32.gmra.mrb[0].mxu0 %v815
      %v889 = vpop.f32.mrb[0].mxu0
      %v890 = vadd.f32 0.0, %v889
      %v891 = vpop.f32.mrb[0].mxu0
      %v892 = vadd.f32 0.0, %v891
      %893 = vmatprep.mubr.f32.mxu0 0.0
      %894 = vmatmul.mubr.f32.gmra.mrb[0].mxu0 %v817
      %v895 = vpop.f32.mrb[0].mxu0
      %v896 = vadd.f32 0.0, %v895
      %v897 = vpop.f32.mrb[0].mxu0
      %v898 = vadd.f32 0.0, %v897
      %899 = vmatprep.mubr.f32.mxu0 0.0
      %900 = vmatmul.mubr.f32.gmra.mrb[0].mxu0 %v819
      %v901 = vpop.f32.mrb[0].mxu0
      %v902 = vadd.f32 0.0, %v901
      %v903 = vpop.f32.mrb[0].mxu0
      %v904 = vadd.f32 0.0, %v903
      %905 = vmatprep.mubr.f32.mxu0 0.0
      %906 = vmatmul.mubr.f32.gmra.mrb[0].mxu0 %v821
      %v907 = vpop.f32.mrb[0].mxu0
      %v908 = vadd.f32 0.0, %v907
      %v909 = vpop.f32.mrb[0].mxu0
      %v910 = vadd.f32 0.0, %v909
      %911 = vdwg.mxu0
      %v912 = vmul.f32 %v422, %v781
      %v913 = vmul.f32 %v423, %v783
      %v914 = vmul.f32 %v424, %v787
      %v915 = vmul.f32 %v425, %v789
      %v916 = vmul.f32 %v426, %v793
      %v917 = vmul.f32 %v427, %v795
      %v918 = vmul.f32 %v428, %v799
      %v919 = vmul.f32 %v429, %v801
      %v920 = vmul.f32 %v912, %v890
      %v921 = vmul.f32 %v913, %v892
      %v922 = vmul.f32 %v914, %v896
      %v923 = vmul.f32 %v915, %v898
      %v924 = vmul.f32 %v916, %v902
      %v925 = vmul.f32 %v917, %v904
      %v926 = vmul.f32 %v918, %v908
      %v927 = vmul.f32 %v919, %v910
      %v928 = vadd.f32 %v920, %v921
      %929 = vadd.xlane.f32.xlu0 %v928
      %v930 = vpop.xlane.xlu0 %929
      %v931 = vadd.f32 %v922, %v923
      %932 = vadd.xlane.f32.xlu0 %v931
      %v933 = vpop.xlane.xlu0 %932
      %v934 = vadd.f32 %v924, %v925
      %935 = vadd.xlane.f32.xlu0 %v934
      %v936 = vpop.xlane.xlu0 %935
      %v937 = vadd.f32 %v926, %v927
      %938 = vadd.xlane.f32.xlu0 %v937
      %v939 = vpop.xlane.xlu0 %938
      %v940 = vrcp.pop 256.0
      %v941 = vmul.f32 %v930, %v940
      %v942 = vmul.f32 %v933, %v940
      %v943 = vmul.f32 %v936, %v940
      %v944 = vmul.f32 %v939, %v940
      %v945 = vsub.f32 %v920, %v941
      %v946 = vsub.f32 %v921, %v941
      %v947 = vsub.f32 %v922, %v942
      %v948 = vsub.f32 %v923, %v942
      %v949 = vsub.f32 %v924, %v943
      %v950 = vsub.f32 %v925, %v943
      %v951 = vsub.f32 %v926, %v944
      %v952 = vsub.f32 %v927, %v944
      %v953 = vmul.f32 %v945, %v945
      %v954 = vmul.f32 %v946, %v946
      %v955 = vmul.f32 %v947, %v947
      %v956 = vmul.f32 %v948, %v948
      %v957 = vmul.f32 %v949, %v949
      %v958 = vmul.f32 %v950, %v950
      %v959 = vmul.f32 %v951, %v951
      %v960 = vmul.f32 %v952, %v952
      %v961 = vadd.f32 %v953, %v954
      %962 = vadd.xlane.f32.xlu0 %v961
      %v963 = vpop.xlane.xlu0 %962
      %v964 = vadd.f32 %v955, %v956
      %965 = vadd.xlane.f32.xlu0 %v964
      %v966 = vpop.xlane.xlu0 %965
      %v967 = vadd.f32 %v957, %v958
      %968 = vadd.xlane.f32.xlu0 %v967
      %v969 = vpop.xlane.xlu0 %968
      %v970 = vadd.f32 %v959, %v960
      %971 = vadd.xlane.f32.xlu0 %v970
      %v972 = vpop.xlane.xlu0 %971
      %v973 = vmul.f32 %v963, %v940
      %v974 = vmul.f32 %v966, %v940
      %v975 = vmul.f32 %v969, %v940
      %v976 = vmul.f32 %v972, %v940
      %v977 = vadd.f32 %v973, 1e-05
      %v978 = vadd.f32 %v974, 1e-05
      %v979 = vadd.f32 %v975, 1e-05
      %v980 = vadd.f32 %v976, 1e-05
      %v981 = vrsqrt.pop %v977
      %v982 = vrsqrt.pop %v978
      %v983 = vrsqrt.pop %v979
      %v984 = vrsqrt.pop %v980
      %v985 = vmul.f32 %v945, %v981
      %v986 = vmul.f32 %v946, %v981
      %v987 = vmul.f32 %v947, %v982
      %v988 = vmul.f32 %v948, %v982
      %v989 = vmul.f32 %v949, %v983
      %v990 = vmul.f32 %v950, %v983
      %v991 = vmul.f32 %v951, %v984
      %v992 = vmul.f32 %v952, %v984
      %v993 = vld [vmem:[%s9] sm:$0xff]
      %v994 = vld [vmem:[%s9 + $0x8] sm:$0xff]
      %v995 = vld [vmem:[%s9 + $0x10] sm:$0xff]
      %v996 = vld [vmem:[%s9 + $0x18] sm:$0xff]
      %998 = vset.pattern.permute.xlu0 0
      %999 = vperm.xlu0 %998, %v993
      %v1000 = vpop.permute.xlu0 %999
      %1003 = vset.pattern.permute.xlu0 0
      %1004 = vperm.xlu0 %1003, %v994
      %v1005 = vpop.permute.xlu0 %1004
      %1008 = vset.pattern.permute.xlu0 0
      %1009 = vperm.xlu0 %1008, %v995
      %v1010 = vpop.permute.xlu0 %1009
      %1013 = vset.pattern.permute.xlu0 0
      %1014 = vperm.xlu0 %1013, %v996
      %v1015 = vpop.permute.xlu0 %1014
      %v1017 = vmul.f32 %v985, %v1000
      %v1018 = vmul.f32 %v986, %v1000
      %v1019 = vmul.f32 %v987, %v1005
      %v1020 = vmul.f32 %v988, %v1005
      %v1021 = vmul.f32 %v989, %v1010
      %v1022 = vmul.f32 %v990, %v1010
      %v1023 = vmul.f32 %v991, %v1015
      %v1024 = vmul.f32 %v992, %v1015
      %v1025 = vld [vmem:[%s10] sm:$0xff]
      %v1026 = vld [vmem:[%s10 + $0x8] sm:$0xff]
      %v1027 = vld [vmem:[%s10 + $0x10] sm:$0xff]
      %v1028 = vld [vmem:[%s10 + $0x18] sm:$0xff]
      %1030 = vset.pattern.permute.xlu0 0
      %1031 = vperm.xlu0 %1030, %v1025
      %v1032 = vpop.permute.xlu0 %1031
      %1035 = vset.pattern.permute.xlu0 0
      %1036 = vperm.xlu0 %1035, %v1026
      %v1037 = vpop.permute.xlu0 %1036
      %1040 = vset.pattern.permute.xlu0 0
      %1041 = vperm.xlu0 %1040, %v1027
      %v1042 = vpop.permute.xlu0 %1041
      %1045 = vset.pattern.permute.xlu0 0
      %1046 = vperm.xlu0 %1045, %v1028
      %v1047 = vpop.permute.xlu0 %1046
      %v1049 = vadd.f32 %v1017, %v1032
      %v1050 = vadd.f32 %v1018, %v1032
      %v1051 = vadd.f32 %v1019, %v1037
      %v1052 = vadd.f32 %v1020, %v1037
      %v1053 = vadd.f32 %v1021, %v1042
      %v1054 = vadd.f32 %v1022, %v1042
      %v1055 = vadd.f32 %v1023, %v1047
      %v1056 = vadd.f32 %v1024, %v1047
      %v1057 = vld [vmem:[%s11] ss:$2 sm:$0x3]
      %s1058 = scalar_lea.vmem %s11, 1
      %v1059 = vld [vmem:[%s1058] ss:$2 sm:$0x3]
      %1068 = vrot.lane.b32.xlu0 %v422, 17
      %v1069 = vpop.permute.xlu0 %1068
      %1070 = vrot.lane.b32.xlu0 %v423, 17
      %v1071 = vpop.permute.xlu0 %1070
      %1072 = vrot.lane.b32.xlu0 %v424, 17
      %v1073 = vpop.permute.xlu0 %1072
      %1074 = vrot.lane.b32.xlu0 %v425, 17
      %v1075 = vpop.permute.xlu0 %1074
      %1076 = vrot.lane.b32.xlu0 %v426, 17
      %v1077 = vpop.permute.xlu0 %1076
      %1078 = vrot.lane.b32.xlu0 %v427, 17
      %v1079 = vpop.permute.xlu0 %1078
      %1080 = vrot.lane.b32.xlu0 %v428, 17
      %v1081 = vpop.permute.xlu0 %1080
      %1082 = vrot.lane.b32.xlu0 %v429, 17
      %v1083 = vpop.permute.xlu0 %1082
      %vm1084 = vcmask 138240
      %v1085 = vsel %vm1084, %v1069, %v1071
      %v1086 = vsel %vm1084, %v1073, %v1075
      %v1087 = vsel %vm1084, %v1077, %v1079
      %v1088 = vsel %vm1084, %v1081, %v1083
      %v1097 = vsel %vm1084, 0.0, %v1069
      %v1098 = vsel %vm1084, 0.0, %v1073
      %v1099 = vsel %vm1084, 0.0, %v1077
      %v1100 = vsel %vm1084, 0.0, %v1081
      %v1102 = vlaneseq
      %v1103 = vshrl.u32 %v1102, 7
      %v1104 = vsub.s32 0, %v1103
      %v1105 = vrot.slane %v1057, %v1104
      %v1106 = vlaneseq
      %v1107 = vshrl.u32 %v1106, 7
      %v1108 = vsub.s32 1, %v1107
      %v1109 = vrot.slane %v1057, %v1108
      %v1112 = vmul.f32 %v1097, %v1105
      %v1113 = vmul.f32 %v1085, %v1109
      %v1114 = vmul.f32 %v1098, %v1105
      %v1115 = vmul.f32 %v1086, %v1109
      %v1116 = vmul.f32 %v1099, %v1105
      %v1117 = vmul.f32 %v1087, %v1109
      %v1118 = vmul.f32 %v1100, %v1105
      %v1119 = vmul.f32 %v1088, %v1109
      %v1120 = vld [vmem:[%s7] sm:$0xff]
      %v1121 = vld [vmem:[%s7 + $0x8] sm:$0xff]
      %v1122 = vld [vmem:[%s7 + $0x10] sm:$0xff]
      %v1123 = vld [vmem:[%s7 + $0x18] sm:$0xff]
      %1124 = vrot.lane.b32.xlu0 %v422, 16
      %v1125 = vpop.permute.xlu0 %1124
      %1126 = vrot.lane.b32.xlu0 %v423, 16
      %v1127 = vpop.permute.xlu0 %1126
      %1128 = vrot.lane.b32.xlu0 %v424, 16
      %v1129 = vpop.permute.xlu0 %1128
      %1130 = vrot.lane.b32.xlu0 %v425, 16
      %v1131 = vpop.permute.xlu0 %1130
      %1132 = vrot.lane.b32.xlu0 %v426, 16
      %v1133 = vpop.permute.xlu0 %1132
      %1134 = vrot.lane.b32.xlu0 %v427, 16
      %v1135 = vpop.permute.xlu0 %1134
      %1136 = vrot.lane.b32.xlu0 %v428, 16
      %v1137 = vpop.permute.xlu0 %1136
      %1138 = vrot.lane.b32.xlu0 %v429, 16
      %v1139 = vpop.permute.xlu0 %1138
      %v1140 = vsel %vm701, %v1125, %v1127
      %v1141 = vsel %vm701, %v1129, %v1131
      %v1142 = vsel %vm701, %v1133, %v1135
      %v1143 = vsel %vm701, %v1137, %v1139
      %v1152 = vsel %vm701, 0.0, %v1125
      %v1153 = vsel %vm701, 0.0, %v1129
      %v1154 = vsel %vm701, 0.0, %v1133
      %v1155 = vsel %vm701, 0.0, %v1137
      %s1156 = scalar_lea.vmem %s7, 32
      %v1157 = vld [vmem:[%s1156] sm:$0xff]
      %v1158 = vld [vmem:[%s1156 + $0x8] sm:$0xff]
      %v1159 = vld [vmem:[%s1156 + $0x10] sm:$0xff]
      %v1160 = vld [vmem:[%s1156 + $0x18] sm:$0xff]
      %v1162 = vsel %vm575, %v1157, 0
      %v1165 = vsel %vm575, %v1158, 0
      %v1168 = vsel %vm575, %v1159, 0
      %v1171 = vsel %vm575, %v1160, 0
      %1173 = vmatprep.subr.mxu0 %v1140
      %1174 = vmatpush1.msra.mxu0 %v1152
      %1175 = vmatprep.subr.mxu0 %v1141
      %1176 = vmatpush1.msra.mxu0 %v1153
      %1177 = vmatprep.subr.mxu0 %v1142
      %1178 = vmatpush1.msra.mxu0 %v1154
      %1179 = vmatprep.subr.mxu0 %v1143
      %1180 = vmatpush1.msra.mxu0 %v1155
      %1181 = vmatprep.subr.mxu0 0.0
      %1182 = vmatpush1.msra.mxu0 0.0
      %1183 = vmatprep.subr.mxu0 0.0
      %1184 = vmatpush1.msra.mxu0 0.0
      %1185 = vmatprep.subr.mxu0 0.0
      %1186 = vmatpush1.msra.mxu0 0.0
      %1187 = vmatprep.subr.mxu0 0.0
      %1188 = vmatpush1.msra.mxu0 0.0
      %1189 = vmatprep.subr.mxu0 0.0
      %1190 = vmatpush1.msra.mxu0 0.0
      %1191 = vmatprep.subr.mxu0 0.0
      %1192 = vmatpush1.msra.mxu0 0.0
      %1193 = vmatprep.subr.mxu0 0.0
      %1194 = vmatpush1.msra.mxu0 0.0
      %1195 = vmatprep.subr.mxu0 0.0
      %1196 = vmatpush1.msra.mxu0 0.0
      %1197 = vmatprep.subr.mxu0 0.0
      %1198 = vmatpush1.msra.mxu0 0.0
      %1199 = vmatprep.subr.mxu0 0.0
      %1200 = vmatpush1.msra.mxu0 0.0
      %1201 = vmatprep.subr.mxu0 0.0
      %1202 = vmatpush1.msra.mxu0 0.0
      %1203 = vmatprep.subr.mxu0 0.0
      %1204 = vmatpush1.msra.mxu0 0.0
      %1205 = vmatprep.subr.mxu0 0.0
      %1206 = vmatpush1.msra.mxu0 0.0
      %1207 = vmatprep.subr.mxu0 0.0
      %1208 = vmatpush1.msra.mxu0 0.0
      %1209 = vmatprep.subr.mxu0 0.0
      %1210 = vmatpush1.msra.mxu0 0.0
      %1211 = vmatprep.subr.mxu0 0.0
      %1212 = vmatpush1.msra.mxu0 0.0
      %1213 = vmatprep.subr.mxu0 0.0
      %1214 = vmatpush1.msra.mxu0 0.0
      %1215 = vmatprep.subr.mxu0 0.0
      %1216 = vmatpush1.msra.mxu0 0.0
      %1217 = vmatprep.subr.mxu0 0.0
      %1218 = vmatpush1.msra.mxu0 0.0
      %1219 = vmatprep.subr.mxu0 0.0
      %1220 = vmatpush1.msra.mxu0 0.0
      %1221 = vmatprep.subr.mxu0 0.0
      %1222 = vmatpush1.msra.mxu0 0.0
      %1223 = vmatprep.subr.mxu0 0.0
      %1224 = vmatpush1.msra.mxu0 0.0
      %1225 = vmatprep.subr.mxu0 0.0
      %1226 = vmatpush1.msra.mxu0 0.0
      %1227 = vmatprep.subr.mxu0 0.0
      %1228 = vmatpush1.msra.mxu0 0.0
      %1229 = vmatprep.subr.mxu0 0.0
      %1230 = vmatpush1.msra.mxu0 0.0
      %1231 = vmatprep.subr.mxu0 0.0
      %1232 = vmatpush1.msra.mxu0 0.0
      %1233 = vmatprep.subr.mxu0 0.0
      %1234 = vmatpush1.msra.mxu0 0.0
      %1235 = vmatprep.subr.mxu0 0.0
      %1236 = vmatpush1.msra.mxu0 0.0
      %1237 = vmatprep.mubr.f32.mxu0 0.0
      %1238 = vmatmul.mubr.f32.gmra.mrb[0].mxu0 %v1162
      %v1239 = vpop.f32.mrb[0].mxu0
      %v1240 = vadd.f32 0.0, %v1239
      %v1241 = vpop.f32.mrb[0].mxu0
      %v1242 = vadd.f32 0.0, %v1241
      %1243 = vmatprep.mubr.f32.mxu0 0.0
      %1244 = vmatmul.mubr.f32.gmra.mrb[0].mxu0 %v1165
      %v1245 = vpop.f32.mrb[0].mxu0
      %v1246 = vadd.f32 0.0, %v1245
      %v1247 = vpop.f32.mrb[0].mxu0
      %v1248 = vadd.f32 0.0, %v1247
      %1249 = vmatprep.mubr.f32.mxu0 0.0
      %1250 = vmatmul.mubr.f32.gmra.mrb[0].mxu0 %v1168
      %v1251 = vpop.f32.mrb[0].mxu0
      %v1252 = vadd.f32 0.0, %v1251
      %v1253 = vpop.f32.mrb[0].mxu0
      %v1254 = vadd.f32 0.0, %v1253
      %1255 = vmatprep.mubr.f32.mxu0 0.0
      %1256 = vmatmul.mubr.f32.gmra.mrb[0].mxu0 %v1171
      %v1257 = vpop.f32.mrb[0].mxu0
      %v1258 = vadd.f32 0.0, %v1257
      %v1259 = vpop.f32.mrb[0].mxu0
      %v1260 = vadd.f32 0.0, %v1259
      %1261 = vdwg.mxu0
      %v1263 = vsel %vm575, %v1120, 0
      %v1266 = vsel %vm575, %v1121, 0
      %v1269 = vsel %vm575, %v1122, 0
      %v1272 = vsel %vm575, %v1123, 0
      %1274 = vmatprep.subr.mxu0 %v1113
      %1275 = vmatpush1.msra.mxu0 %v1112
      %1276 = vmatprep.subr.mxu0 %v1115
      %1277 = vmatpush1.msra.mxu0 %v1114
      %1278 = vmatprep.subr.mxu0 %v1117
      %1279 = vmatpush1.msra.mxu0 %v1116
      %1280 = vmatprep.subr.mxu0 %v1119
      %1281 = vmatpush1.msra.mxu0 %v1118
      %1282 = vmatprep.subr.mxu0 0.0
      %1283 = vmatpush1.msra.mxu0 0.0
      %1284 = vmatprep.subr.mxu0 0.0
      %1285 = vmatpush1.msra.mxu0 0.0
      %1286 = vmatprep.subr.mxu0 0.0
      %1287 = vmatpush1.msra.mxu0 0.0
      %1288 = vmatprep.subr.mxu0 0.0
      %1289 = vmatpush1.msra.mxu0 0.0
      %1290 = vmatprep.subr.mxu0 0.0
      %1291 = vmatpush1.msra.mxu0 0.0
      %1292 = vmatprep.subr.mxu0 0.0
      %1293 = vmatpush1.msra.mxu0 0.0
      %1294 = vmatprep.subr.mxu0 0.0
      %1295 = vmatpush1.msra.mxu0 0.0
      %1296 = vmatprep.subr.mxu0 0.0
      %1297 = vmatpush1.msra.mxu0 0.0
      %1298 = vmatprep.subr.mxu0 0.0
      %1299 = vmatpush1.msra.mxu0 0.0
      %1300 = vmatprep.subr.mxu0 0.0
      %1301 = vmatpush1.msra.mxu0 0.0
      %1302 = vmatprep.subr.mxu0 0.0
      %1303 = vmatpush1.msra.mxu0 0.0
      %1304 = vmatprep.subr.mxu0 0.0
      %1305 = vmatpush1.msra.mxu0 0.0
      %1306 = vmatprep.subr.mxu0 0.0
      %1307 = vmatpush1.msra.mxu0 0.0
      %1308 = vmatprep.subr.mxu0 0.0
      %1309 = vmatpush1.msra.mxu0 0.0
      %1310 = vmatprep.subr.mxu0 0.0
      %1311 = vmatpush1.msra.mxu0 0.0
      %1312 = vmatprep.subr.mxu0 0.0
      %1313 = vmatpush1.msra.mxu0 0.0
      %1314 = vmatprep.subr.mxu0 0.0
      %1315 = vmatpush1.msra.mxu0 0.0
      %1316 = vmatprep.subr.mxu0 0.0
      %1317 = vmatpush1.msra.mxu0 0.0
      %1318 = vmatprep.subr.mxu0 0.0
      %1319 = vmatpush1.msra.mxu0 0.0
      %1320 = vmatprep.subr.mxu0 0.0
      %1321 = vmatpush1.msra.mxu0 0.0
      %1322 = vmatprep.subr.mxu0 0.0
      %1323 = vmatpush1.msra.mxu0 0.0
      %1324 = vmatprep.subr.mxu0 0.0
      %1325 = vmatpush1.msra.mxu0 0.0
      %1326 = vmatprep.subr.mxu0 0.0
      %1327 = vmatpush1.msra.mxu0 0.0
      %1328 = vmatprep.subr.mxu0 0.0
      %1329 = vmatpush1.msra.mxu0 0.0
      %1330 = vmatprep.subr.mxu0 0.0
      %1331 = vmatpush1.msra.mxu0 0.0
      %1332 = vmatprep.subr.mxu0 0.0
      %1333 = vmatpush1.msra.mxu0 0.0
      %1334 = vmatprep.subr.mxu0 0.0
      %1335 = vmatpush1.msra.mxu0 0.0
      %1336 = vmatprep.subr.mxu0 0.0
      %1337 = vmatpush1.msra.mxu0 0.0
      %1338 = vmatprep.mubr.f32.mxu0 0.0
      %1339 = vmatmul.mubr.f32.gmra.mrb[0].mxu0 %v1263
      %v1340 = vpop.f32.mrb[0].mxu0
      %v1341 = vadd.f32 %v1240, %v1340
      %v1342 = vpop.f32.mrb[0].mxu0
      %v1343 = vadd.f32 %v1242, %v1342
      %1344 = vmatprep.mubr.f32.mxu0 0.0
      %1345 = vmatmul.mubr.f32.gmra.mrb[0].mxu0 %v1266
      %v1346 = vpop.f32.mrb[0].mxu0
      %v1347 = vadd.f32 %v1246, %v1346
      %v1348 = vpop.f32.mrb[0].mxu0
      %v1349 = vadd.f32 %v1248, %v1348
      %1350 = vmatprep.mubr.f32.mxu0 0.0
      %1351 = vmatmul.mubr.f32.gmra.mrb[0].mxu0 %v1269
      %v1352 = vpop.f32.mrb[0].mxu0
      %v1353 = vadd.f32 %v1252, %v1352
      %v1354 = vpop.f32.mrb[0].mxu0
      %v1355 = vadd.f32 %v1254, %v1354
      %1356 = vmatprep.mubr.f32.mxu0 0.0
      %1357 = vmatmul.mubr.f32.gmra.mrb[0].mxu0 %v1272
      %v1358 = vpop.f32.mrb[0].mxu0
      %v1359 = vadd.f32 %v1258, %v1358
      %v1360 = vpop.f32.mrb[0].mxu0
      %v1361 = vadd.f32 %v1260, %v1360
      %1362 = vdwg.mxu0
      %1363 = vrot.lane.b32.xlu0 %v422, 15
      %v1364 = vpop.permute.xlu0 %1363
      %1365 = vrot.lane.b32.xlu0 %v423, 15
      %v1366 = vpop.permute.xlu0 %1365
      %1367 = vrot.lane.b32.xlu0 %v424, 15
      %v1368 = vpop.permute.xlu0 %1367
      %1369 = vrot.lane.b32.xlu0 %v425, 15
      %v1370 = vpop.permute.xlu0 %1369
      %1371 = vrot.lane.b32.xlu0 %v426, 15
      %v1372 = vpop.permute.xlu0 %1371
      %1373 = vrot.lane.b32.xlu0 %v427, 15
      %v1374 = vpop.permute.xlu0 %1373
      %1375 = vrot.lane.b32.xlu0 %v428, 15
      %v1376 = vpop.permute.xlu0 %1375
      %1377 = vrot.lane.b32.xlu0 %v429, 15
      %v1378 = vpop.permute.xlu0 %1377
      %vm1379 = vcmask 121856
      %v1380 = vsel %vm1379, %v1364, %v1366
      %v1381 = vsel %vm1379, %v1368, %v1370
      %v1382 = vsel %vm1379, %v1372, %v1374
      %v1383 = vsel %vm1379, %v1376, %v1378
      %v1392 = vsel %vm1379, 0.0, %v1364
      %v1393 = vsel %vm1379, 0.0, %v1368
      %v1394 = vsel %vm1379, 0.0, %v1372
      %v1395 = vsel %vm1379, 0.0, %v1376
      %v1397 = vlaneseq
      %v1398 = vshrl.u32 %v1397, 7
      %v1399 = vsub.s32 0, %v1398
      %v1400 = vrot.slane %v1059, %v1399
      %v1401 = vlaneseq
      %v1402 = vshrl.u32 %v1401, 7
      %v1403 = vsub.s32 1, %v1402
      %v1404 = vrot.slane %v1059, %v1403
      %v1407 = vmul.f32 %v1392, %v1400
      %v1408 = vmul.f32 %v1380, %v1404
      %v1409 = vmul.f32 %v1393, %v1400
      %v1410 = vmul.f32 %v1381, %v1404
      %v1411 = vmul.f32 %v1394, %v1400
      %v1412 = vmul.f32 %v1382, %v1404
      %v1413 = vmul.f32 %v1395, %v1400
      %v1414 = vmul.f32 %v1383, %v1404
      %s1415 = scalar_lea.vmem %s7, 64
      %v1416 = vld [vmem:[%s1415] sm:$0xff]
      %v1417 = vld [vmem:[%s1415 + $0x8] sm:$0xff]
      %v1418 = vld [vmem:[%s1415 + $0x10] sm:$0xff]
      %v1419 = vld [vmem:[%s1415 + $0x18] sm:$0xff]
      %v1421 = vsel %vm575, %v1416, 0
      %v1424 = vsel %vm575, %v1417, 0
      %v1427 = vsel %vm575, %v1418, 0
      %v1430 = vsel %vm575, %v1419, 0
      %1432 = vmatprep.subr.mxu0 %v1408
      %1433 = vmatpush1.msra.mxu0 %v1407
      %1434 = vmatprep.subr.mxu0 %v1410
      %1435 = vmatpush1.msra.mxu0 %v1409
      %1436 = vmatprep.subr.mxu0 %v1412
      %1437 = vmatpush1.msra.mxu0 %v1411
      %1438 = vmatprep.subr.mxu0 %v1414
      %1439 = vmatpush1.msra.mxu0 %v1413
      %1440 = vmatprep.subr.mxu0 0.0
      %1441 = vmatpush1.msra.mxu0 0.0
      %1442 = vmatprep.subr.mxu0 0.0
      %1443 = vmatpush1.msra.mxu0 0.0
      %1444 = vmatprep.subr.mxu0 0.0
      %1445 = vmatpush1.msra.mxu0 0.0
      %1446 = vmatprep.subr.mxu0 0.0
      %1447 = vmatpush1.msra.mxu0 0.0
      %1448 = vmatprep.subr.mxu0 0.0
      %1449 = vmatpush1.msra.mxu0 0.0
      %1450 = vmatprep.subr.mxu0 0.0
      %1451 = vmatpush1.msra.mxu0 0.0
      %1452 = vmatprep.subr.mxu0 0.0
      %1453 = vmatpush1.msra.mxu0 0.0
      %1454 = vmatprep.subr.mxu0 0.0
      %1455 = vmatpush1.msra.mxu0 0.0
      %1456 = vmatprep.subr.mxu0 0.0
      %1457 = vmatpush1.msra.mxu0 0.0
      %1458 = vmatprep.subr.mxu0 0.0
      %1459 = vmatpush1.msra.mxu0 0.0
      %1460 = vmatprep.subr.mxu0 0.0
      %1461 = vmatpush1.msra.mxu0 0.0
      %1462 = vmatprep.subr.mxu0 0.0
      %1463 = vmatpush1.msra.mxu0 0.0
      %1464 = vmatprep.subr.mxu0 0.0
      %1465 = vmatpush1.msra.mxu0 0.0
      %1466 = vmatprep.subr.mxu0 0.0
      %1467 = vmatpush1.msra.mxu0 0.0
      %1468 = vmatprep.subr.mxu0 0.0
      %1469 = vmatpush1.msra.mxu0 0.0
      %1470 = vmatprep.subr.mxu0 0.0
      %1471 = vmatpush1.msra.mxu0 0.0
      %1472 = vmatprep.subr.mxu0 0.0
      %1473 = vmatpush1.msra.mxu0 0.0
      %1474 = vmatprep.subr.mxu0 0.0
      %1475 = vmatpush1.msra.mxu0 0.0
      %1476 = vmatprep.subr.mxu0 0.0
      %1477 = vmatpush1.msra.mxu0 0.0
      %1478 = vmatprep.subr.mxu0 0.0
      %1479 = vmatpush1.msra.mxu0 0.0
      %1480 = vmatprep.subr.mxu0 0.0
      %1481 = vmatpush1.msra.mxu0 0.0
      %1482 = vmatprep.subr.mxu0 0.0
      %1483 = vmatpush1.msra.mxu0 0.0
      %1484 = vmatprep.subr.mxu0 0.0
      %1485 = vmatpush1.msra.mxu0 0.0
      %1486 = vmatprep.subr.mxu0 0.0
      %1487 = vmatpush1.msra.mxu0 0.0
      %1488 = vmatprep.subr.mxu0 0.0
      %1489 = vmatpush1.msra.mxu0 0.0
      %1490 = vmatprep.subr.mxu0 0.0
      %1491 = vmatpush1.msra.mxu0 0.0
      %1492 = vmatprep.subr.mxu0 0.0
      %1493 = vmatpush1.msra.mxu0 0.0
      %1494 = vmatprep.subr.mxu0 0.0
      %1495 = vmatpush1.msra.mxu0 0.0
      %1496 = vmatprep.mubr.f32.mxu0 0.0
      %1497 = vmatmul.mubr.f32.gmra.mrb[0].mxu0 %v1421
      %v1498 = vpop.f32.mrb[0].mxu0
      %v1499 = vadd.f32 0.0, %v1498
      %v1500 = vpop.f32.mrb[0].mxu0
      %v1501 = vadd.f32 0.0, %v1500
      %1502 = vmatprep.mubr.f32.mxu0 0.0
      %1503 = vmatmul.mubr.f32.gmra.mrb[0].mxu0 %v1424
      %v1504 = vpop.f32.mrb[0].mxu0
      %v1505 = vadd.f32 0.0, %v1504
      %v1506 = vpop.f32.mrb[0].mxu0
      %v1507 = vadd.f32 0.0, %v1506
      %1508 = vmatprep.mubr.f32.mxu0 0.0
      %1509 = vmatmul.mubr.f32.gmra.mrb[0].mxu0 %v1427
      %v1510 = vpop.f32.mrb[0].mxu0
      %v1511 = vadd.f32 0.0, %v1510
      %v1512 = vpop.f32.mrb[0].mxu0
      %v1513 = vadd.f32 0.0, %v1512
      %1514 = vmatprep.mubr.f32.mxu0 0.0
      %1515 = vmatmul.mubr.f32.gmra.mrb[0].mxu0 %v1430
      %v1516 = vpop.f32.mrb[0].mxu0
      %v1517 = vadd.f32 0.0, %v1516
      %v1518 = vpop.f32.mrb[0].mxu0
      %v1519 = vadd.f32 0.0, %v1518
      %1520 = vdwg.mxu0
      %v1521 = vadd.f32 %v1341, %v1499
      %v1522 = vadd.f32 %v1343, %v1501
      %v1523 = vadd.f32 %v1347, %v1505
      %v1524 = vadd.f32 %v1349, %v1507
      %v1525 = vadd.f32 %v1353, %v1511
      %v1526 = vadd.f32 %v1355, %v1513
      %v1527 = vadd.f32 %v1359, %v1517
      %v1528 = vadd.f32 %v1361, %v1519
      %1529 = vrot.lane.b32.xlu0 %v422, 1
      %v1530 = vpop.permute.xlu0 %1529
      %1531 = vrot.lane.b32.xlu0 %v423, 1
      %v1532 = vpop.permute.xlu0 %1531
      %1533 = vrot.lane.b32.xlu0 %v424, 1
      %v1534 = vpop.permute.xlu0 %1533
      %1535 = vrot.lane.b32.xlu0 %v425, 1
      %v1536 = vpop.permute.xlu0 %1535
      %1537 = vrot.lane.b32.xlu0 %v426, 1
      %v1538 = vpop.permute.xlu0 %1537
      %1539 = vrot.lane.b32.xlu0 %v427, 1
      %v1540 = vpop.permute.xlu0 %1539
      %1541 = vrot.lane.b32.xlu0 %v428, 1
      %v1542 = vpop.permute.xlu0 %1541
      %1543 = vrot.lane.b32.xlu0 %v429, 1
      %v1544 = vpop.permute.xlu0 %1543
      %vm1545 = vcmask 7168
      %v1546 = vsel %vm1545, %v1530, %v1532
      %v1547 = vsel %vm1545, %v1534, %v1536
      %v1548 = vsel %vm1545, %v1538, %v1540
      %v1549 = vsel %vm1545, %v1542, %v1544
      %v1558 = vsel %vm1545, 0.0, %v1530
      %v1559 = vsel %vm1545, 0.0, %v1534
      %v1560 = vsel %vm1545, 0.0, %v1538
      %v1561 = vsel %vm1545, 0.0, %v1542
      %v1562 = vmul.f32 %v1558, %v1105
      %v1563 = vmul.f32 %v1546, %v1109
      %v1564 = vmul.f32 %v1559, %v1105
      %v1565 = vmul.f32 %v1547, %v1109
      %v1566 = vmul.f32 %v1560, %v1105
      %v1567 = vmul.f32 %v1548, %v1109
      %v1568 = vmul.f32 %v1561, %v1105
      %v1569 = vmul.f32 %v1549, %v1109
      %s1570 = scalar_lea.vmem %s7, 96
      %v1571 = vld [vmem:[%s1570] sm:$0xff]
      %v1572 = vld [vmem:[%s1570 + $0x8] sm:$0xff]
      %v1573 = vld [vmem:[%s1570 + $0x10] sm:$0xff]
      %v1574 = vld [vmem:[%s1570 + $0x18] sm:$0xff]
      %v1576 = vsel %vm575, %v1571, 0
      %v1579 = vsel %vm575, %v1572, 0
      %v1582 = vsel %vm575, %v1573, 0
      %v1585 = vsel %vm575, %v1574, 0
      %1587 = vmatprep.subr.mxu0 %v1563
      %1588 = vmatpush1.msra.mxu0 %v1562
      %1589 = vmatprep.subr.mxu0 %v1565
      %1590 = vmatpush1.msra.mxu0 %v1564
      %1591 = vmatprep.subr.mxu0 %v1567
      %1592 = vmatpush1.msra.mxu0 %v1566
      %1593 = vmatprep.subr.mxu0 %v1569
      %1594 = vmatpush1.msra.mxu0 %v1568
      %1595 = vmatprep.subr.mxu0 0.0
      %1596 = vmatpush1.msra.mxu0 0.0
      %1597 = vmatprep.subr.mxu0 0.0
      %1598 = vmatpush1.msra.mxu0 0.0
      %1599 = vmatprep.subr.mxu0 0.0
      %1600 = vmatpush1.msra.mxu0 0.0
      %1601 = vmatprep.subr.mxu0 0.0
      %1602 = vmatpush1.msra.mxu0 0.0
      %1603 = vmatprep.subr.mxu0 0.0
      %1604 = vmatpush1.msra.mxu0 0.0
      %1605 = vmatprep.subr.mxu0 0.0
      %1606 = vmatpush1.msra.mxu0 0.0
      %1607 = vmatprep.subr.mxu0 0.0
      %1608 = vmatpush1.msra.mxu0 0.0
      %1609 = vmatprep.subr.mxu0 0.0
      %1610 = vmatpush1.msra.mxu0 0.0
      %1611 = vmatprep.subr.mxu0 0.0
      %1612 = vmatpush1.msra.mxu0 0.0
      %1613 = vmatprep.subr.mxu0 0.0
      %1614 = vmatpush1.msra.mxu0 0.0
      %1615 = vmatprep.subr.mxu0 0.0
      %1616 = vmatpush1.msra.mxu0 0.0
      %1617 = vmatprep.subr.mxu0 0.0
      %1618 = vmatpush1.msra.mxu0 0.0
      %1619 = vmatprep.subr.mxu0 0.0
      %1620 = vmatpush1.msra.mxu0 0.0
      %1621 = vmatprep.subr.mxu0 0.0
      %1622 = vmatpush1.msra.mxu0 0.0
      %1623 = vmatprep.subr.mxu0 0.0
      %1624 = vmatpush1.msra.mxu0 0.0
      %1625 = vmatprep.subr.mxu0 0.0
      %1626 = vmatpush1.msra.mxu0 0.0
      %1627 = vmatprep.subr.mxu0 0.0
      %1628 = vmatpush1.msra.mxu0 0.0
      %1629 = vmatprep.subr.mxu0 0.0
      %1630 = vmatpush1.msra.mxu0 0.0
      %1631 = vmatprep.subr.mxu0 0.0
      %1632 = vmatpush1.msra.mxu0 0.0
      %1633 = vmatprep.subr.mxu0 0.0
      %1634 = vmatpush1.msra.mxu0 0.0
      %1635 = vmatprep.subr.mxu0 0.0
      %1636 = vmatpush1.msra.mxu0 0.0
      %1637 = vmatprep.subr.mxu0 0.0
      %1638 = vmatpush1.msra.mxu0 0.0
      %1639 = vmatprep.subr.mxu0 0.0
      %1640 = vmatpush1.msra.mxu0 0.0
      %1641 = vmatprep.subr.mxu0 0.0
      %1642 = vmatpush1.msra.mxu0 0.0
      %1643 = vmatprep.subr.mxu0 0.0
      %1644 = vmatpush1.msra.mxu0 0.0
      %1645 = vmatprep.subr.mxu0 0.0
      %1646 = vmatpush1.msra.mxu0 0.0
      %1647 = vmatprep.subr.mxu0 0.0
      %1648 = vmatpush1.msra.mxu0 0.0
      %1649 = vmatprep.subr.mxu0 0.0
      %1650 = vmatpush1.msra.mxu0 0.0
      %1651 = vmatprep.mubr.f32.mxu0 0.0
      %1652 = vmatmul.mubr.f32.gmra.mrb[0].mxu0 %v1576
      %v1653 = vpop.f32.mrb[0].mxu0
      %v1654 = vadd.f32 0.0, %v1653
      %v1655 = vpop.f32.mrb[0].mxu0
      %v1656 = vadd.f32 0.0, %v1655
      %1657 = vmatprep.mubr.f32.mxu0 0.0
      %1658 = vmatmul.mubr.f32.gmra.mrb[0].mxu0 %v1579
      %v1659 = vpop.f32.mrb[0].mxu0
      %v1660 = vadd.f32 0.0, %v1659
      %v1661 = vpop.f32.mrb[0].mxu0
      %v1662 = vadd.f32 0.0, %v1661
      %1663 = vmatprep.mubr.f32.mxu0 0.0
      %1664 = vmatmul.mubr.f32.gmra.mrb[0].mxu0 %v1582
      %v1665 = vpop.f32.mrb[0].mxu0
      %v1666 = vadd.f32 0.0, %v1665
      %v1667 = vpop.f32.mrb[0].mxu0
      %v1668 = vadd.f32 0.0, %v1667
      %1669 = vmatprep.mubr.f32.mxu0 0.0
      %1670 = vmatmul.mubr.f32.gmra.mrb[0].mxu0 %v1585
      %v1671 = vpop.f32.mrb[0].mxu0
      %v1672 = vadd.f32 0.0, %v1671
      %v1673 = vpop.f32.mrb[0].mxu0
      %v1674 = vadd.f32 0.0, %v1673
      %1675 = vdwg.mxu0
      %v1676 = vadd.f32 %v1521, %v1654
      %v1677 = vadd.f32 %v1522, %v1656
      %v1678 = vadd.f32 %v1523, %v1660
      %v1679 = vadd.f32 %v1524, %v1662
      %v1680 = vadd.f32 %v1525, %v1666
      %v1681 = vadd.f32 %v1526, %v1668
      %v1682 = vadd.f32 %v1527, %v1672
      %v1683 = vadd.f32 %v1528, %v1674
      %s1684 = scalar_lea.vmem %s7, 128
      %v1685 = vld [vmem:[%s1684] sm:$0xff]
      %v1686 = vld [vmem:[%s1684 + $0x8] sm:$0xff]
      %v1687 = vld [vmem:[%s1684 + $0x10] sm:$0xff]
      %v1688 = vld [vmem:[%s1684 + $0x18] sm:$0xff]
      %v1690 = vsel %vm575, %v1685, 0
      %v1693 = vsel %vm575, %v1686, 0
      %v1696 = vsel %vm575, %v1687, 0
      %v1699 = vsel %vm575, %v1688, 0
      %1701 = vmatprep.subr.mxu0 %v423
      %1702 = vmatpush1.msra.mxu0 %v422
      %1703 = vmatprep.subr.mxu0 %v425
      %1704 = vmatpush1.msra.mxu0 %v424
      %1705 = vmatprep.subr.mxu0 %v427
      %1706 = vmatpush1.msra.mxu0 %v426
      %1707 = vmatprep.subr.mxu0 %v429
      %1708 = vmatpush1.msra.mxu0 %v428
      %1709 = vmatprep.subr.mxu0 0.0
      %1710 = vmatpush1.msra.mxu0 0.0
      %1711 = vmatprep.subr.mxu0 0.0
      %1712 = vmatpush1.msra.mxu0 0.0
      %1713 = vmatprep.subr.mxu0 0.0
      %1714 = vmatpush1.msra.mxu0 0.0
      %1715 = vmatprep.subr.mxu0 0.0
      %1716 = vmatpush1.msra.mxu0 0.0
      %1717 = vmatprep.subr.mxu0 0.0
      %1718 = vmatpush1.msra.mxu0 0.0
      %1719 = vmatprep.subr.mxu0 0.0
      %1720 = vmatpush1.msra.mxu0 0.0
      %1721 = vmatprep.subr.mxu0 0.0
      %1722 = vmatpush1.msra.mxu0 0.0
      %1723 = vmatprep.subr.mxu0 0.0
      %1724 = vmatpush1.msra.mxu0 0.0
      %1725 = vmatprep.subr.mxu0 0.0
      %1726 = vmatpush1.msra.mxu0 0.0
      %1727 = vmatprep.subr.mxu0 0.0
      %1728 = vmatpush1.msra.mxu0 0.0
      %1729 = vmatprep.subr.mxu0 0.0
      %1730 = vmatpush1.msra.mxu0 0.0
      %1731 = vmatprep.subr.mxu0 0.0
      %1732 = vmatpush1.msra.mxu0 0.0
      %1733 = vmatprep.subr.mxu0 0.0
      %1734 = vmatpush1.msra.mxu0 0.0
      %1735 = vmatprep.subr.mxu0 0.0
      %1736 = vmatpush1.msra.mxu0 0.0
      %1737 = vmatprep.subr.mxu0 0.0
      %1738 = vmatpush1.msra.mxu0 0.0
      %1739 = vmatprep.subr.mxu0 0.0
      %1740 = vmatpush1.msra.mxu0 0.0
      %1741 = vmatprep.subr.mxu0 0.0
      %1742 = vmatpush1.msra.mxu0 0.0
      %1743 = vmatprep.subr.mxu0 0.0
      %1744 = vmatpush1.msra.mxu0 0.0
      %1745 = vmatprep.subr.mxu0 0.0
      %1746 = vmatpush1.msra.mxu0 0.0
      %1747 = vmatprep.subr.mxu0 0.0
      %1748 = vmatpush1.msra.mxu0 0.0
      %1749 = vmatprep.subr.mxu0 0.0
      %1750 = vmatpush1.msra.mxu0 0.0
      %1751 = vmatprep.subr.mxu0 0.0
      %1752 = vmatpush1.msra.mxu0 0.0
      %1753 = vmatprep.subr.mxu0 0.0
      %1754 = vmatpush1.msra.mxu0 0.0
      %1755 = vmatprep.subr.mxu0 0.0
      %1756 = vmatpush1.msra.mxu0 0.0
      %1757 = vmatprep.subr.mxu0 0.0
      %1758 = vmatpush1.msra.mxu0 0.0
      %1759 = vmatprep.subr.mxu0 0.0
      %1760 = vmatpush1.msra.mxu0 0.0
      %1761 = vmatprep.subr.mxu0 0.0
      %1762 = vmatpush1.msra.mxu0 0.0
      %1763 = vmatprep.subr.mxu0 0.0
      %1764 = vmatpush1.msra.mxu0 0.0
      %1765 = vmatprep.mubr.f32.mxu0 0.0
      %1766 = vmatmul.mubr.f32.gmra.mrb[0].mxu0 %v1690
      %v1767 = vpop.f32.mrb[0].mxu0
      %v1768 = vadd.f32 0.0, %v1767
      %v1769 = vpop.f32.mrb[0].mxu0
      %v1770 = vadd.f32 0.0, %v1769
      %1771 = vmatprep.mubr.f32.mxu0 0.0
      %1772 = vmatmul.mubr.f32.gmra.mrb[0].mxu0 %v1693
      %v1773 = vpop.f32.mrb[0].mxu0
      %v1774 = vadd.f32 0.0, %v1773
      %v1775 = vpop.f32.mrb[0].mxu0
      %v1776 = vadd.f32 0.0, %v1775
      %1777 = vmatprep.mubr.f32.mxu0 0.0
      %1778 = vmatmul.mubr.f32.gmra.mrb[0].mxu0 %v1696
      %v1779 = vpop.f32.mrb[0].mxu0
      %v1780 = vadd.f32 0.0, %v1779
      %v1781 = vpop.f32.mrb[0].mxu0
      %v1782 = vadd.f32 0.0, %v1781
      %1783 = vmatprep.mubr.f32.mxu0 0.0
      %1784 = vmatmul.mubr.f32.gmra.mrb[0].mxu0 %v1699
      %v1785 = vpop.f32.mrb[0].mxu0
      %v1786 = vadd.f32 0.0, %v1785
      %v1787 = vpop.f32.mrb[0].mxu0
      %v1788 = vadd.f32 0.0, %v1787
      %1789 = vdwg.mxu0
      %v1790 = vadd.f32 %v1676, %v1768
      %v1791 = vadd.f32 %v1677, %v1770
      %v1792 = vadd.f32 %v1678, %v1774
      %v1793 = vadd.f32 %v1679, %v1776
      %v1794 = vadd.f32 %v1680, %v1780
      %v1795 = vadd.f32 %v1681, %v1782
      %v1796 = vadd.f32 %v1682, %v1786
      %v1797 = vadd.f32 %v1683, %v1788
      %1798 = vrot.lane.b32.xlu0 %v422, 127
      %v1799 = vpop.permute.xlu0 %1798
      %1800 = vrot.lane.b32.xlu0 %v423, 127
      %v1801 = vpop.permute.xlu0 %1800
      %1802 = vrot.lane.b32.xlu0 %v424, 127
      %v1803 = vpop.permute.xlu0 %1802
      %1804 = vrot.lane.b32.xlu0 %v425, 127
      %v1805 = vpop.permute.xlu0 %1804
      %1806 = vrot.lane.b32.xlu0 %v426, 127
      %v1807 = vpop.permute.xlu0 %1806
      %1808 = vrot.lane.b32.xlu0 %v427, 127
      %v1809 = vpop.permute.xlu0 %1808
      %1810 = vrot.lane.b32.xlu0 %v428, 127
      %v1811 = vpop.permute.xlu0 %1810
      %1812 = vrot.lane.b32.xlu0 %v429, 127
      %v1813 = vpop.permute.xlu0 %1812
      %vm1814 = vcmask 1039360
      %v1815 = vsel %vm1814, %v1799, %v1801
      %v1816 = vsel %vm1814, %v1803, %v1805
      %v1817 = vsel %vm1814, %v1807, %v1809
      %v1818 = vsel %vm1814, %v1811, %v1813
      %v1827 = vsel %vm1814, %v1801, 0.0
      %v1828 = vsel %vm1814, %v1805, 0.0
      %v1829 = vsel %vm1814, %v1809, 0.0
      %v1830 = vsel %vm1814, %v1813, 0.0
      %v1831 = vmul.f32 %v1815, %v1400
      %v1832 = vmul.f32 %v1827, %v1404
      %v1833 = vmul.f32 %v1816, %v1400
      %v1834 = vmul.f32 %v1828, %v1404
      %v1835 = vmul.f32 %v1817, %v1400
      %v1836 = vmul.f32 %v1829, %v1404
      %v1837 = vmul.f32 %v1818, %v1400
      %v1838 = vmul.f32 %v1830, %v1404
      %s1839 = scalar_lea.vmem %s7, 160
      %v1840 = vld [vmem:[%s1839] sm:$0xff]
      %v1841 = vld [vmem:[%s1839 + $0x8] sm:$0xff]
      %v1842 = vld [vmem:[%s1839 + $0x10] sm:$0xff]
      %v1843 = vld [vmem:[%s1839 + $0x18] sm:$0xff]
      %v1845 = vsel %vm575, %v1840, 0
      %v1848 = vsel %vm575, %v1841, 0
      %v1851 = vsel %vm575, %v1842, 0
      %v1854 = vsel %vm575, %v1843, 0
      %1856 = vmatprep.subr.mxu0 %v1832
      %1857 = vmatpush1.msra.mxu0 %v1831
      %1858 = vmatprep.subr.mxu0 %v1834
      %1859 = vmatpush1.msra.mxu0 %v1833
      %1860 = vmatprep.subr.mxu0 %v1836
      %1861 = vmatpush1.msra.mxu0 %v1835
      %1862 = vmatprep.subr.mxu0 %v1838
      %1863 = vmatpush1.msra.mxu0 %v1837
      %1864 = vmatprep.subr.mxu0 0.0
      %1865 = vmatpush1.msra.mxu0 0.0
      %1866 = vmatprep.subr.mxu0 0.0
      %1867 = vmatpush1.msra.mxu0 0.0
      %1868 = vmatprep.subr.mxu0 0.0
      %1869 = vmatpush1.msra.mxu0 0.0
      %1870 = vmatprep.subr.mxu0 0.0
      %1871 = vmatpush1.msra.mxu0 0.0
      %1872 = vmatprep.subr.mxu0 0.0
      %1873 = vmatpush1.msra.mxu0 0.0
      %1874 = vmatprep.subr.mxu0 0.0
      %1875 = vmatpush1.msra.mxu0 0.0
      %1876 = vmatprep.subr.mxu0 0.0
      %1877 = vmatpush1.msra.mxu0 0.0
      %1878 = vmatprep.subr.mxu0 0.0
      %1879 = vmatpush1.msra.mxu0 0.0
      %1880 = vmatprep.subr.mxu0 0.0
      %1881 = vmatpush1.msra.mxu0 0.0
      %1882 = vmatprep.subr.mxu0 0.0
      %1883 = vmatpush1.msra.mxu0 0.0
      %1884 = vmatprep.subr.mxu0 0.0
      %1885 = vmatpush1.msra.mxu0 0.0
      %1886 = vmatprep.subr.mxu0 0.0
      %1887 = vmatpush1.msra.mxu0 0.0
      %1888 = vmatprep.subr.mxu0 0.0
      %1889 = vmatpush1.msra.mxu0 0.0
      %1890 = vmatprep.subr.mxu0 0.0
      %1891 = vmatpush1.msra.mxu0 0.0
      %1892 = vmatprep.subr.mxu0 0.0
      %1893 = vmatpush1.msra.mxu0 0.0
      %1894 = vmatprep.subr.mxu0 0.0
      %1895 = vmatpush1.msra.mxu0 0.0
      %1896 = vmatprep.subr.mxu0 0.0
      %1897 = vmatpush1.msra.mxu0 0.0
      %1898 = vmatprep.subr.mxu0 0.0
      %1899 = vmatpush1.msra.mxu0 0.0
      %1900 = vmatprep.subr.mxu0 0.0
      %1901 = vmatpush1.msra.mxu0 0.0
      %1902 = vmatprep.subr.mxu0 0.0
      %1903 = vmatpush1.msra.mxu0 0.0
      %1904 = vmatprep.subr.mxu0 0.0
      %1905 = vmatpush1.msra.mxu0 0.0
      %1906 = vmatprep.subr.mxu0 0.0
      %1907 = vmatpush1.msra.mxu0 0.0
      %1908 = vmatprep.subr.mxu0 0.0
      %1909 = vmatpush1.msra.mxu0 0.0
      %1910 = vmatprep.subr.mxu0 0.0
      %1911 = vmatpush1.msra.mxu0 0.0
      %1912 = vmatprep.subr.mxu0 0.0
      %1913 = vmatpush1.msra.mxu0 0.0
      %1914 = vmatprep.subr.mxu0 0.0
      %1915 = vmatpush1.msra.mxu0 0.0
      %1916 = vmatprep.subr.mxu0 0.0
      %1917 = vmatpush1.msra.mxu0 0.0
      %1918 = vmatprep.subr.mxu0 0.0
      %1919 = vmatpush1.msra.mxu0 0.0
      %1920 = vmatprep.mubr.f32.mxu0 0.0
      %1921 = vmatmul.mubr.f32.gmra.mrb[0].mxu0 %v1845
      %v1922 = vpop.f32.mrb[0].mxu0
      %v1923 = vadd.f32 0.0, %v1922
      %v1924 = vpop.f32.mrb[0].mxu0
      %v1925 = vadd.f32 0.0, %v1924
      %1926 = vmatprep.mubr.f32.mxu0 0.0
      %1927 = vmatmul.mubr.f32.gmra.mrb[0].mxu0 %v1848
      %v1928 = vpop.f32.mrb[0].mxu0
      %v1929 = vadd.f32 0.0, %v1928
      %v1930 = vpop.f32.mrb[0].mxu0
      %v1931 = vadd.f32 0.0, %v1930
      %1932 = vmatprep.mubr.f32.mxu0 0.0
      %1933 = vmatmul.mubr.f32.gmra.mrb[0].mxu0 %v1851
      %v1934 = vpop.f32.mrb[0].mxu0
      %v1935 = vadd.f32 0.0, %v1934
      %v1936 = vpop.f32.mrb[0].mxu0
      %v1937 = vadd.f32 0.0, %v1936
      %1938 = vmatprep.mubr.f32.mxu0 0.0
      %1939 = vmatmul.mubr.f32.gmra.mrb[0].mxu0 %v1854
      %v1940 = vpop.f32.mrb[0].mxu0
      %v1941 = vadd.f32 0.0, %v1940
      %v1942 = vpop.f32.mrb[0].mxu0
      %v1943 = vadd.f32 0.0, %v1942
      %1944 = vdwg.mxu0
      %v1945 = vadd.f32 %v1790, %v1923
      %v1946 = vadd.f32 %v1791, %v1925
      %v1947 = vadd.f32 %v1792, %v1929
      %v1948 = vadd.f32 %v1793, %v1931
      %v1949 = vadd.f32 %v1794, %v1935
      %v1950 = vadd.f32 %v1795, %v1937
      %v1951 = vadd.f32 %v1796, %v1941
      %v1952 = vadd.f32 %v1797, %v1943
      %1953 = vrot.lane.b32.xlu0 %v422, 113
      %v1954 = vpop.permute.xlu0 %1953
      %1955 = vrot.lane.b32.xlu0 %v423, 113
      %v1956 = vpop.permute.xlu0 %1955
      %1957 = vrot.lane.b32.xlu0 %v424, 113
      %v1958 = vpop.permute.xlu0 %1957
      %1959 = vrot.lane.b32.xlu0 %v425, 113
      %v1960 = vpop.permute.xlu0 %1959
      %1961 = vrot.lane.b32.xlu0 %v426, 113
      %v1962 = vpop.permute.xlu0 %1961
      %1963 = vrot.lane.b32.xlu0 %v427, 113
      %v1964 = vpop.permute.xlu0 %1963
      %1965 = vrot.lane.b32.xlu0 %v428, 113
      %v1966 = vpop.permute.xlu0 %1965
      %1967 = vrot.lane.b32.xlu0 %v429, 113
      %v1968 = vpop.permute.xlu0 %1967
      %vm1969 = vcmask 924672
      %v1970 = vsel %vm1969, %v1954, %v1956
      %v1971 = vsel %vm1969, %v1958, %v1960
      %v1972 = vsel %vm1969, %v1962, %v1964
      %v1973 = vsel %vm1969, %v1966, %v1968
      %v1982 = vsel %vm1969, %v1956, 0.0
      %v1983 = vsel %vm1969, %v1960, 0.0
      %v1984 = vsel %vm1969, %v1964, 0.0
      %v1985 = vsel %vm1969, %v1968, 0.0
      %v1986 = vmul.f32 %v1970, %v1105
      %v1987 = vmul.f32 %v1982, %v1109
      %v1988 = vmul.f32 %v1971, %v1105
      %v1989 = vmul.f32 %v1983, %v1109
      %v1990 = vmul.f32 %v1972, %v1105
      %v1991 = vmul.f32 %v1984, %v1109
      %v1992 = vmul.f32 %v1973, %v1105
      %v1993 = vmul.f32 %v1985, %v1109
      %s1994 = scalar_lea.vmem %s7, 192
      %v1995 = vld [vmem:[%s1994] sm:$0xff]
      %v1996 = vld [vmem:[%s1994 + $0x8] sm:$0xff]
      %v1997 = vld [vmem:[%s1994 + $0x10] sm:$0xff]
      %v1998 = vld [vmem:[%s1994 + $0x18] sm:$0xff]
      %v2000 = vsel %vm575, %v1995, 0
      %v2003 = vsel %vm575, %v1996, 0
      %v2006 = vsel %vm575, %v1997, 0
      %v2009 = vsel %vm575, %v1998, 0
      %2011 = vmatprep.subr.mxu0 %v1987
      %2012 = vmatpush1.msra.mxu0 %v1986
      %2013 = vmatprep.subr.mxu0 %v1989
      %2014 = vmatpush1.msra.mxu0 %v1988
      %2015 = vmatprep.subr.mxu0 %v1991
      %2016 = vmatpush1.msra.mxu0 %v1990
      %2017 = vmatprep.subr.mxu0 %v1993
      %2018 = vmatpush1.msra.mxu0 %v1992
      %2019 = vmatprep.subr.mxu0 0.0
      %2020 = vmatpush1.msra.mxu0 0.0
      %2021 = vmatprep.subr.mxu0 0.0
      %2022 = vmatpush1.msra.mxu0 0.0
      %2023 = vmatprep.subr.mxu0 0.0
      %2024 = vmatpush1.msra.mxu0 0.0
      %2025 = vmatprep.subr.mxu0 0.0
      %2026 = vmatpush1.msra.mxu0 0.0
      %2027 = vmatprep.subr.mxu0 0.0
      %2028 = vmatpush1.msra.mxu0 0.0
      %2029 = vmatprep.subr.mxu0 0.0
      %2030 = vmatpush1.msra.mxu0 0.0
      %2031 = vmatprep.subr.mxu0 0.0
      %2032 = vmatpush1.msra.mxu0 0.0
      %2033 = vmatprep.subr.mxu0 0.0
      %2034 = vmatpush1.msra.mxu0 0.0
      %2035 = vmatprep.subr.mxu0 0.0
      %2036 = vmatpush1.msra.mxu0 0.0
      %2037 = vmatprep.subr.mxu0 0.0
      %2038 = vmatpush1.msra.mxu0 0.0
      %2039 = vmatprep.subr.mxu0 0.0
      %2040 = vmatpush1.msra.mxu0 0.0
      %2041 = vmatprep.subr.mxu0 0.0
      %2042 = vmatpush1.msra.mxu0 0.0
      %2043 = vmatprep.subr.mxu0 0.0
      %2044 = vmatpush1.msra.mxu0 0.0
      %2045 = vmatprep.subr.mxu0 0.0
      %2046 = vmatpush1.msra.mxu0 0.0
      %2047 = vmatprep.subr.mxu0 0.0
      %2048 = vmatpush1.msra.mxu0 0.0
      %2049 = vmatprep.subr.mxu0 0.0
      %2050 = vmatpush1.msra.mxu0 0.0
      %2051 = vmatprep.subr.mxu0 0.0
      %2052 = vmatpush1.msra.mxu0 0.0
      %2053 = vmatprep.subr.mxu0 0.0
      %2054 = vmatpush1.msra.mxu0 0.0
      %2055 = vmatprep.subr.mxu0 0.0
      %2056 = vmatpush1.msra.mxu0 0.0
      %2057 = vmatprep.subr.mxu0 0.0
      %2058 = vmatpush1.msra.mxu0 0.0
      %2059 = vmatprep.subr.mxu0 0.0
      %2060 = vmatpush1.msra.mxu0 0.0
      %2061 = vmatprep.subr.mxu0 0.0
      %2062 = vmatpush1.msra.mxu0 0.0
      %2063 = vmatprep.subr.mxu0 0.0
      %2064 = vmatpush1.msra.mxu0 0.0
      %2065 = vmatprep.subr.mxu0 0.0
      %2066 = vmatpush1.msra.mxu0 0.0
      %2067 = vmatprep.subr.mxu0 0.0
      %2068 = vmatpush1.msra.mxu0 0.0
      %2069 = vmatprep.subr.mxu0 0.0
      %2070 = vmatpush1.msra.mxu0 0.0
      %2071 = vmatprep.subr.mxu0 0.0
      %2072 = vmatpush1.msra.mxu0 0.0
      %2073 = vmatprep.subr.mxu0 0.0
      %2074 = vmatpush1.msra.mxu0 0.0
      %2075 = vmatprep.mubr.f32.mxu0 0.0
      %2076 = vmatmul.mubr.f32.gmra.mrb[0].mxu0 %v2000
      %v2077 = vpop.f32.mrb[0].mxu0
      %v2078 = vadd.f32 0.0, %v2077
      %v2079 = vpop.f32.mrb[0].mxu0
      %v2080 = vadd.f32 0.0, %v2079
      %2081 = vmatprep.mubr.f32.mxu0 0.0
      %2082 = vmatmul.mubr.f32.gmra.mrb[0].mxu0 %v2003
      %v2083 = vpop.f32.mrb[0].mxu0
      %v2084 = vadd.f32 0.0, %v2083
      %v2085 = vpop.f32.mrb[0].mxu0
      %v2086 = vadd.f32 0.0, %v2085
      %2087 = vmatprep.mubr.f32.mxu0 0.0
      %2088 = vmatmul.mubr.f32.gmra.mrb[0].mxu0 %v2006
      %v2089 = vpop.f32.mrb[0].mxu0
      %v2090 = vadd.f32 0.0, %v2089
      %v2091 = vpop.f32.mrb[0].mxu0
      %v2092 = vadd.f32 0.0, %v2091
      %2093 = vmatprep.mubr.f32.mxu0 0.0
      %2094 = vmatmul.mubr.f32.gmra.mrb[0].mxu0 %v2009
      %v2095 = vpop.f32.mrb[0].mxu0
      %v2096 = vadd.f32 0.0, %v2095
      %v2097 = vpop.f32.mrb[0].mxu0
      %v2098 = vadd.f32 0.0, %v2097
      %2099 = vdwg.mxu0
      %v2100 = vadd.f32 %v1945, %v2078
      %v2101 = vadd.f32 %v1946, %v2080
      %v2102 = vadd.f32 %v1947, %v2084
      %v2103 = vadd.f32 %v1948, %v2086
      %v2104 = vadd.f32 %v1949, %v2090
      %v2105 = vadd.f32 %v1950, %v2092
      %v2106 = vadd.f32 %v1951, %v2096
      %v2107 = vadd.f32 %v1952, %v2098
      %2108 = vrot.lane.b32.xlu0 %v422, 112
      %v2109 = vpop.permute.xlu0 %2108
      %2110 = vrot.lane.b32.xlu0 %v423, 112
      %v2111 = vpop.permute.xlu0 %2110
      %2112 = vrot.lane.b32.xlu0 %v424, 112
      %v2113 = vpop.permute.xlu0 %2112
      %2114 = vrot.lane.b32.xlu0 %v425, 112
      %v2115 = vpop.permute.xlu0 %2114
      %2116 = vrot.lane.b32.xlu0 %v426, 112
      %v2117 = vpop.permute.xlu0 %2116
      %2118 = vrot.lane.b32.xlu0 %v427, 112
      %v2119 = vpop.permute.xlu0 %2118
      %2120 = vrot.lane.b32.xlu0 %v428, 112
      %v2121 = vpop.permute.xlu0 %2120
      %2122 = vrot.lane.b32.xlu0 %v429, 112
      %v2123 = vpop.permute.xlu0 %2122
      %vm2124 = vcmask 916480
      %v2125 = vsel %vm2124, %v2109, %v2111
      %v2126 = vsel %vm2124, %v2113, %v2115
      %v2127 = vsel %vm2124, %v2117, %v2119
      %v2128 = vsel %vm2124, %v2121, %v2123
      %v2137 = vsel %vm2124, %v2111, 0.0
      %v2138 = vsel %vm2124, %v2115, 0.0
      %v2139 = vsel %vm2124, %v2119, 0.0
      %v2140 = vsel %vm2124, %v2123, 0.0
      %s2141 = scalar_lea.vmem %s7, 224
      %v2142 = vld [vmem:[%s2141] sm:$0xff]
      %v2143 = vld [vmem:[%s2141 + $0x8] sm:$0xff]
      %v2144 = vld [vmem:[%s2141 + $0x10] sm:$0xff]
      %v2145 = vld [vmem:[%s2141 + $0x18] sm:$0xff]
      %v2147 = vsel %vm575, %v2142, 0
      %v2150 = vsel %vm575, %v2143, 0
      %v2153 = vsel %vm575, %v2144, 0
      %v2156 = vsel %vm575, %v2145, 0
      %2158 = vmatprep.subr.mxu0 %v2137
      %2159 = vmatpush1.msra.mxu0 %v2125
      %2160 = vmatprep.subr.mxu0 %v2138
      %2161 = vmatpush1.msra.mxu0 %v2126
      %2162 = vmatprep.subr.mxu0 %v2139
      %2163 = vmatpush1.msra.mxu0 %v2127
      %2164 = vmatprep.subr.mxu0 %v2140
      %2165 = vmatpush1.msra.mxu0 %v2128
      %2166 = vmatprep.subr.mxu0 0.0
      %2167 = vmatpush1.msra.mxu0 0.0
      %2168 = vmatprep.subr.mxu0 0.0
      %2169 = vmatpush1.msra.mxu0 0.0
      %2170 = vmatprep.subr.mxu0 0.0
      %2171 = vmatpush1.msra.mxu0 0.0
      %2172 = vmatprep.subr.mxu0 0.0
      %2173 = vmatpush1.msra.mxu0 0.0
      %2174 = vmatprep.subr.mxu0 0.0
      %2175 = vmatpush1.msra.mxu0 0.0
      %2176 = vmatprep.subr.mxu0 0.0
      %2177 = vmatpush1.msra.mxu0 0.0
      %2178 = vmatprep.subr.mxu0 0.0
      %2179 = vmatpush1.msra.mxu0 0.0
      %2180 = vmatprep.subr.mxu0 0.0
      %2181 = vmatpush1.msra.mxu0 0.0
      %2182 = vmatprep.subr.mxu0 0.0
      %2183 = vmatpush1.msra.mxu0 0.0
      %2184 = vmatprep.subr.mxu0 0.0
      %2185 = vmatpush1.msra.mxu0 0.0
      %2186 = vmatprep.subr.mxu0 0.0
      %2187 = vmatpush1.msra.mxu0 0.0
      %2188 = vmatprep.subr.mxu0 0.0
      %2189 = vmatpush1.msra.mxu0 0.0
      %2190 = vmatprep.subr.mxu0 0.0
      %2191 = vmatpush1.msra.mxu0 0.0
      %2192 = vmatprep.subr.mxu0 0.0
      %2193 = vmatpush1.msra.mxu0 0.0
      %2194 = vmatprep.subr.mxu0 0.0
      %2195 = vmatpush1.msra.mxu0 0.0
      %2196 = vmatprep.subr.mxu0 0.0
      %2197 = vmatpush1.msra.mxu0 0.0
      %2198 = vmatprep.subr.mxu0 0.0
      %2199 = vmatpush1.msra.mxu0 0.0
      %2200 = vmatprep.subr.mxu0 0.0
      %2201 = vmatpush1.msra.mxu0 0.0
      %2202 = vmatprep.subr.mxu0 0.0
      %2203 = vmatpush1.msra.mxu0 0.0
      %2204 = vmatprep.subr.mxu0 0.0
      %2205 = vmatpush1.msra.mxu0 0.0
      %2206 = vmatprep.subr.mxu0 0.0
      %2207 = vmatpush1.msra.mxu0 0.0
      %2208 = vmatprep.subr.mxu0 0.0
      %2209 = vmatpush1.msra.mxu0 0.0
      %2210 = vmatprep.subr.mxu0 0.0
      %2211 = vmatpush1.msra.mxu0 0.0
      %2212 = vmatprep.subr.mxu0 0.0
      %2213 = vmatpush1.msra.mxu0 0.0
      %2214 = vmatprep.subr.mxu0 0.0
      %2215 = vmatpush1.msra.mxu0 0.0
      %2216 = vmatprep.subr.mxu0 0.0
      %2217 = vmatpush1.msra.mxu0 0.0
      %2218 = vmatprep.subr.mxu0 0.0
      %2219 = vmatpush1.msra.mxu0 0.0
      %2220 = vmatprep.subr.mxu0 0.0
      %2221 = vmatpush1.msra.mxu0 0.0
      %2222 = vmatprep.mubr.f32.mxu0 0.0
      %2223 = vmatmul.mubr.f32.gmra.mrb[0].mxu0 %v2147
      %v2224 = vpop.f32.mrb[0].mxu0
      %v2225 = vadd.f32 0.0, %v2224
      %v2226 = vpop.f32.mrb[0].mxu0
      %v2227 = vadd.f32 0.0, %v2226
      %2228 = vmatprep.mubr.f32.mxu0 0.0
      %2229 = vmatmul.mubr.f32.gmra.mrb[0].mxu0 %v2150
      %v2230 = vpop.f32.mrb[0].mxu0
      %v2231 = vadd.f32 0.0, %v2230
      %v2232 = vpop.f32.mrb[0].mxu0
      %v2233 = vadd.f32 0.0, %v2232
      %2234 = vmatprep.mubr.f32.mxu0 0.0
      %2235 = vmatmul.mubr.f32.gmra.mrb[0].mxu0 %v2153
      %v2236 = vpop.f32.mrb[0].mxu0
      %v2237 = vadd.f32 0.0, %v2236
      %v2238 = vpop.f32.mrb[0].mxu0
      %v2239 = vadd.f32 0.0, %v2238
      %2240 = vmatprep.mubr.f32.mxu0 0.0
      %2241 = vmatmul.mubr.f32.gmra.mrb[0].mxu0 %v2156
      %v2242 = vpop.f32.mrb[0].mxu0
      %v2243 = vadd.f32 0.0, %v2242
      %v2244 = vpop.f32.mrb[0].mxu0
      %v2245 = vadd.f32 0.0, %v2244
      %2246 = vdwg.mxu0
      %v2247 = vadd.f32 %v2100, %v2225
      %v2248 = vadd.f32 %v2101, %v2227
      %v2249 = vadd.f32 %v2102, %v2231
      %v2250 = vadd.f32 %v2103, %v2233
      %v2251 = vadd.f32 %v2104, %v2237
      %v2252 = vadd.f32 %v2105, %v2239
      %v2253 = vadd.f32 %v2106, %v2243
      %v2254 = vadd.f32 %v2107, %v2245
      %2255 = vrot.lane.b32.xlu0 %v422, 111
      %v2256 = vpop.permute.xlu0 %2255
      %2257 = vrot.lane.b32.xlu0 %v423, 111
      %v2258 = vpop.permute.xlu0 %2257
      %2259 = vrot.lane.b32.xlu0 %v424, 111
      %v2260 = vpop.permute.xlu0 %2259
      %2261 = vrot.lane.b32.xlu0 %v425, 111
      %v2262 = vpop.permute.xlu0 %2261
      %2263 = vrot.lane.b32.xlu0 %v426, 111
      %v2264 = vpop.permute.xlu0 %2263
      %2265 = vrot.lane.b32.xlu0 %v427, 111
      %v2266 = vpop.permute.xlu0 %2265
      %2267 = vrot.lane.b32.xlu0 %v428, 111
      %v2268 = vpop.permute.xlu0 %2267
      %2269 = vrot.lane.b32.xlu0 %v429, 111
      %v2270 = vpop.permute.xlu0 %2269
      %vm2271 = vcmask 908288
      %v2272 = vsel %vm2271, %v2256, %v2258
      %v2273 = vsel %vm2271, %v2260, %v2262
      %v2274 = vsel %vm2271, %v2264, %v2266
      %v2275 = vsel %vm2271, %v2268, %v2270
      %v2284 = vsel %vm2271, %v2258, 0.0
      %v2285 = vsel %vm2271, %v2262, 0.0
      %v2286 = vsel %vm2271, %v2266, 0.0
      %v2287 = vsel %vm2271, %v2270, 0.0
      %v2288 = vmul.f32 %v2272, %v1400
      %v2289 = vmul.f32 %v2284, %v1404
      %v2290 = vmul.f32 %v2273, %v1400
      %v2291 = vmul.f32 %v2285, %v1404
      %v2292 = vmul.f32 %v2274, %v1400
      %v2293 = vmul.f32 %v2286, %v1404
      %v2294 = vmul.f32 %v2275, %v1400
      %v2295 = vmul.f32 %v2287, %v1404
      %s2296 = scalar_lea.vmem %s7, 256
      %v2297 = vld [vmem:[%s2296] sm:$0xff]
      %v2298 = vld [vmem:[%s2296 + $0x8] sm:$0xff]
      %v2299 = vld [vmem:[%s2296 + $0x10] sm:$0xff]
      %v2300 = vld [vmem:[%s2296 + $0x18] sm:$0xff]
      %v2302 = vsel %vm575, %v2297, 0
      %v2305 = vsel %vm575, %v2298, 0
      %v2308 = vsel %vm575, %v2299, 0
      %v2311 = vsel %vm575, %v2300, 0
      %2313 = vmatprep.subr.mxu0 %v2289
      %2314 = vmatpush1.msra.mxu0 %v2288
      %2315 = vmatprep.subr.mxu0 %v2291
      %2316 = vmatpush1.msra.mxu0 %v2290
      %2317 = vmatprep.subr.mxu0 %v2293
      %2318 = vmatpush1.msra.mxu0 %v2292
      %2319 = vmatprep.subr.mxu0 %v2295
      %2320 = vmatpush1.msra.mxu0 %v2294
      %2321 = vmatprep.subr.mxu0 0.0
      %2322 = vmatpush1.msra.mxu0 0.0
      %2323 = vmatprep.subr.mxu0 0.0
      %2324 = vmatpush1.msra.mxu0 0.0
      %2325 = vmatprep.subr.mxu0 0.0
      %2326 = vmatpush1.msra.mxu0 0.0
      %2327 = vmatprep.subr.mxu0 0.0
      %2328 = vmatpush1.msra.mxu0 0.0
      %2329 = vmatprep.subr.mxu0 0.0
      %2330 = vmatpush1.msra.mxu0 0.0
      %2331 = vmatprep.subr.mxu0 0.0
      %2332 = vmatpush1.msra.mxu0 0.0
      %2333 = vmatprep.subr.mxu0 0.0
      %2334 = vmatpush1.msra.mxu0 0.0
      %2335 = vmatprep.subr.mxu0 0.0
      %2336 = vmatpush1.msra.mxu0 0.0
      %2337 = vmatprep.subr.mxu0 0.0
      %2338 = vmatpush1.msra.mxu0 0.0
      %2339 = vmatprep.subr.mxu0 0.0
      %2340 = vmatpush1.msra.mxu0 0.0
      %2341 = vmatprep.subr.mxu0 0.0
      %2342 = vmatpush1.msra.mxu0 0.0
      %2343 = vmatprep.subr.mxu0 0.0
      %2344 = vmatpush1.msra.mxu0 0.0
      %2345 = vmatprep.subr.mxu0 0.0
      %2346 = vmatpush1.msra.mxu0 0.0
      %2347 = vmatprep.subr.mxu0 0.0
      %2348 = vmatpush1.msra.mxu0 0.0
      %2349 = vmatprep.subr.mxu0 0.0
      %2350 = vmatpush1.msra.mxu0 0.0
      %2351 = vmatprep.subr.mxu0 0.0
      %2352 = vmatpush1.msra.mxu0 0.0
      %2353 = vmatprep.subr.mxu0 0.0
      %2354 = vmatpush1.msra.mxu0 0.0
      %2355 = vmatprep.subr.mxu0 0.0
      %2356 = vmatpush1.msra.mxu0 0.0
      %2357 = vmatprep.subr.mxu0 0.0
      %2358 = vmatpush1.msra.mxu0 0.0
      %2359 = vmatprep.subr.mxu0 0.0
      %2360 = vmatpush1.msra.mxu0 0.0
      %2361 = vmatprep.subr.mxu0 0.0
      %2362 = vmatpush1.msra.mxu0 0.0
      %2363 = vmatprep.subr.mxu0 0.0
      %2364 = vmatpush1.msra.mxu0 0.0
      %2365 = vmatprep.subr.mxu0 0.0
      %2366 = vmatpush1.msra.mxu0 0.0
      %2367 = vmatprep.subr.mxu0 0.0
      %2368 = vmatpush1.msra.mxu0 0.0
      %2369 = vmatprep.subr.mxu0 0.0
      %2370 = vmatpush1.msra.mxu0 0.0
      %2371 = vmatprep.subr.mxu0 0.0
      %2372 = vmatpush1.msra.mxu0 0.0
      %2373 = vmatprep.subr.mxu0 0.0
      %2374 = vmatpush1.msra.mxu0 0.0
      %2375 = vmatprep.subr.mxu0 0.0
      %2376 = vmatpush1.msra.mxu0 0.0
      %2377 = vmatprep.mubr.f32.mxu0 0.0
      %2378 = vmatmul.mubr.f32.gmra.mrb[0].mxu0 %v2302
      %v2379 = vpop.f32.mrb[0].mxu0
      %v2380 = vadd.f32 0.0, %v2379
      %v2381 = vpop.f32.mrb[0].mxu0
      %v2382 = vadd.f32 0.0, %v2381
      %2383 = vmatprep.mubr.f32.mxu0 0.0
      %2384 = vmatmul.mubr.f32.gmra.mrb[0].mxu0 %v2305
      %v2385 = vpop.f32.mrb[0].mxu0
      %v2386 = vadd.f32 0.0, %v2385
      %v2387 = vpop.f32.mrb[0].mxu0
      %v2388 = vadd.f32 0.0, %v2387
      %2389 = vmatprep.mubr.f32.mxu0 0.0
      %2390 = vmatmul.mubr.f32.gmra.mrb[0].mxu0 %v2308
      %v2391 = vpop.f32.mrb[0].mxu0
      %v2392 = vadd.f32 0.0, %v2391
      %v2393 = vpop.f32.mrb[0].mxu0
      %v2394 = vadd.f32 0.0, %v2393
      %2395 = vmatprep.mubr.f32.mxu0 0.0
      %2396 = vmatmul.mubr.f32.gmra.mrb[0].mxu0 %v2311
      %v2397 = vpop.f32.mrb[0].mxu0
      %v2398 = vadd.f32 0.0, %v2397
      %v2399 = vpop.f32.mrb[0].mxu0
      %v2400 = vadd.f32 0.0, %v2399
      %2401 = vdwg.mxu0
      %v2402 = vadd.f32 %v2247, %v2380
      %v2403 = vadd.f32 %v2248, %v2382
      %v2404 = vadd.f32 %v2249, %v2386
      %v2405 = vadd.f32 %v2250, %v2388
      %v2406 = vadd.f32 %v2251, %v2392
      %v2407 = vadd.f32 %v2252, %v2394
      %v2408 = vadd.f32 %v2253, %v2398
      %v2409 = vadd.f32 %v2254, %v2400
      %v2410 = vld [vmem:[%s8] sm:$0xff]
      %v2411 = vld [vmem:[%s8 + $0x8] sm:$0xff]
      %v2412 = vld [vmem:[%s8 + $0x10] sm:$0xff]
      %v2413 = vld [vmem:[%s8 + $0x18] sm:$0xff]
      %2415 = vset.pattern.permute.xlu0 0
      %2416 = vperm.xlu0 %2415, %v2410
      %v2417 = vpop.permute.xlu0 %2416
      %2420 = vset.pattern.permute.xlu0 0
      %2421 = vperm.xlu0 %2420, %v2411
      %v2422 = vpop.permute.xlu0 %2421
      %2425 = vset.pattern.permute.xlu0 0
      %2426 = vperm.xlu0 %2425, %v2412
      %v2427 = vpop.permute.xlu0 %2426
      %2430 = vset.pattern.permute.xlu0 0
      %2431 = vperm.xlu0 %2430, %v2413
      %v2432 = vpop.permute.xlu0 %2431
      %v2434 = vadd.f32 %v2402, %v2417
      %v2435 = vadd.f32 %v2403, %v2417
      %v2436 = vadd.f32 %v2404, %v2422
      %v2437 = vadd.f32 %v2405, %v2422
      %v2438 = vadd.f32 %v2406, %v2427
      %v2439 = vadd.f32 %v2407, %v2427
      %v2440 = vadd.f32 %v2408, %v2432
      %v2441 = vadd.f32 %v2409, %v2432
      %v2442 = vadd.f32 %v1049, %v1050
      %2443 = vadd.xlane.f32.xlu0 %v2442
      %v2444 = vpop.xlane.xlu0 %2443
      %v2445 = vadd.f32 %v1051, %v1052
      %2446 = vadd.xlane.f32.xlu0 %v2445
      %v2447 = vpop.xlane.xlu0 %2446
      %v2448 = vadd.f32 %v1053, %v1054
      %2449 = vadd.xlane.f32.xlu0 %v2448
      %v2450 = vpop.xlane.xlu0 %2449
      %v2451 = vadd.f32 %v1055, %v1056
      %2452 = vadd.xlane.f32.xlu0 %v2451
      %v2453 = vpop.xlane.xlu0 %2452
      %v2454 = vmul.f32 %v2444, 0.00390625
      %v2455 = vmul.f32 %v2447, 0.00390625
      %v2456 = vmul.f32 %v2450, 0.00390625
      %v2457 = vmul.f32 %v2453, 0.00390625
      %v2458 = vadd.f32 %v2434, %v2435
      %2459 = vadd.xlane.f32.xlu0 %v2458
      %v2460 = vpop.xlane.xlu0 %2459
      %v2461 = vadd.f32 %v2436, %v2437
      %2462 = vadd.xlane.f32.xlu0 %v2461
      %v2463 = vpop.xlane.xlu0 %2462
      %v2464 = vadd.f32 %v2438, %v2439
      %2465 = vadd.xlane.f32.xlu0 %v2464
      %v2466 = vpop.xlane.xlu0 %2465
      %v2467 = vadd.f32 %v2440, %v2441
      %2468 = vadd.xlane.f32.xlu0 %v2467
      %v2469 = vpop.xlane.xlu0 %2468
      %v2470 = vmul.f32 %v2460, 0.00390625
      %v2471 = vmul.f32 %v2463, 0.00390625
      %v2472 = vmul.f32 %v2466, 0.00390625
      %v2473 = vmul.f32 %v2469, 0.00390625
      %v2474 = vsel %vm1545, %v2454, %v2470
      %v2475 = vsel %vm1545, %v2455, %v2471
      %v2476 = vsel %vm1545, %v2456, %v2472
      %v2477 = vsel %vm1545, %v2457, %v2473
      %v2478 = vld [vmem:[%s4] sm:$0xff]
      %v2479 = vld [vmem:[%s4 + $0x8] sm:$0xff]
      %v2480 = vld [vmem:[%s4 + $0x10] sm:$0xff]
      %v2481 = vld [vmem:[%s4 + $0x18] sm:$0xff]
      %v2483 = vsel %vm575, %v2478, 0
      %v2486 = vsel %vm575, %v2479, 0
      %v2489 = vsel %vm575, %v2480, 0
      %v2492 = vsel %vm575, %v2481, 0
      %2494 = vmatprep.subr.mxu0 0.0
      %2495 = vmatpush1.msra.mxu0 %v2474
      %2496 = vmatprep.subr.mxu0 0.0
      %2497 = vmatpush1.msra.mxu0 %v2475
      %2498 = vmatprep.subr.mxu0 0.0
      %2499 = vmatpush1.msra.mxu0 %v2476
      %2500 = vmatprep.subr.mxu0 0.0
      %2501 = vmatpush1.msra.mxu0 %v2477
      %2502 = vmatprep.subr.mxu0 0.0
      %2503 = vmatpush1.msra.mxu0 0.0
      %2504 = vmatprep.subr.mxu0 0.0
      %2505 = vmatpush1.msra.mxu0 0.0
      %2506 = vmatprep.subr.mxu0 0.0
      %2507 = vmatpush1.msra.mxu0 0.0
      %2508 = vmatprep.subr.mxu0 0.0
      %2509 = vmatpush1.msra.mxu0 0.0
      %2510 = vmatprep.subr.mxu0 0.0
      %2511 = vmatpush1.msra.mxu0 0.0
      %2512 = vmatprep.subr.mxu0 0.0
      %2513 = vmatpush1.msra.mxu0 0.0
      %2514 = vmatprep.subr.mxu0 0.0
      %2515 = vmatpush1.msra.mxu0 0.0
      %2516 = vmatprep.subr.mxu0 0.0
      %2517 = vmatpush1.msra.mxu0 0.0
      %2518 = vmatprep.subr.mxu0 0.0
      %2519 = vmatpush1.msra.mxu0 0.0
      %2520 = vmatprep.subr.mxu0 0.0
      %2521 = vmatpush1.msra.mxu0 0.0
      %2522 = vmatprep.subr.mxu0 0.0
      %2523 = vmatpush1.msra.mxu0 0.0
      %2524 = vmatprep.subr.mxu0 0.0
      %2525 = vmatpush1.msra.mxu0 0.0
      %2526 = vmatprep.subr.mxu0 0.0
      %2527 = vmatpush1.msra.mxu0 0.0
      %2528 = vmatprep.subr.mxu0 0.0
      %2529 = vmatpush1.msra.mxu0 0.0
      %2530 = vmatprep.subr.mxu0 0.0
      %2531 = vmatpush1.msra.mxu0 0.0
      %2532 = vmatprep.subr.mxu0 0.0
      %2533 = vmatpush1.msra.mxu0 0.0
      %2534 = vmatprep.subr.mxu0 0.0
      %2535 = vmatpush1.msra.mxu0 0.0
      %2536 = vmatprep.subr.mxu0 0.0
      %2537 = vmatpush1.msra.mxu0 0.0
      %2538 = vmatprep.subr.mxu0 0.0
      %2539 = vmatpush1.msra.mxu0 0.0
      %2540 = vmatprep.subr.mxu0 0.0
      %2541 = vmatpush1.msra.mxu0 0.0
      %2542 = vmatprep.subr.mxu0 0.0
      %2543 = vmatpush1.msra.mxu0 0.0
      %2544 = vmatprep.subr.mxu0 0.0
      %2545 = vmatpush1.msra.mxu0 0.0
      %2546 = vmatprep.subr.mxu0 0.0
      %2547 = vmatpush1.msra.mxu0 0.0
      %2548 = vmatprep.subr.mxu0 0.0
      %2549 = vmatpush1.msra.mxu0 0.0
      %2550 = vmatprep.subr.mxu0 0.0
      %2551 = vmatpush1.msra.mxu0 0.0
      %2552 = vmatprep.subr.mxu0 0.0
      %2553 = vmatpush1.msra.mxu0 0.0
      %2554 = vmatprep.subr.mxu0 0.0
      %2555 = vmatpush1.msra.mxu0 0.0
      %2556 = vmatprep.subr.mxu0 0.0
      %2557 = vmatpush1.msra.mxu0 0.0
      %2558 = vmatprep.mubr.f32.mxu0 0.0
      %2559 = vmatmul.mubr.f32.gmra.mrb[0].mxu0 %v2483
      %v2560 = vpop.f32.mrb[0].mxu0
      %v2561 = vadd.f32 0.0, %v2560
      %v2562 = vpop.f32.mrb[0].mxu0
      %2563 = vmatprep.mubr.f32.mxu0 0.0
      %2564 = vmatmul.mubr.f32.gmra.mrb[0].mxu0 %v2486
      %v2565 = vpop.f32.mrb[0].mxu0
      %v2566 = vadd.f32 0.0, %v2565
      %v2567 = vpop.f32.mrb[0].mxu0
      %2568 = vmatprep.mubr.f32.mxu0 0.0
      %2569 = vmatmul.mubr.f32.gmra.mrb[0].mxu0 %v2489
      %v2570 = vpop.f32.mrb[0].mxu0
      %v2571 = vadd.f32 0.0, %v2570
      %v2572 = vpop.f32.mrb[0].mxu0
      %2573 = vmatprep.mubr.f32.mxu0 0.0
      %2574 = vmatmul.mubr.f32.gmra.mrb[0].mxu0 %v2492
      %v2575 = vpop.f32.mrb[0].mxu0
      %v2576 = vadd.f32 0.0, %v2575
      %v2577 = vpop.f32.mrb[0].mxu0
      %2578 = vdwg.mxu0
      %v2579 = vmul.f32 %v2561, 0.25
      %v2580 = vmul.f32 %v2566, 0.25
      %v2581 = vmul.f32 %v2571, 0.25
      %v2582 = vmul.f32 %v2576, 0.25
      %v2583 = vsub.f32 %v2474, %v2579
      %v2584 = vsub.f32 %v2475, %v2580
      %v2585 = vsub.f32 %v2476, %v2581
      %v2586 = vsub.f32 %v2477, %v2582
      %v2587 = vmul.f32 %v2583, 1.442695
      %v2588 = vpow.pop %v2587
      %v2589 = vmul.f32 %v2584, 1.442695
      %v2590 = vpow.pop %v2589
      %v2591 = vmul.f32 %v2585, 1.442695
      %v2592 = vpow.pop %v2591
      %v2593 = vmul.f32 %v2586, 1.442695
      %v2594 = vpow.pop %v2593
      %2595 = vmatprep.subr.mxu0 0.0
      %2596 = vmatpush1.msra.mxu0 %v2588
      %2597 = vmatprep.subr.mxu0 0.0
      %2598 = vmatpush1.msra.mxu0 %v2590
      %2599 = vmatprep.subr.mxu0 0.0
      %2600 = vmatpush1.msra.mxu0 %v2592
      %2601 = vmatprep.subr.mxu0 0.0
      %2602 = vmatpush1.msra.mxu0 %v2594
      %2603 = vmatprep.subr.mxu0 0.0
      %2604 = vmatpush1.msra.mxu0 0.0
      %2605 = vmatprep.subr.mxu0 0.0
      %2606 = vmatpush1.msra.mxu0 0.0
      %2607 = vmatprep.subr.mxu0 0.0
      %2608 = vmatpush1.msra.mxu0 0.0
      %2609 = vmatprep.subr.mxu0 0.0
      %2610 = vmatpush1.msra.mxu0 0.0
      %2611 = vmatprep.subr.mxu0 0.0
      %2612 = vmatpush1.msra.mxu0 0.0
      %2613 = vmatprep.subr.mxu0 0.0
      %2614 = vmatpush1.msra.mxu0 0.0
      %2615 = vmatprep.subr.mxu0 0.0
      %2616 = vmatpush1.msra.mxu0 0.0
      %2617 = vmatprep.subr.mxu0 0.0
      %2618 = vmatpush1.msra.mxu0 0.0
      %2619 = vmatprep.subr.mxu0 0.0
      %2620 = vmatpush1.msra.mxu0 0.0
      %2621 = vmatprep.subr.mxu0 0.0
      %2622 = vmatpush1.msra.mxu0 0.0
      %2623 = vmatprep.subr.mxu0 0.0
      %2624 = vmatpush1.msra.mxu0 0.0
      %2625 = vmatprep.subr.mxu0 0.0
      %2626 = vmatpush1.msra.mxu0 0.0
      %2627 = vmatprep.subr.mxu0 0.0
      %2628 = vmatpush1.msra.mxu0 0.0
      %2629 = vmatprep.subr.mxu0 0.0
      %2630 = vmatpush1.msra.mxu0 0.0
      %2631 = vmatprep.subr.mxu0 0.0
      %2632 = vmatpush1.msra.mxu0 0.0
      %2633 = vmatprep.subr.mxu0 0.0
      %2634 = vmatpush1.msra.mxu0 0.0
      %2635 = vmatprep.subr.mxu0 0.0
      %2636 = vmatpush1.msra.mxu0 0.0
      %2637 = vmatprep.subr.mxu0 0.0
      %2638 = vmatpush1.msra.mxu0 0.0
      %2639 = vmatprep.subr.mxu0 0.0
      %2640 = vmatpush1.msra.mxu0 0.0
      %2641 = vmatprep.subr.mxu0 0.0
      %2642 = vmatpush1.msra.mxu0 0.0
      %2643 = vmatprep.subr.mxu0 0.0
      %2644 = vmatpush1.msra.mxu0 0.0
      %2645 = vmatprep.subr.mxu0 0.0
      %2646 = vmatpush1.msra.mxu0 0.0
      %2647 = vmatprep.subr.mxu0 0.0
      %2648 = vmatpush1.msra.mxu0 0.0
      %2649 = vmatprep.subr.mxu0 0.0
      %2650 = vmatpush1.msra.mxu0 0.0
      %2651 = vmatprep.subr.mxu0 0.0
      %2652 = vmatpush1.msra.mxu0 0.0
      %2653 = vmatprep.subr.mxu0 0.0
      %2654 = vmatpush1.msra.mxu0 0.0
      %2655 = vmatprep.subr.mxu0 0.0
      %2656 = vmatpush1.msra.mxu0 0.0
      %2657 = vmatprep.subr.mxu0 0.0
      %2658 = vmatpush1.msra.mxu0 0.0
      %2659 = vmatprep.mubr.f32.mxu0 0.0
      %2660 = vmatmul.mubr.f32.gmra.mrb[0].mxu0 %v2483
      %v2661 = vpop.f32.mrb[0].mxu0
      %v2662 = vadd.f32 0.0, %v2661
      %v2663 = vpop.f32.mrb[0].mxu0
      %2664 = vmatprep.mubr.f32.mxu0 0.0
      %2665 = vmatmul.mubr.f32.gmra.mrb[0].mxu0 %v2486
      %v2666 = vpop.f32.mrb[0].mxu0
      %v2667 = vadd.f32 0.0, %v2666
      %v2668 = vpop.f32.mrb[0].mxu0
      %2669 = vmatprep.mubr.f32.mxu0 0.0
      %2670 = vmatmul.mubr.f32.gmra.mrb[0].mxu0 %v2489
      %v2671 = vpop.f32.mrb[0].mxu0
      %v2672 = vadd.f32 0.0, %v2671
      %v2673 = vpop.f32.mrb[0].mxu0
      %2674 = vmatprep.mubr.f32.mxu0 0.0
      %2675 = vmatmul.mubr.f32.gmra.mrb[0].mxu0 %v2492
      %v2676 = vpop.f32.mrb[0].mxu0
      %v2677 = vadd.f32 0.0, %v2676
      %v2678 = vpop.f32.mrb[0].mxu0
      %2679 = vdwg.mxu0
      %v2680 = vrcp.pop %v2662
      %v2681 = vmul.f32 %v2588, %v2680
      %v2682 = vrcp.pop %v2667
      %v2683 = vmul.f32 %v2590, %v2682
      %v2684 = vrcp.pop %v2672
      %v2685 = vmul.f32 %v2592, %v2684
      %v2686 = vrcp.pop %v2677
      %v2687 = vmul.f32 %v2594, %v2686
      %2689 = vset.pattern.permute.xlu0 0
      %2690 = vperm.xlu0 %2689, %v2681
      %v2691 = vpop.permute.xlu0 %2690
      %2694 = vset.pattern.permute.xlu0 0
      %2695 = vperm.xlu0 %2694, %v2683
      %v2696 = vpop.permute.xlu0 %2695
      %2699 = vset.pattern.permute.xlu0 0
      %2700 = vperm.xlu0 %2699, %v2685
      %v2701 = vpop.permute.xlu0 %2700
      %2704 = vset.pattern.permute.xlu0 0
      %2705 = vperm.xlu0 %2704, %v2687
      %v2706 = vpop.permute.xlu0 %2705
      %v2708 = vmul.f32 %v2691, %v2434
      %v2709 = vmul.f32 %v2691, %v2435
      %v2710 = vmul.f32 %v2696, %v2436
      %v2711 = vmul.f32 %v2696, %v2437
      %v2712 = vmul.f32 %v2701, %v2438
      %v2713 = vmul.f32 %v2701, %v2439
      %v2714 = vmul.f32 %v2706, %v2440
      %v2715 = vmul.f32 %v2706, %v2441
      %2716 = vset.pattern.permute.xlu0 1
      %2717 = vperm.xlu0 %2716, %v2681
      %v2718 = vpop.permute.xlu0 %2717
      %2720 = vset.pattern.permute.xlu0 1
      %2721 = vperm.xlu0 %2720, %v2683
      %v2722 = vpop.permute.xlu0 %2721
      %2724 = vset.pattern.permute.xlu0 1
      %2725 = vperm.xlu0 %2724, %v2685
      %v2726 = vpop.permute.xlu0 %2725
      %2728 = vset.pattern.permute.xlu0 1
      %2729 = vperm.xlu0 %2728, %v2687
      %v2730 = vpop.permute.xlu0 %2729
      %v2732 = vmul.f32 %v2718, %v1049
      %v2733 = vmul.f32 %v2718, %v1050
      %v2734 = vmul.f32 %v2722, %v1051
      %v2735 = vmul.f32 %v2722, %v1052
      %v2736 = vmul.f32 %v2726, %v1053
      %v2737 = vmul.f32 %v2726, %v1054
      %v2738 = vmul.f32 %v2730, %v1055
      %v2739 = vmul.f32 %v2730, %v1056
      %v2740 = vadd.f32 %v2708, %v2732
      %v2741 = vadd.f32 %v2709, %v2733
      %v2742 = vadd.f32 %v2710, %v2734
      %v2743 = vadd.f32 %v2711, %v2735
      %v2744 = vadd.f32 %v2712, %v2736
      %v2745 = vadd.f32 %v2713, %v2737
      %v2746 = vadd.f32 %v2714, %v2738
      %v2747 = vadd.f32 %v2715, %v2739
      %2748 = vmatprep.subr.mxu0 %v2741
      %2749 = vmatpush1.msra.mxu0 %v2740
      %2750 = vmatprep.subr.mxu0 %v2743
      %2751 = vmatpush1.msra.mxu0 %v2742
      %2752 = vmatprep.subr.mxu0 %v2745
      %2753 = vmatpush1.msra.mxu0 %v2744
      %2754 = vmatprep.subr.mxu0 %v2747
      %2755 = vmatpush1.msra.mxu0 %v2746
      %2756 = vmatprep.subr.mxu0 0.0
      %2757 = vmatpush1.msra.mxu0 0.0
      %2758 = vmatprep.subr.mxu0 0.0
      %2759 = vmatpush1.msra.mxu0 0.0
      %2760 = vmatprep.subr.mxu0 0.0
      %2761 = vmatpush1.msra.mxu0 0.0
      %2762 = vmatprep.subr.mxu0 0.0
      %2763 = vmatpush1.msra.mxu0 0.0
      %2764 = vmatprep.subr.mxu0 0.0
      %2765 = vmatpush1.msra.mxu0 0.0
      %2766 = vmatprep.subr.mxu0 0.0
      %2767 = vmatpush1.msra.mxu0 0.0
      %2768 = vmatprep.subr.mxu0 0.0
      %2769 = vmatpush1.msra.mxu0 0.0
      %2770 = vmatprep.subr.mxu0 0.0
      %2771 = vmatpush1.msra.mxu0 0.0
      %2772 = vmatprep.subr.mxu0 0.0
      %2773 = vmatpush1.msra.mxu0 0.0
      %2774 = vmatprep.subr.mxu0 0.0
      %2775 = vmatpush1.msra.mxu0 0.0
      %2776 = vmatprep.subr.mxu0 0.0
      %2777 = vmatpush1.msra.mxu0 0.0
      %2778 = vmatprep.subr.mxu0 0.0
      %2779 = vmatpush1.msra.mxu0 0.0
      %2780 = vmatprep.subr.mxu0 0.0
      %2781 = vmatpush1.msra.mxu0 0.0
      %2782 = vmatprep.subr.mxu0 0.0
      %2783 = vmatpush1.msra.mxu0 0.0
      %2784 = vmatprep.subr.mxu0 0.0
      %2785 = vmatpush1.msra.mxu0 0.0
      %2786 = vmatprep.subr.mxu0 0.0
      %2787 = vmatpush1.msra.mxu0 0.0
      %2788 = vmatprep.subr.mxu0 0.0
      %2789 = vmatpush1.msra.mxu0 0.0
      %2790 = vmatprep.subr.mxu0 0.0
      %2791 = vmatpush1.msra.mxu0 0.0
      %2792 = vmatprep.subr.mxu0 0.0
      %2793 = vmatpush1.msra.mxu0 0.0
      %2794 = vmatprep.subr.mxu0 0.0
      %2795 = vmatpush1.msra.mxu0 0.0
      %2796 = vmatprep.subr.mxu0 0.0
      %2797 = vmatpush1.msra.mxu0 0.0
      %2798 = vmatprep.subr.mxu0 0.0
      %2799 = vmatpush1.msra.mxu0 0.0
      %2800 = vmatprep.subr.mxu0 0.0
      %2801 = vmatpush1.msra.mxu0 0.0
      %2802 = vmatprep.subr.mxu0 0.0
      %2803 = vmatpush1.msra.mxu0 0.0
      %2804 = vmatprep.subr.mxu0 0.0
      %2805 = vmatpush1.msra.mxu0 0.0
      %2806 = vmatprep.subr.mxu0 0.0
      %2807 = vmatpush1.msra.mxu0 0.0
      %2808 = vmatprep.subr.mxu0 0.0
      %2809 = vmatpush1.msra.mxu0 0.0
      %2810 = vmatprep.subr.mxu0 0.0
      %2811 = vmatpush1.msra.mxu0 0.0
      %2812 = vmatprep.mubr.f32.mxu0 0.0
      %2813 = vmatmul.mubr.f32.gmra.mrb[0].mxu0 %v2483
      %v2814 = vpop.f32.mrb[0].mxu0
      %v2815 = vadd.f32 0.0, %v2814
      %v2816 = vpop.f32.mrb[0].mxu0
      %v2817 = vadd.f32 0.0, %v2816
      %2818 = vmatprep.mubr.f32.mxu0 0.0
      %2819 = vmatmul.mubr.f32.gmra.mrb[0].mxu0 %v2486
      %v2820 = vpop.f32.mrb[0].mxu0
      %v2821 = vadd.f32 0.0, %v2820
      %v2822 = vpop.f32.mrb[0].mxu0
      %v2823 = vadd.f32 0.0, %v2822
      %2824 = vmatprep.mubr.f32.mxu0 0.0
      %2825 = vmatmul.mubr.f32.gmra.mrb[0].mxu0 %v2489
      %v2826 = vpop.f32.mrb[0].mxu0
      %v2827 = vadd.f32 0.0, %v2826
      %v2828 = vpop.f32.mrb[0].mxu0
      %v2829 = vadd.f32 0.0, %v2828
      %2830 = vmatprep.mubr.f32.mxu0 0.0
      %2831 = vmatmul.mubr.f32.gmra.mrb[0].mxu0 %v2492
      %v2832 = vpop.f32.mrb[0].mxu0
      %v2833 = vadd.f32 0.0, %v2832
      %v2834 = vpop.f32.mrb[0].mxu0
      %v2835 = vadd.f32 0.0, %v2834
      %2836 = vdwg.mxu0
      %v2837 = vsub.f32 0.0, %v2815
      %v2838 = vsub.f32 0.0, %v2817
      %v2839 = vsub.f32 0.0, %v2821
      %v2840 = vsub.f32 0.0, %v2823
      %v2841 = vsub.f32 0.0, %v2827
      %v2842 = vsub.f32 0.0, %v2829
      %v2843 = vsub.f32 0.0, %v2833
      %v2844 = vsub.f32 0.0, %v2835
      %v2845 = vmul.f32 %v2837, 1.442695
      %v2846 = vpow.pop %v2845
      %v2847 = vmul.f32 %v2838, 1.442695
      %v2848 = vpow.pop %v2847
      %v2849 = vmul.f32 %v2839, 1.442695
      %v2850 = vpow.pop %v2849
      %v2851 = vmul.f32 %v2840, 1.442695
      %v2852 = vpow.pop %v2851
      %v2853 = vmul.f32 %v2841, 1.442695
      %v2854 = vpow.pop %v2853
      %v2855 = vmul.f32 %v2842, 1.442695
      %v2856 = vpow.pop %v2855
      %v2857 = vmul.f32 %v2843, 1.442695
      %v2858 = vpow.pop %v2857
      %v2859 = vmul.f32 %v2844, 1.442695
      %v2860 = vpow.pop %v2859
      %v2861 = vadd.f32 %v2846, 1.0
      %v2862 = vadd.f32 %v2848, 1.0
      %v2863 = vadd.f32 %v2850, 1.0
      %v2864 = vadd.f32 %v2852, 1.0
      %v2865 = vadd.f32 %v2854, 1.0
      %v2866 = vadd.f32 %v2856, 1.0
      %v2867 = vadd.f32 %v2858, 1.0
      %v2868 = vadd.f32 %v2860, 1.0
      %v2869 = vrcp.pop %v2861
      %v2870 = vmul.f32 1.0, %v2869
      %v2871 = vrcp.pop %v2862
      %v2872 = vmul.f32 1.0, %v2871
      %v2873 = vrcp.pop %v2863
      %v2874 = vmul.f32 1.0, %v2873
      %v2875 = vrcp.pop %v2864
      %v2876 = vmul.f32 1.0, %v2875
      %v2877 = vrcp.pop %v2865
      %v2878 = vmul.f32 1.0, %v2877
      %v2879 = vrcp.pop %v2866
      %v2880 = vmul.f32 1.0, %v2879
      %v2881 = vrcp.pop %v2867
      %v2882 = vmul.f32 1.0, %v2881
      %v2883 = vrcp.pop %v2868
      %v2884 = vmul.f32 1.0, %v2883
      %v2885 = vmul.f32 %v422, %v2870
      %v2886 = vmul.f32 %v423, %v2872
      %v2887 = vmul.f32 %v424, %v2874
      %v2888 = vmul.f32 %v425, %v2876
      %v2889 = vmul.f32 %v426, %v2878
      %v2890 = vmul.f32 %v427, %v2880
      %v2891 = vmul.f32 %v428, %v2882
      %v2892 = vmul.f32 %v429, %v2884
      %2893 = vst [vmem:[%s420] sm:$0xff] %v2885
      %2894 = vst [vmem:[%s420 + $0x8] sm:$0xff] %v2886
      %2895 = vst [vmem:[%s420 + $0x10] sm:$0xff] %v2887
      %2896 = vst [vmem:[%s420 + $0x18] sm:$0xff] %v2888
      %2897 = vst [vmem:[%s420 + $0x20] sm:$0xff] %v2889
      %2898 = vst [vmem:[%s420 + $0x28] sm:$0xff] %v2890
      %2899 = vst [vmem:[%s420 + $0x30] sm:$0xff] %v2891
      %2900 = vst [vmem:[%s420 + $0x38] sm:$0xff] %v2892
      %s2901 = smul.u32 4, %s23
      %p2902 = scmp.lt.s32.totalorder %s2901, 7
      %s2903 = scalar_select %p2902, %s2901, 7
      %s2904 = smul.addr %s2903, 2
      %s2905 = smul.addr %s2904, 8
      %s2906 = scalar_lea.vmem %s12, %s2905
      // Predicated region
      $region69: #{ema_forward.1} parent=67 // pred_check
        %p2907 = pneg %p298
      $region70: #{ema_forward.1} parent=67 // pred_check_branch
        %2909 = sbr.rel (%p2907) target = $region72
      $region71: #{ema_forward.1} parent=67 // pred_region
        %s2910 = smul.u32 4, %s23
      $region72: #{ema_forward.1} parent=67 // pred_fallthru
        _
    $region68: #{ema_forward.1} parent=5 // pred_fallthru
      _
    %p2911 = scmp.le.s32.totalorder 2, %s18
    // Predicated region
    $region73: #{ema_forward.1} parent=5 // pred_check
      %p2912 = pneg %p2911
    $region74: #{ema_forward.1} parent=5 // pred_check_branch
      %2914 = sbr.rel (%p2912) target = $region76
    $region75: #{ema_forward.1} parent=5 // pred_region
      %s2915 = ssub.s32 %s18, 2
      // Predicated region
      $region77: #{ema_forward.1} parent=75 // pred_check
        %p2916 = pneg %p304
      $region78: #{ema_forward.1} parent=75 // pred_check_branch
        %2918 = sbr.rel (%p2916) target = $region80
      $region79: #{ema_forward.1} parent=75 // pred_region
        %s2919 = smul.u32 4, %s24
        %p2920 = scmp.lt.s32.totalorder %s2919, 7
        %s2921 = scalar_select %p2920, %s2919, 7
        %s2922 = smul.addr %s2921, 2
        %s2923 = smul.addr %s2922, 8
        %s2924 = scalar_lea.vmem %s12, %s2923
      $region80: #{ema_forward.1} parent=75 // pred_fallthru
        _
    $region76: #{ema_forward.1} parent=5 // pred_fallthru
      _
  $region6: #{ema_forward.1} parent=0 // loop_footer
    %s22 = sadd.s32 1, %s18
  $region7: #{ema_forward.1} parent=0 // loop_footer_branch
    %17 = sbr.rel target = $region3
  $region8: #{ema_forward.1} parent=0 // loop_exit
    _

</llo_original>
